<compile_context>
chip_gen: v5e
topology: v5e:2x2
jax: 0.10.0
libtpu: 0.0.40
codegen_flags: <defaults>
</compile_context>

<pallas_src>
import functools
import math

import numpy as np
import jax
import jax.numpy as jnp
from jax.experimental import pallas as pl
from jax.experimental.pallas import tpu as pltpu


# ----------------------------------------------------------------------------
# Deterministic parameter / constant construction (host-side, numpy)
# ----------------------------------------------------------------------------
def _hz_to_mel_slaney(freq):
    f_sp = 200.0 / 3.0
    mels = freq / f_sp
    min_log_hz = 1000.0
    min_log_mel = min_log_hz / f_sp
    logstep = math.log(6.4) / 27.0
    if freq >= min_log_hz:
        mels = min_log_mel + math.log(freq / min_log_hz) / logstep
    return mels


def _mel_to_hz_slaney(mels):
    f_sp = 200.0 / 3.0
    freqs = f_sp * mels
    min_log_hz = 1000.0
    min_log_mel = min_log_hz / f_sp
    logstep = math.log(6.4) / 27.0
    freqs = np.where(
        mels >= min_log_mel,
        min_log_hz * np.exp(logstep * (mels - min_log_mel)),
        freqs,
    )
    return freqs


def make_mel_filterbank(n_freqs, n_mels, sample_rate, f_min=0.0, f_max=None):
    """torchaudio.functional.melscale_fbanks with norm='slaney', mel_scale='slaney'."""
    if f_max is None:
        f_max = sample_rate / 2.0
    all_freqs = np.linspace(0.0, sample_rate / 2.0, n_freqs)
    m_min = _hz_to_mel_slaney(f_min)
    m_max = _hz_to_mel_slaney(f_max)
    m_pts = np.linspace(m_min, m_max, n_mels + 2)
    f_pts = _mel_to_hz_slaney(m_pts)

    f_diff = f_pts[1:] - f_pts[:-1]                       # (n_mels + 1,)
    slopes = f_pts[None, :] - all_freqs[:, None]          # (n_freqs, n_mels + 2)
    down_slopes = (-slopes[:, :-2]) / f_diff[:-1]
    up_slopes = slopes[:, 2:] / f_diff[1:]
    fb = np.maximum(0.0, np.minimum(down_slopes, up_slopes))

    # slaney normalization
    enorm = 2.0 / (f_pts[2: n_mels + 2] - f_pts[:n_mels])
    fb = fb * enorm[None, :]
    return fb.astype(np.float32)                          # (n_freqs, n_mels)


def make_windowed_dft(n_fft):
    """Hann(periodic)-windowed real-DFT matrices (cos / -sin), (n_fft, n_fft//2+1)."""
    n = np.arange(n_fft)
    window = 0.5 * (1.0 - np.cos(2.0 * np.pi * n / n_fft))          # periodic Hann
    k = np.arange(n_fft // 2 + 1)
    phase = 2.0 * np.pi * np.outer(n, k) / n_fft                     # (n_fft, n_freq)
    cos_m = (window[:, None] * np.cos(phase)).astype(np.float32)
    sin_m = (window[:, None] * -np.sin(phase)).astype(np.float32)
    return cos_m, sin_m


def _round_up(x, m):
    return ((x + m - 1) // m) * m


@functools.lru_cache(maxsize=None)
def _logmel_constants(sample_rate, n_fft, hop_length, n_mels):
    """Build (once) the merged bf16 windowed-DFT RHS and the bf16 mel filterbank."""
    n_freq = n_fft // 2 + 1
    n_freq_p = _round_up(n_freq, 128)            # 640 for n_fft=1024 (5*128, lane aligned)
    n_mels_p = _round_up(n_mels, 128)            # 128 for n_mels=80

    cos_m, sin_m = make_windowed_dft(n_fft)
    # Merge cos | -sin into one (n_fft, 2*n_freq_p) RHS -> a single contraction
    # per shift; the in-kernel re/im split at n_freq_p is lane aligned.
    w = np.zeros((n_fft, 2 * n_freq_p), dtype=np.float32)
    w[:, :n_freq] = cos_m
    w[:, n_freq_p:n_freq_p + n_freq] = sin_m

    fb = make_mel_filterbank(n_freq, n_mels, sample_rate)
    fb_p = np.zeros((n_freq_p, n_mels_p), dtype=np.float32)
    fb_p[:n_freq, :n_mels] = fb

    dft_w = jnp.asarray(w, dtype=jnp.bfloat16)          # (n_fft, 2*n_freq_p)
    fb_j = jnp.asarray(fb_p, dtype=jnp.bfloat16)        # (n_freq_p, n_mels_p)
    return dft_w, fb_j, n_freq_p, n_mels_p


# ----------------------------------------------------------------------------
# Pallas kernel: in-kernel frame assembly -> windowed DFT -> |.| -> mel -> log
# ----------------------------------------------------------------------------
def _logmel_kernel(cmain_ref, ctail_ref, dftw_ref, fb_ref, out_ref):
    tm, hop = cmain_ref.shape                    # (tile_m, hop)
    n_shift = dftw_ref.shape[0] // hop           # n_fft // hop (= 4)
    nfp = dftw_ref.shape[1] // 2                 # padded onesided freq count

    # Non-duplicated hop-sized chunk rows covering this tile: tile_m + 8 rows.
    full = jnp.concatenate([cmain_ref[...], ctail_ref[...]], axis=0)   # (tm+8, hop) f32

    # Windowed DFT built from n_shift hop-shifted frame views.  The shifted
    # sublane slices / bf16 casts are cheap VPU work hidden under the MXU.
    acc = None
    for c in range(n_shift):
        frames_c = full[c:c + tm, :].astype(dftw_ref.dtype)            # (tm, hop) bf16
        w_c = dftw_ref[pl.ds(c * hop, hop), :]                         # (hop, 2*nfp) bf16
        d = jnp.dot(frames_c, w_c, preferred_element_type=jnp.float32)
        acc = d if acc is None else acc + d                            # (tm, 2*nfp) f32

    re = acc[:, :nfp]                            # lane-aligned split (nfp = k*128)
    im = acc[:, nfp:]
    mag = jnp.sqrt(re * re + im * im)            # power = 1.0 (magnitude)

    mel = jnp.dot(mag.astype(fb_ref.dtype), fb_ref[...],
                  preferred_element_type=jnp.float32)                  # (tm, n_mels_p)
    out_ref[...] = jnp.log(jnp.maximum(mel, 1e-5))


def logmel_pallas(wav, *, sample_rate=16000, n_fft=1024, hop_length=256,
                  win_length=1024, n_mels=80, tile_m=256):
    assert win_length == n_fft, "kernel assumes win_length == n_fft"
    assert n_fft % hop_length == 0, "kernel assumes n_fft % hop_length == 0"
    assert hop_length % 128 == 0, "hop_length must be a multiple of 128 (lane aligned)"

    wav = wav.astype(jnp.float32)
    B, T = wav.shape
    hop = hop_length

    # --- reflect pad + non-duplicated chunking (pure slice/reshape/pad) ---
    pad = (n_fft - hop) // 2
    wav_p = jnp.pad(wav, ((0, 0), (pad, pad)), mode="reflect")
    t_pad = T + 2 * pad
    n_frames = 1 + (t_pad - n_fft) // hop
    n_shift = n_fft // hop                                   # 4
    n_chunks = n_frames + n_shift - 1                        # chunks actually used

    # Frame-row tile: default 256 (multiple of 256 keeps v6e/v7x MXUs full),
    # clamped (to a multiple of 8) for small inputs.
    tile_m = max(8, min(tile_m, _round_up(n_frames, 8)))
    tile_m = _round_up(tile_m, 8)
    n_tiles = pl.cdiv(n_frames, tile_m)
    ncp = (n_tiles + 1) * tile_m                 # padded chunk rows per batch element

    chunks = wav_p[:, : n_chunks * hop].reshape(B, n_chunks, hop)
    chunks = jnp.pad(chunks, ((0, 0), (0, ncp - n_chunks), (0, 0)))
    chunks2d = chunks.reshape(B * ncp, hop)                  # (B*ncp, hop) f32, no duplication

    # --- constants (cached; built once per config) ---
    dft_w, fb_p, n_freq_p, n_mels_p = _logmel_constants(sample_rate, n_fft, hop, n_mels)

    # --- Pallas hot path ---
    rows_out = B * n_tiles * tile_m
    grid = (B, n_tiles)

    # Main block: tile_m chunk rows for this tile.  Tail block: the next 8 chunk
    # rows, so the last frames of the tile can see their trailing hops.  Both are
    # plain blocked views of the same chunk matrix.
    cmain_spec = pl.BlockSpec(
        (tile_m, hop), lambda b, i: (b * (n_tiles + 1) + i, 0))
    ctail_spec = pl.BlockSpec(
        (8, hop), lambda b, i: ((b * (n_tiles + 1) + i + 1) * (tile_m // 8), 0))
    w_spec = pl.BlockSpec((n_fft, 2 * n_freq_p), lambda b, i: (0, 0))    # resident constant
    fb_spec = pl.BlockSpec((n_freq_p, n_mels_p), lambda b, i: (0, 0))    # resident constant
    out_spec = pl.BlockSpec((tile_m, n_mels_p), lambda b, i: (b * n_tiles + i, 0))

    out_padded = pl.pallas_call(
        _logmel_kernel,
        out_shape=jax.ShapeDtypeStruct((rows_out, n_mels_p), jnp.float32),
        grid=grid,
        in_specs=[cmain_spec, ctail_spec, w_spec, fb_spec],
        out_specs=out_spec,
        compiler_params=pltpu.CompilerParams(
            dimension_semantics=("parallel", "parallel"),
            vmem_limit_bytes=32 * 1024 * 1024,
        ),
    )(chunks2d, chunks2d, dft_w, fb_p)

    logmel = out_padded.reshape(B, n_tiles * tile_m, n_mels_p)[:, :n_frames, :n_mels]
    return jnp.transpose(logmel, (0, 2, 1))                  # (B, n_mels, n_frames)


# ----------------------------------------------------------------------------
# Pure-JAX f32 reference (same math, unpadded) for a quick sanity check
# ----------------------------------------------------------------------------
def logmel_reference(wav, *, sample_rate=16000, n_fft=1024, hop_length=256,
                     n_mels=80):
    wav = wav.astype(jnp.float32)
    B, T = wav.shape
    pad = (n_fft - hop_length) // 2
    wav_p = jnp.pad(wav, ((0, 0), (pad, pad)), mode="reflect")
    n_frames = 1 + (wav_p.shape[1] - n_fft) // hop_length
    idx = jnp.arange(n_frames)[:, None] * hop_length + jnp.arange(n_fft)[None, :]
    frames = wav_p[:, idx]                                   # (B, F, n_fft)
    cos_m, sin_m = make_windowed_dft(n_fft)
    fb = make_mel_filterbank(n_fft // 2 + 1, n_mels, sample_rate)
    re = jnp.einsum("bfn,nk->bfk", frames, jnp.asarray(cos_m))
    im = jnp.einsum("bfn,nk->bfk", frames, jnp.asarray(sin_m))
    mag = jnp.sqrt(re * re + im * im)
    mel = jnp.einsum("bfk,km->bfm", mag, jnp.asarray(fb))
    logmel = jnp.log(jnp.clip(mel, 1e-5, None))
    return jnp.transpose(logmel, (0, 2, 1))


if __name__ == "__main__":
    key = jax.random.PRNGKey(0)
    # Small but consistent input: batch=2, 4096 audio samples @ 16kHz
    wav = jax.random.normal(key, (2, 4096), dtype=jnp.float32)

    logmel_fn = jax.jit(lambda w: logmel_pallas(w))
    out = jax.block_until_ready(logmel_fn(wav))
    ref = jax.block_until_ready(logmel_reference(wav))

    assert out.shape == (2, 80, 16), out.shape
    assert out.dtype == jnp.float32
    # Kernel uses bf16 MXU inputs (f32 accumulation); compare vs f32 reference
    # with a tolerance that comfortably covers bf16 quantization in log space.
    np.testing.assert_allclose(np.asarray(out), np.asarray(ref), rtol=5e-2, atol=5e-2)
    print("KERNEL_OK")
</pallas_src>

<mosaic_0001>
module attributes {stable_mosaic.version = 11 : i64} {
  func.func @_logmel_kernel(%arg0: i32, %arg1: i32, %arg2: memref<16x256xf32, #tpu.memory_space<vmem>>, %arg3: memref<8x256xf32, #tpu.memory_space<vmem>>, %arg4: memref<1024x1280xbf16, #tpu.memory_space<vmem>>, %arg5: memref<640x128xbf16, #tpu.memory_space<vmem>>, %arg6: memref<16x128xf32, #tpu.memory_space<vmem>>) attributes {dimension_semantics = [#tpu.dimension_semantics<parallel>, #tpu.dimension_semantics<parallel>], iteration_bounds = array<i64: 2, 1>, scalar_prefetch = 0 : i64, scratch_operands = 0 : i64, tpu.core_type = #tpu.core_type<tc>, window_params = [{transform_indices = @transform_0, window_bounds = array<i64: 16, 256>}, {transform_indices = @transform_1, window_bounds = array<i64: 8, 256>}, {pipeline_mode = #tpu.pipeline_mode<synchronous>, transform_indices = @transform_2, window_bounds = array<i64: 1024, 1280>}, {pipeline_mode = #tpu.pipeline_mode<synchronous>, transform_indices = @transform_3, window_bounds = array<i64: 640, 128>}, {transform_indices = @transform_4, window_bounds = array<i64: 16, 128>}]} {
    %c0 = arith.constant 0 : index
    %c0_0 = arith.constant 0 : index
    %0 = vector.load %arg2[%c0, %c0_0] : memref<16x256xf32, #tpu.memory_space<vmem>>, vector<16x256xf32>
    %c0_1 = arith.constant 0 : index
    %c0_2 = arith.constant 0 : index
    %1 = vector.load %arg3[%c0_1, %c0_2] : memref<8x256xf32, #tpu.memory_space<vmem>>, vector<8x256xf32>
    %2 = tpu.concatenate %0, %1 in 0 : vector<16x256xf32>, vector<8x256xf32> -> vector<24x256xf32>
    %3 = vector.extract_strided_slice %2 {offsets = [0, 0], sizes = [16, 256], strides = [1, 1]} : vector<24x256xf32> to vector<16x256xf32>
    %4 = arith.truncf %3 : vector<16x256xf32> to vector<16x256xbf16>
    %c0_3 = arith.constant 0 : index
    %c0_4 = arith.constant 0 : index
    %5 = vector.load %arg4[%c0_3, %c0_4] : memref<1024x1280xbf16, #tpu.memory_space<vmem>>, vector<256x1280xbf16>
    %cst = arith.constant dense<0.000000e+00> : vector<16x1280xf32>
    %6 = tpu.matmul %4, %5, %cst {dimension_numbers = #tpu.dot_dimension_numbers<[1], [0], [0], [1], [0, 0, 1, 1], [], []>} : vector<16x256xbf16>, vector<256x1280xbf16>, vector<16x1280xf32> -> vector<16x1280xf32>
    %7 = vector.extract_strided_slice %2 {offsets = [1, 0], sizes = [16, 256], strides = [1, 1]} : vector<24x256xf32> to vector<16x256xf32>
    %8 = arith.truncf %7 : vector<16x256xf32> to vector<16x256xbf16>
    %c256 = arith.constant 256 : index
    %c0_5 = arith.constant 0 : index
    %9 = vector.load %arg4[%c256, %c0_5] : memref<1024x1280xbf16, #tpu.memory_space<vmem>>, vector<256x1280xbf16>
    %cst_6 = arith.constant dense<0.000000e+00> : vector<16x1280xf32>
    %10 = tpu.matmul %8, %9, %cst_6 {dimension_numbers = #tpu.dot_dimension_numbers<[1], [0], [0], [1], [0, 0, 1, 1], [], []>} : vector<16x256xbf16>, vector<256x1280xbf16>, vector<16x1280xf32> -> vector<16x1280xf32>
    %11 = arith.addf %6, %10 : vector<16x1280xf32>
    %12 = vector.extract_strided_slice %2 {offsets = [2, 0], sizes = [16, 256], strides = [1, 1]} : vector<24x256xf32> to vector<16x256xf32>
    %13 = arith.truncf %12 : vector<16x256xf32> to vector<16x256xbf16>
    %c512 = arith.constant 512 : index
    %c0_7 = arith.constant 0 : index
    %14 = vector.load %arg4[%c512, %c0_7] : memref<1024x1280xbf16, #tpu.memory_space<vmem>>, vector<256x1280xbf16>
    %cst_8 = arith.constant dense<0.000000e+00> : vector<16x1280xf32>
    %15 = tpu.matmul %13, %14, %cst_8 {dimension_numbers = #tpu.dot_dimension_numbers<[1], [0], [0], [1], [0, 0, 1, 1], [], []>} : vector<16x256xbf16>, vector<256x1280xbf16>, vector<16x1280xf32> -> vector<16x1280xf32>
    %16 = arith.addf %11, %15 : vector<16x1280xf32>
    %17 = vector.extract_strided_slice %2 {offsets = [3, 0], sizes = [16, 256], strides = [1, 1]} : vector<24x256xf32> to vector<16x256xf32>
    %18 = arith.truncf %17 : vector<16x256xf32> to vector<16x256xbf16>
    %c768 = arith.constant 768 : index
    %c0_9 = arith.constant 0 : index
    %19 = vector.load %arg4[%c768, %c0_9] : memref<1024x1280xbf16, #tpu.memory_space<vmem>>, vector<256x1280xbf16>
    %cst_10 = arith.constant dense<0.000000e+00> : vector<16x1280xf32>
    %20 = tpu.matmul %18, %19, %cst_10 {dimension_numbers = #tpu.dot_dimension_numbers<[1], [0], [0], [1], [0, 0, 1, 1], [], []>} : vector<16x256xbf16>, vector<256x1280xbf16>, vector<16x1280xf32> -> vector<16x1280xf32>
    %21 = arith.addf %16, %20 : vector<16x1280xf32>
    %22 = vector.extract_strided_slice %21 {offsets = [0, 0], sizes = [16, 640], strides = [1, 1]} : vector<16x1280xf32> to vector<16x640xf32>
    %23 = vector.extract_strided_slice %21 {offsets = [0, 640], sizes = [16, 640], strides = [1, 1]} : vector<16x1280xf32> to vector<16x640xf32>
    %24 = arith.mulf %22, %22 : vector<16x640xf32>
    %25 = arith.mulf %23, %23 : vector<16x640xf32>
    %26 = arith.addf %24, %25 : vector<16x640xf32>
    %27 = math.sqrt %26 : vector<16x640xf32>
    %28 = arith.truncf %27 : vector<16x640xf32> to vector<16x640xbf16>
    %c0_11 = arith.constant 0 : index
    %c0_12 = arith.constant 0 : index
    %29 = vector.load %arg5[%c0_11, %c0_12] : memref<640x128xbf16, #tpu.memory_space<vmem>>, vector<640x128xbf16>
    %cst_13 = arith.constant dense<0.000000e+00> : vector<16x128xf32>
    %30 = tpu.matmul %28, %29, %cst_13 {dimension_numbers = #tpu.dot_dimension_numbers<[1], [0], [0], [1], [0, 0, 1, 1], [], []>} : vector<16x640xbf16>, vector<640x128xbf16>, vector<16x128xf32> -> vector<16x128xf32>
    %cst_14 = arith.constant 9.99999974E-6 : f32
    %31 = vector.broadcast %cst_14 : f32 to vector<16x128xf32>
    %32 = arith.maximumf %30, %31 : vector<16x128xf32>
    %33 = math.log %32 : vector<16x128xf32>
    %c0_15 = arith.constant 0 : index
    %c0_16 = arith.constant 0 : index
    %34 = vector.load %arg6[%c0_15, %c0_16] : memref<16x128xf32, #tpu.memory_space<vmem>>, vector<16x128xf32>
    tpu.vector_store %arg6[%c0_15, %c0_16], %33 {strides = array<i32>} : memref<16x128xf32, #tpu.memory_space<vmem>>, vector<16x128xf32>,
    return
  }
  func.func @transform_0(%arg0: i32, %arg1: i32) -> (i32, i32) {
    %c2_i32 = arith.constant 2 : i32
    %0 = arith.muli %arg0, %c2_i32 : i32
    %1 = arith.addi %0, %arg1 : i32
    %c0_i32 = arith.constant 0 : i32
    %c0_i32_0 = arith.constant 0 : i32
    return %1, %c0_i32 : i32, i32
  }
  func.func @transform_1(%arg0: i32, %arg1: i32) -> (i32, i32) {
    %c2_i32 = arith.constant 2 : i32
    %0 = arith.muli %arg0, %c2_i32 : i32
    %1 = arith.addi %0, %arg1 : i32
    %c1_i32 = arith.constant 1 : i32
    %2 = arith.addi %1, %c1_i32 : i32
    %c2_i32_0 = arith.constant 2 : i32
    %3 = arith.muli %2, %c2_i32_0 : i32
    %c0_i32 = arith.constant 0 : i32
    %c0_i32_1 = arith.constant 0 : i32
    return %3, %c0_i32 : i32, i32
  }
  func.func @transform_2(%arg0: i32, %arg1: i32) -> (i32, i32) {
    %c0_i32 = arith.constant 0 : i32
    %c0_i32_0 = arith.constant 0 : i32
    %c0_i32_1 = arith.constant 0 : i32
    return %c0_i32, %c0_i32_0 : i32, i32
  }
  func.func @transform_3(%arg0: i32, %arg1: i32) -> (i32, i32) {
    %c0_i32 = arith.constant 0 : i32
    %c0_i32_0 = arith.constant 0 : i32
    %c0_i32_1 = arith.constant 0 : i32
    return %c0_i32, %c0_i32_0 : i32, i32
  }
  func.func @transform_4(%arg0: i32, %arg1: i32) -> (i32, i32) {
    %c1_i32 = arith.constant 1 : i32
    %0 = arith.muli %arg0, %c1_i32 : i32
    %1 = arith.addi %0, %arg1 : i32
    %c0_i32 = arith.constant 0 : i32
    %c0_i32_0 = arith.constant 0 : i32
    return %1, %c0_i32 : i32, i32
  }
}

</mosaic_0001>

<llo_original>
// kernel: _lambda_.1
$region0: #{_lambda_.1}
  #allocation0 [shape = 'u32[]', space=smem, size = 0x4, offset = 0x4, fixed_abs, tag = 'smem constant byte address 0x4 - core index']
  #allocation1 [shape = 'u32[72,128]{1,0:T(1,128)}', space=vmem, size = 0x9000, scoped, tag = 'internal scratch']
  %s0 = inlined_call_operand.vmem [shape: f32[64,256], index: 0, kind: input, shape index: {}, may-alias: {0,1}]
  %s1 = inlined_call_operand.vmem [shape: f32[64,256], index: 1, kind: input, shape index: {}, may-alias: {0,1}]
  %s2 = inlined_call_operand.hbm [shape: bf16[1024,1280], index: 2, kind: input, shape index: {}]
  %s3 = inlined_call_operand.hbm [shape: bf16[640,128], index: 3, kind: input, shape index: {}]
  %s4 = inlined_call_operand.vmem [shape: f32[32,128], index: 4, kind: output, shape index: {}]
  %s5 = sld [smem:[#allocation0]]
  $region57: #{_lambda_.1} parent=0
    _
  %s7 = ssub.s32 1, %s5
  %s8 = scalar_select 0, %s7, %s5
  $region1: #{_lambda_.1} parent=0
    #allocation2 [shape = 'u8[2621440]{0}', space=vmem, size = 0x280000, scoped, tag = 'input window, operand 2, single buffered']
    #allocation3 [shape = 's32[2]{0}', space=sflag, size = 0x8, scoped, tag = 'scoped memory for _lambda_.1']
    #allocation4 [shape = 'u8[163840]{0}', space=vmem, size = 0x28000, scoped, tag = 'input window, operand 3, single buffered']
    #allocation5 [shape = 's32[1]{0}', space=sflag, size = 0x4, scoped, tag = 'scoped memory for _lambda_.1']
    %9 = vsyncpa [#allocation3], 0
    %10 = vsyncpa [#allocation5], 0
    loop: start=0, step=1, limit=4
    $region2: #{_lambda_.1} parent=1 // loop_pre_header
      _
    $region3: #{_lambda_.1} parent=1 // loop_header
      %s12 = sphi 0, %s16
      %p13 = scmp.ge.s32.totalorder %s12, 4
      %s19 = sphi 0, %s31
      %s20 = sphi 0, %s27
      %s21 = sphi 0, %s19
      %s22 = sphi 0, %s20
      %s23 = sphi 0, %s21
      %s24 = sphi 0, %s22
      %s38 = sphi 0, %s40
      %s41 = sphi 0, %s38
      %s42 = sphi 0, %s41
      %s58 = sphi 0, %s42
      %s72 = sphi 0, %s74
      %s75 = sphi 0, %s72
      %s76 = sphi 0, %s75
      %s92 = sphi 0, %s76
      %s96 = sphi 0, %s96
      %s98 = sphi 0, %s96
      %s99 = sphi 0, %s98
      %s113 = sphi 0, %s99
      %s117 = sphi 0, %s117
      %s119 = sphi 0, %s117
      %s120 = sphi 0, %s119
      %s134 = sphi 0, %s120
      %s142 = sphi 0, %s144
      %s145 = sphi 0, %s142
      %s146 = sphi 0, %s145
      %s162 = sphi 0, %s146
    $region4: #{_lambda_.1} parent=1 // loop_header_branch
      %15 = sbr.rel (%p13) target = $region8
    $region5: #{_lambda_.1} parent=1 // loop_body
      %s17 = ssub.s32 %s12, 1
      %s18 = ssub.s32 %s12, 2
      %s25 = sadd.s32 1, %s20
      %p26 = scmp.ge.s32.totalorder %s25, 1
      %s27 = scalar_select %p26, 0, %s25
      %s28 = sadd.s32 1, %s19
      %s29 = scalar_select %p26, %s28, %s19
      %p30 = scmp.ge.s32.totalorder %s29, 2
      %s31 = scalar_select %p30, 0, %s29
      %s32 = smul.u32 %s19, 2
      %s33 = sadd.s32 %s32, %s20
      %s34 = smul.u32 %s31, 2
      %s35 = sadd.s32 %s34, %s27
      %s36 = ssub.s32 %s33, %s35
      %p37 = scmp.eq.s32.totalorder %s36, 0
      %s39 = sadd.s32 %s38, 1
      %s40 = scalar_select %p37, %s38, %s39
      %p43 = pneg %p37
      %p44 = scmp.eq.s32.totalorder %s12, 1
      %p45 = por %p43, %p44
      %p46 = scmp.ne.s32.totalorder %s38, %s41
      %p47 = scmp.eq.s32.totalorder %s12, 0
      %p48 = por %p46, %p47
      %p49 = scmp.ne.s32.totalorder %s38, %s41
      %p50 = scmp.eq.s32.totalorder %s17, 1
      %p51 = por %p49, %p50
      %p52 = scmp.ne.s32.totalorder %s41, %s42
      %p53 = scmp.eq.s32.totalorder %s17, 0
      %p54 = por %p52, %p53
      %p55 = scmp.ne.s32.totalorder %s41, %s42
      %p56 = scmp.eq.s32.totalorder %s18, 1
      %p57 = por %p55, %p56
      %p59 = scmp.ne.s32.totalorder %s42, %s58
      %p60 = scmp.eq.s32.totalorder %s18, 0
      %p61 = por %p59, %p60
      %s62 = smul.u32 %s19, 2
      %s63 = sadd.s32 %s62, %s20
      %s64 = sadd.s32 %s63, 1
      %s65 = smul.u32 %s64, 2
      %s66 = smul.u32 %s31, 2
      %s67 = sadd.s32 %s66, %s27
      %s68 = sadd.s32 %s67, 1
      %s69 = smul.u32 %s68, 2
      %s70 = ssub.s32 %s65, %s69
      %p71 = scmp.eq.s32.totalorder %s70, 0
      %s73 = sadd.s32 %s72, 1
      %s74 = scalar_select %p71, %s72, %s73
      %p77 = pneg %p71
      %p78 = scmp.eq.s32.totalorder %s12, 1
      %p79 = por %p77, %p78
      %p80 = scmp.ne.s32.totalorder %s72, %s75
      %p81 = scmp.eq.s32.totalorder %s12, 0
      %p82 = por %p80, %p81
      %p83 = scmp.ne.s32.totalorder %s72, %s75
      %p84 = scmp.eq.s32.totalorder %s17, 1
      %p85 = por %p83, %p84
      %p86 = scmp.ne.s32.totalorder %s75, %s76
      %p87 = scmp.eq.s32.totalorder %s17, 0
      %p88 = por %p86, %p87
      %p89 = scmp.ne.s32.totalorder %s75, %s76
      %p90 = scmp.eq.s32.totalorder %s18, 1
      %p91 = por %p89, %p90
      %p93 = scmp.ne.s32.totalorder %s76, %s92
      %p94 = scmp.eq.s32.totalorder %s18, 0
      %p95 = por %p93, %p94
      %s97 = sadd.s32 %s96, 1
      %p100 = scmp.eq.s32.totalorder %s12, 1
      %p101 = scmp.ne.s32.totalorder %s96, %s98
      %p102 = scmp.eq.s32.totalorder %s12, 0
      %p103 = por %p101, %p102
      %p104 = scmp.ne.s32.totalorder %s96, %s98
      %p105 = scmp.eq.s32.totalorder %s17, 1
      %p106 = por %p104, %p105
      %p107 = scmp.ne.s32.totalorder %s98, %s99
      %p108 = scmp.eq.s32.totalorder %s17, 0
      %p109 = por %p107, %p108
      %p110 = scmp.ne.s32.totalorder %s98, %s99
      %p111 = scmp.eq.s32.totalorder %s18, 1
      %p112 = por %p110, %p111
      %p114 = scmp.ne.s32.totalorder %s99, %s113
      %p115 = scmp.eq.s32.totalorder %s18, 0
      %p116 = por %p114, %p115
      %s118 = sadd.s32 %s117, 1
      %p121 = scmp.eq.s32.totalorder %s12, 1
      %p122 = scmp.ne.s32.totalorder %s117, %s119
      %p123 = scmp.eq.s32.totalorder %s12, 0
      %p124 = por %p122, %p123
      %p125 = scmp.ne.s32.totalorder %s117, %s119
      %p126 = scmp.eq.s32.totalorder %s17, 1
      %p127 = por %p125, %p126
      %p128 = scmp.ne.s32.totalorder %s119, %s120
      %p129 = scmp.eq.s32.totalorder %s17, 0
      %p130 = por %p128, %p129
      %p131 = scmp.ne.s32.totalorder %s119, %s120
      %p132 = scmp.eq.s32.totalorder %s18, 1
      %p133 = por %p131, %p132
      %p135 = scmp.ne.s32.totalorder %s120, %s134
      %p136 = scmp.eq.s32.totalorder %s18, 0
      %p137 = por %p135, %p136
      %s138 = sadd.s32 %s19, %s20
      %s139 = sadd.s32 %s31, %s27
      %s140 = ssub.s32 %s138, %s139
      %p141 = scmp.eq.s32.totalorder %s140, 0
      %s143 = sadd.s32 %s142, 1
      %s144 = scalar_select %p141, %s142, %s143
      %p147 = pneg %p141
      %p148 = scmp.eq.s32.totalorder %s12, 1
      %p149 = por %p147, %p148
      %p150 = scmp.ne.s32.totalorder %s142, %s145
      %p151 = scmp.eq.s32.totalorder %s12, 0
      %p152 = por %p150, %p151
      %p153 = scmp.ne.s32.totalorder %s142, %s145
      %p154 = scmp.eq.s32.totalorder %s17, 1
      %p155 = por %p153, %p154
      %p156 = scmp.ne.s32.totalorder %s145, %s146
      %p157 = scmp.eq.s32.totalorder %s17, 0
      %p158 = por %p156, %p157
      %p159 = scmp.ne.s32.totalorder %s145, %s146
      %p160 = scmp.eq.s32.totalorder %s18, 1
      %p161 = por %p159, %p160
      %p163 = scmp.ne.s32.totalorder %s146, %s162
      %p164 = scmp.eq.s32.totalorder %s18, 0
      %p165 = por %p163, %p164
      %p166 = scmp.le.s32.totalorder 1, %s12
      %p167 = scmp.lt.s32.totalorder %s12, 3
      %p168 = pnand %p166, %p167
      %p169 = pneg %p168
      // Predicated region
      $region9: #{_lambda_.1} parent=5 // pred_check
        _
      $region10: #{_lambda_.1} parent=5 // pred_check_branch
        %171 = sbr.rel (%p168) target = $region12
      $region11: #{_lambda_.1} parent=5 // pred_region
        %s172 = ssub.s32 %s12, 1
        // Predicated region
        $region13: #{_lambda_.1} parent=11 // pred_check
          %p173 = pneg %p109
        $region14: #{_lambda_.1} parent=11 // pred_check_branch
          %175 = sbr.rel (%p173) target = $region16
        $region15: #{_lambda_.1} parent=11 // pred_region
          %177 = vsyncadd [#allocation3], 0
          %s178 = sshll.u32 %s2, 4
          %s179 = int_to_ptr.hbm [resolvable:$true] %s178
          %s180 = sshll.u32 [#allocation2], 4
          %s181 = int_to_ptr.vmem [resolvable:$true] %s180
          %186 = dma.hbm_to_vmem [thread:$0]  %s179, 81920, %s181, [#allocation3], 640, 640, 40
        $region16: #{_lambda_.1} parent=11 // pred_fallthru
          _
        // Predicated region
        $region17: #{_lambda_.1} parent=11 // pred_check
          %p187 = pneg %p130
        $region18: #{_lambda_.1} parent=11 // pred_check_branch
          %189 = sbr.rel (%p187) target = $region20
        $region19: #{_lambda_.1} parent=11 // pred_region
          %191 = vsyncadd [#allocation5], 0
          %s192 = sshll.u32 %s3, 4
          %s193 = int_to_ptr.hbm [resolvable:$true] %s192
          %s194 = sshll.u32 [#allocation4], 4
          %s195 = int_to_ptr.vmem [resolvable:$true] %s194
          %200 = dma.hbm_to_vmem [thread:$0]  %s193, 5120, %s195, [#allocation5], 64, 64, 4
        $region20: #{_lambda_.1} parent=11 // pred_fallthru
          _
      $region12: #{_lambda_.1} parent=5 // pred_fallthru
        _
      %p201 = scmp.lt.s32.totalorder %s12, 2
      // Predicated region
      $region21: #{_lambda_.1} parent=5 // pred_check
        %p202 = pneg %p201
      $region22: #{_lambda_.1} parent=5 // pred_check_branch
        %204 = sbr.rel (%p202) target = $region24
      $region23: #{_lambda_.1} parent=5 // pred_region
        // Predicated region
        $region25: #{_lambda_.1} parent=23 // pred_check
          %p205 = pneg %p48
        $region26: #{_lambda_.1} parent=23 // pred_check_branch
          %207 = sbr.rel (%p205) target = $region28
        $region27: #{_lambda_.1} parent=23 // pred_region
          %s208 = smul.u32 %s19, 2
          %s209 = sadd.s32 %s208, %s20
          %s210 = smul.u32 2, %s209
          %p211 = scmp.lt.s32.totalorder %s210, 7
          %s212 = scalar_select %p211, %s210, 7
          %s213 = smul.addr %s212, 2
          %s214 = smul.addr %s213, 8
          %s215 = scalar_lea.vmem %s0, %s214
          %s216 = smul.u32 %s19, 2
          %s217 = sadd.s32 %s216, %s20
          %s218 = smul.u32 2, %s217
        $region28: #{_lambda_.1} parent=23 // pred_fallthru
          _
        // Predicated region
        $region29: #{_lambda_.1} parent=23 // pred_check
          %p219 = pneg %p82
        $region30: #{_lambda_.1} parent=23 // pred_check_branch
          %221 = sbr.rel (%p219) target = $region32
        $region31: #{_lambda_.1} parent=23 // pred_region
          %s222 = smul.u32 %s19, 2
          %s223 = sadd.s32 %s222, %s20
          %s224 = sadd.s32 %s223, 1
          %s225 = smul.u32 %s224, 2
          %p226 = scmp.lt.s32.totalorder %s225, 7
          %s227 = scalar_select %p226, %s225, 7
          %s228 = smul.addr %s227, 2
          %s229 = smul.addr %s228, 8
          %s230 = scalar_lea.vmem %s1, %s229
          %s231 = smul.u32 %s19, 2
          %s232 = sadd.s32 %s231, %s20
          %s233 = sadd.s32 %s232, 1
          %s234 = smul.u32 %s233, 2
        $region32: #{_lambda_.1} parent=23 // pred_fallthru
          _
      $region24: #{_lambda_.1} parent=5 // pred_fallthru
        _
      %p235 = scmp.le.s32.totalorder 1, %s12
      %p236 = scmp.lt.s32.totalorder %s12, 3
      %p237 = pnand %p235, %p236
      %p238 = pneg %p237
      // Predicated region
      $region33: #{_lambda_.1} parent=5 // pred_check
        _
      $region34: #{_lambda_.1} parent=5 // pred_check_branch
        %240 = sbr.rel (%p237) target = $region36
      $region35: #{_lambda_.1} parent=5 // pred_region
        %s241 = ssub.s32 %s12, 1
        // Predicated region
        $region37: #{_lambda_.1} parent=35 // pred_check
          %p242 = pneg %p109
        $region38: #{_lambda_.1} parent=35 // pred_check_branch
          %244 = sbr.rel (%p242) target = $region40
        $region39: #{_lambda_.1} parent=35 // pred_region
          %246 = dma.done [#allocation3], 81920
        $region40: #{_lambda_.1} parent=35 // pred_fallthru
          _
        // Predicated region
        $region41: #{_lambda_.1} parent=35 // pred_check
          %p247 = pneg %p130
        $region42: #{_lambda_.1} parent=35 // pred_check_branch
          %249 = sbr.rel (%p247) target = $region44
        $region43: #{_lambda_.1} parent=35 // pred_region
          %251 = dma.done [#allocation5], 5120
        $region44: #{_lambda_.1} parent=35 // pred_fallthru
          _
        %s252 = smul.u32 %s21, 2
        %s253 = sadd.s32 %s252, %s22
        %s254 = smul.u32 2, %s253
        %p255 = scmp.lt.s32.totalorder %s254, 7
        %s256 = scalar_select %p255, %s254, 7
        %s257 = smul.addr %s256, 2
        %s258 = smul.addr %s257, 8
        %s259 = scalar_lea.vmem %s0, %s258
        %p260 = pneg %p54
        %p261 = pneg %p51
        %s262 = smul.u32 %s21, 2
        %s263 = sadd.s32 %s262, %s22
        %s264 = sadd.s32 %s263, 1
        %s265 = smul.u32 %s264, 2
        %p266 = scmp.lt.s32.totalorder %s265, 7
        %s267 = scalar_select %p266, %s265, 7
        %s268 = smul.addr %s267, 2
        %s269 = smul.addr %s268, 8
        %s270 = scalar_lea.vmem %s1, %s269
        %p271 = pneg %p88
        %p272 = pneg %p85
        %p273 = pneg %p109
        %p274 = pneg %p106
        %p275 = pneg %p130
        %p276 = pneg %p127
        %p277 = pneg %p158
        %p278 = pneg %p155
        %s279 = sadd.s32 %s21, %s22
        %s280 = smul.u32 2, %s279
        %p281 = scmp.lt.s32.totalorder %s280, 3
        %s282 = scalar_select %p281, %s280, 3
        %s283 = smul.addr %s282, 8
        %s284 = scalar_lea.vmem %s4, %s283
        %s285 = smul.u32 %s21, 2
        %s286 = sadd.s32 %s285, %s22
        %s287 = smul.u32 2, %s286
        %p288 = scmp.lt.s32.totalorder %s287, 7
        %s289 = scalar_select %p288, %s287, 7
        %s290 = smul.addr %s289, 2
        %s291 = smul.addr %s290, 8
        %s292 = scalar_lea.vmem %s0, %s291
        %s293 = smul.u32 %s21, 2
        %s294 = sadd.s32 %s293, %s22
        %s295 = smul.u32 2, %s294
        %s296 = smul.u32 %s21, 2
        %s297 = sadd.s32 %s296, %s22
        %s298 = sadd.s32 %s297, 1
        %s299 = smul.u32 %s298, 2
        %p300 = scmp.lt.s32.totalorder %s299, 7
        %s301 = scalar_select %p300, %s299, 7
        %s302 = smul.addr %s301, 2
        %s303 = smul.addr %s302, 8
        %s304 = scalar_lea.vmem %s1, %s303
        %s305 = smul.u32 %s21, 2
        %s306 = sadd.s32 %s305, %s22
        %s307 = sadd.s32 %s306, 1
        %s308 = smul.u32 %s307, 2
        %s309 = sadd.s32 %s21, %s22
        %s310 = smul.u32 2, %s309
        %p311 = scmp.lt.s32.totalorder %s310, 3
        %s312 = scalar_select %p311, %s310, 3
        %s313 = smul.addr %s312, 8
        %s314 = scalar_lea.vmem %s4, %s313
        %s315 = sadd.s32 %s21, %s22
        %s316 = smul.u32 2, %s315
        %v317 = vld [vmem:[%s292] sm:$0xff]
        %v318 = vld [vmem:[%s292 + $0x8] sm:$0xff]
        %v319 = vld [vmem:[%s292 + $0x10] sm:$0xff]
        %v320 = vld [vmem:[%s292 + $0x18] sm:$0xff]
        %v321 = vld [vmem:[%s304] sm:$0xff]
        %v322 = vld [vmem:[%s304 + $0x8] sm:$0xff]
        %v323 = vpack.c.bf16 %v319, %v317
        %v324 = vpack.c.bf16 %v320, %v318
        %v325 = vld [vmem:[#allocation2] sm:$0xff]
        %v326 = vld [vmem:[#allocation2 + $0x8] sm:$0xff]
        %v327 = vld [vmem:[#allocation2 + $0x10] sm:$0xff]
        %v328 = vld [vmem:[#allocation2 + $0x18] sm:$0xff]
        %v329 = vld [vmem:[#allocation2 + $0x20] sm:$0xff]
        %v330 = vld [vmem:[#allocation2 + $0x28] sm:$0xff]
        %v331 = vld [vmem:[#allocation2 + $0x30] sm:$0xff]
        %v332 = vld [vmem:[#allocation2 + $0x38] sm:$0xff]
        %v333 = vld [vmem:[#allocation2 + $0x40] sm:$0xff]
        %v334 = vld [vmem:[#allocation2 + $0x48] sm:$0xff]
        %v335 = vld [vmem:[#allocation2 + $0x50] sm:$0xff]
        %v336 = vld [vmem:[#allocation2 + $0x58] sm:$0xff]
        %v337 = vld [vmem:[#allocation2 + $0x60] sm:$0xff]
        %v338 = vld [vmem:[#allocation2 + $0x68] sm:$0xff]
        %v339 = vld [vmem:[#allocation2 + $0x70] sm:$0xff]
        %v340 = vld [vmem:[#allocation2 + $0x78] sm:$0xff]
        %v341 = vld [vmem:[#allocation2 + $0x80] sm:$0xff]
        %v342 = vld [vmem:[#allocation2 + $0x88] sm:$0xff]
        %v343 = vld [vmem:[#allocation2 + $0x90] sm:$0xff]
        %v344 = vld [vmem:[#allocation2 + $0x98] sm:$0xff]
        %v345 = vld [vmem:[#allocation2 + $0xa0] sm:$0xff]
        %v346 = vld [vmem:[#allocation2 + $0xa8] sm:$0xff]
        %v347 = vld [vmem:[#allocation2 + $0xb0] sm:$0xff]
        %v348 = vld [vmem:[#allocation2 + $0xb8] sm:$0xff]
        %v349 = vld [vmem:[#allocation2 + $0xc0] sm:$0xff]
        %v350 = vld [vmem:[#allocation2 + $0xc8] sm:$0xff]
        %v351 = vld [vmem:[#allocation2 + $0xd0] sm:$0xff]
        %v352 = vld [vmem:[#allocation2 + $0xd8] sm:$0xff]
        %v353 = vld [vmem:[#allocation2 + $0xe0] sm:$0xff]
        %v354 = vld [vmem:[#allocation2 + $0xe8] sm:$0xff]
        %v355 = vld [vmem:[#allocation2 + $0xf0] sm:$0xff]
        %v356 = vld [vmem:[#allocation2 + $0xf8] sm:$0xff]
        %v357 = vld [vmem:[#allocation2 + $0x100] sm:$0xff]
        %v358 = vld [vmem:[#allocation2 + $0x108] sm:$0xff]
        %v359 = vld [vmem:[#allocation2 + $0x110] sm:$0xff]
        %v360 = vld [vmem:[#allocation2 + $0x118] sm:$0xff]
        %v361 = vld [vmem:[#allocation2 + $0x120] sm:$0xff]
        %v362 = vld [vmem:[#allocation2 + $0x128] sm:$0xff]
        %v363 = vld [vmem:[#allocation2 + $0x130] sm:$0xff]
        %v364 = vld [vmem:[#allocation2 + $0x138] sm:$0xff]
        %v365 = vld [vmem:[#allocation2 + $0x140] sm:$0xff]
        %v366 = vld [vmem:[#allocation2 + $0x148] sm:$0xff]
        %v367 = vld [vmem:[#allocation2 + $0x150] sm:$0xff]
        %v368 = vld [vmem:[#allocation2 + $0x158] sm:$0xff]
        %v369 = vld [vmem:[#allocation2 + $0x160] sm:$0xff]
        %v370 = vld [vmem:[#allocation2 + $0x168] sm:$0xff]
        %v371 = vld [vmem:[#allocation2 + $0x170] sm:$0xff]
        %v372 = vld [vmem:[#allocation2 + $0x178] sm:$0xff]
        %v373 = vld [vmem:[#allocation2 + $0x180] sm:$0xff]
        %v374 = vld [vmem:[#allocation2 + $0x188] sm:$0xff]
        %v375 = vld [vmem:[#allocation2 + $0x190] sm:$0xff]
        %v376 = vld [vmem:[#allocation2 + $0x198] sm:$0xff]
        %v377 = vld [vmem:[#allocation2 + $0x1a0] sm:$0xff]
        %v378 = vld [vmem:[#allocation2 + $0x1a8] sm:$0xff]
        %v379 = vld [vmem:[#allocation2 + $0x1b0] sm:$0xff]
        %v380 = vld [vmem:[#allocation2 + $0x1b8] sm:$0xff]
        %v381 = vld [vmem:[#allocation2 + $0x1c0] sm:$0xff]
        %v382 = vld [vmem:[#allocation2 + $0x1c8] sm:$0xff]
        %v383 = vld [vmem:[#allocation2 + $0x1d0] sm:$0xff]
        %v384 = vld [vmem:[#allocation2 + $0x1d8] sm:$0xff]
        %v385 = vld [vmem:[#allocation2 + $0x1e0] sm:$0xff]
        %v386 = vld [vmem:[#allocation2 + $0x1e8] sm:$0xff]
        %v387 = vld [vmem:[#allocation2 + $0x1f0] sm:$0xff]
        %v388 = vld [vmem:[#allocation2 + $0x1f8] sm:$0xff]
        %v389 = vld [vmem:[#allocation2 + $0x200] sm:$0xff]
        %v390 = vld [vmem:[#allocation2 + $0x208] sm:$0xff]
        %v391 = vld [vmem:[#allocation2 + $0x210] sm:$0xff]
        %v392 = vld [vmem:[#allocation2 + $0x218] sm:$0xff]
        %v393 = vld [vmem:[#allocation2 + $0x220] sm:$0xff]
        %v394 = vld [vmem:[#allocation2 + $0x228] sm:$0xff]
        %v395 = vld [vmem:[#allocation2 + $0x230] sm:$0xff]
        %v396 = vld [vmem:[#allocation2 + $0x238] sm:$0xff]
        %v397 = vld [vmem:[#allocation2 + $0x240] sm:$0xff]
        %v398 = vld [vmem:[#allocation2 + $0x248] sm:$0xff]
        %v399 = vld [vmem:[#allocation2 + $0x250] sm:$0xff]
        %v400 = vld [vmem:[#allocation2 + $0x258] sm:$0xff]
        %v401 = vld [vmem:[#allocation2 + $0x260] sm:$0xff]
        %v402 = vld [vmem:[#allocation2 + $0x268] sm:$0xff]
        %v403 = vld [vmem:[#allocation2 + $0x270] sm:$0xff]
        %v404 = vld [vmem:[#allocation2 + $0x278] sm:$0xff]
        %v405 = vld [vmem:[#allocation2 + $0x280] sm:$0xff]
        %v406 = vld [vmem:[#allocation2 + $0x288] sm:$0xff]
        %v407 = vld [vmem:[#allocation2 + $0x290] sm:$0xff]
        %v408 = vld [vmem:[#allocation2 + $0x298] sm:$0xff]
        %v409 = vld [vmem:[#allocation2 + $0x2a0] sm:$0xff]
        %v410 = vld [vmem:[#allocation2 + $0x2a8] sm:$0xff]
        %v411 = vld [vmem:[#allocation2 + $0x2b0] sm:$0xff]
        %v412 = vld [vmem:[#allocation2 + $0x2b8] sm:$0xff]
        %v413 = vld [vmem:[#allocation2 + $0x2c0] sm:$0xff]
        %v414 = vld [vmem:[#allocation2 + $0x2c8] sm:$0xff]
        %v415 = vld [vmem:[#allocation2 + $0x2d0] sm:$0xff]
        %v416 = vld [vmem:[#allocation2 + $0x2d8] sm:$0xff]
        %v417 = vld [vmem:[#allocation2 + $0x2e0] sm:$0xff]
        %v418 = vld [vmem:[#allocation2 + $0x2e8] sm:$0xff]
        %v419 = vld [vmem:[#allocation2 + $0x2f0] sm:$0xff]
        %v420 = vld [vmem:[#allocation2 + $0x2f8] sm:$0xff]
        %v421 = vld [vmem:[#allocation2 + $0x300] sm:$0xff]
        %v422 = vld [vmem:[#allocation2 + $0x308] sm:$0xff]
        %v423 = vld [vmem:[#allocation2 + $0x310] sm:$0xff]
        %v424 = vld [vmem:[#allocation2 + $0x318] sm:$0xff]
        %v425 = vld [vmem:[#allocation2 + $0x320] sm:$0xff]
        %v426 = vld [vmem:[#allocation2 + $0x328] sm:$0xff]
        %v427 = vld [vmem:[#allocation2 + $0x330] sm:$0xff]
        %v428 = vld [vmem:[#allocation2 + $0x338] sm:$0xff]
        %v429 = vld [vmem:[#allocation2 + $0x340] sm:$0xff]
        %v430 = vld [vmem:[#allocation2 + $0x348] sm:$0xff]
        %v431 = vld [vmem:[#allocation2 + $0x350] sm:$0xff]
        %v432 = vld [vmem:[#allocation2 + $0x358] sm:$0xff]
        %v433 = vld [vmem:[#allocation2 + $0x360] sm:$0xff]
        %v434 = vld [vmem:[#allocation2 + $0x368] sm:$0xff]
        %v435 = vld [vmem:[#allocation2 + $0x370] sm:$0xff]
        %v436 = vld [vmem:[#allocation2 + $0x378] sm:$0xff]
        %v437 = vld [vmem:[#allocation2 + $0x380] sm:$0xff]
        %v438 = vld [vmem:[#allocation2 + $0x388] sm:$0xff]
        %v439 = vld [vmem:[#allocation2 + $0x390] sm:$0xff]
        %v440 = vld [vmem:[#allocation2 + $0x398] sm:$0xff]
        %v441 = vld [vmem:[#allocation2 + $0x3a0] sm:$0xff]
        %v442 = vld [vmem:[#allocation2 + $0x3a8] sm:$0xff]
        %v443 = vld [vmem:[#allocation2 + $0x3b0] sm:$0xff]
        %v444 = vld [vmem:[#allocation2 + $0x3b8] sm:$0xff]
        %v445 = vld [vmem:[#allocation2 + $0x3c0] sm:$0xff]
        %v446 = vld [vmem:[#allocation2 + $0x3c8] sm:$0xff]
        %v447 = vld [vmem:[#allocation2 + $0x3d0] sm:$0xff]
        %v448 = vld [vmem:[#allocation2 + $0x3d8] sm:$0xff]
        %v449 = vld [vmem:[#allocation2 + $0x3e0] sm:$0xff]
        %v450 = vld [vmem:[#allocation2 + $0x3e8] sm:$0xff]
        %v451 = vld [vmem:[#allocation2 + $0x3f0] sm:$0xff]
        %v452 = vld [vmem:[#allocation2 + $0x3f8] sm:$0xff]
        %v453 = vld [vmem:[#allocation2 + $0x400] sm:$0xff]
        %v454 = vld [vmem:[#allocation2 + $0x408] sm:$0xff]
        %v455 = vld [vmem:[#allocation2 + $0x410] sm:$0xff]
        %v456 = vld [vmem:[#allocation2 + $0x418] sm:$0xff]
        %v457 = vld [vmem:[#allocation2 + $0x420] sm:$0xff]
        %v458 = vld [vmem:[#allocation2 + $0x428] sm:$0xff]
        %v459 = vld [vmem:[#allocation2 + $0x430] sm:$0xff]
        %v460 = vld [vmem:[#allocation2 + $0x438] sm:$0xff]
        %v461 = vld [vmem:[#allocation2 + $0x440] sm:$0xff]
        %v462 = vld [vmem:[#allocation2 + $0x448] sm:$0xff]
        %v463 = vld [vmem:[#allocation2 + $0x450] sm:$0xff]
        %v464 = vld [vmem:[#allocation2 + $0x458] sm:$0xff]
        %v465 = vld [vmem:[#allocation2 + $0x460] sm:$0xff]
        %v466 = vld [vmem:[#allocation2 + $0x468] sm:$0xff]
        %v467 = vld [vmem:[#allocation2 + $0x470] sm:$0xff]
        %v468 = vld [vmem:[#allocation2 + $0x478] sm:$0xff]
        %v469 = vld [vmem:[#allocation2 + $0x480] sm:$0xff]
        %v470 = vld [vmem:[#allocation2 + $0x488] sm:$0xff]
        %v471 = vld [vmem:[#allocation2 + $0x490] sm:$0xff]
        %v472 = vld [vmem:[#allocation2 + $0x498] sm:$0xff]
        %v473 = vld [vmem:[#allocation2 + $0x4a0] sm:$0xff]
        %v474 = vld [vmem:[#allocation2 + $0x4a8] sm:$0xff]
        %v475 = vld [vmem:[#allocation2 + $0x4b0] sm:$0xff]
        %v476 = vld [vmem:[#allocation2 + $0x4b8] sm:$0xff]
        %v477 = vld [vmem:[#allocation2 + $0x4c0] sm:$0xff]
        %v478 = vld [vmem:[#allocation2 + $0x4c8] sm:$0xff]
        %v479 = vld [vmem:[#allocation2 + $0x4d0] sm:$0xff]
        %v480 = vld [vmem:[#allocation2 + $0x4d8] sm:$0xff]
        %v481 = vld [vmem:[#allocation2 + $0x4e0] sm:$0xff]
        %v482 = vld [vmem:[#allocation2 + $0x4e8] sm:$0xff]
        %v483 = vld [vmem:[#allocation2 + $0x4f0] sm:$0xff]
        %v484 = vld [vmem:[#allocation2 + $0x4f8] sm:$0xff]
        %v485 = vpack.c.bf16 %v321, %v321
        %v486 = vpack.c.bf16 %v322, %v322
        %v487 = vld [vmem:[#allocation2 + $0x500] sm:$0xff]
        %v488 = vld [vmem:[#allocation2 + $0x508] sm:$0xff]
        %v489 = vld [vmem:[#allocation2 + $0x510] sm:$0xff]
        %v490 = vld [vmem:[#allocation2 + $0x518] sm:$0xff]
        %v491 = vld [vmem:[#allocation2 + $0x520] sm:$0xff]
        %v492 = vld [vmem:[#allocation2 + $0x528] sm:$0xff]
        %v493 = vld [vmem:[#allocation2 + $0x530] sm:$0xff]
        %v494 = vld [vmem:[#allocation2 + $0x538] sm:$0xff]
        %v495 = vld [vmem:[#allocation2 + $0x540] sm:$0xff]
        %v496 = vld [vmem:[#allocation2 + $0x548] sm:$0xff]
        %v497 = vld [vmem:[#allocation2 + $0x550] sm:$0xff]
        %v498 = vld [vmem:[#allocation2 + $0x558] sm:$0xff]
        %v499 = vld [vmem:[#allocation2 + $0x560] sm:$0xff]
        %v500 = vld [vmem:[#allocation2 + $0x568] sm:$0xff]
        %v501 = vld [vmem:[#allocation2 + $0x570] sm:$0xff]
        %v502 = vld [vmem:[#allocation2 + $0x578] sm:$0xff]
        %v503 = vld [vmem:[#allocation2 + $0x580] sm:$0xff]
        %v504 = vld [vmem:[#allocation2 + $0x588] sm:$0xff]
        %v505 = vld [vmem:[#allocation2 + $0x590] sm:$0xff]
        %v506 = vld [vmem:[#allocation2 + $0x598] sm:$0xff]
        %v507 = vld [vmem:[#allocation2 + $0x5a0] sm:$0xff]
        %v508 = vld [vmem:[#allocation2 + $0x5a8] sm:$0xff]
        %v509 = vld [vmem:[#allocation2 + $0x5b0] sm:$0xff]
        %v510 = vld [vmem:[#allocation2 + $0x5b8] sm:$0xff]
        %v511 = vld [vmem:[#allocation2 + $0x5c0] sm:$0xff]
        %v512 = vld [vmem:[#allocation2 + $0x5c8] sm:$0xff]
        %v513 = vld [vmem:[#allocation2 + $0x5d0] sm:$0xff]
        %v514 = vld [vmem:[#allocation2 + $0x5d8] sm:$0xff]
        %v515 = vld [vmem:[#allocation2 + $0x5e0] sm:$0xff]
        %v516 = vld [vmem:[#allocation2 + $0x5e8] sm:$0xff]
        %v517 = vld [vmem:[#allocation2 + $0x5f0] sm:$0xff]
        %v518 = vld [vmem:[#allocation2 + $0x5f8] sm:$0xff]
        %v519 = vld [vmem:[#allocation2 + $0x600] sm:$0xff]
        %v520 = vld [vmem:[#allocation2 + $0x608] sm:$0xff]
        %v521 = vld [vmem:[#allocation2 + $0x610] sm:$0xff]
        %v522 = vld [vmem:[#allocation2 + $0x618] sm:$0xff]
        %v523 = vld [vmem:[#allocation2 + $0x620] sm:$0xff]
        %v524 = vld [vmem:[#allocation2 + $0x628] sm:$0xff]
        %v525 = vld [vmem:[#allocation2 + $0x630] sm:$0xff]
        %v526 = vld [vmem:[#allocation2 + $0x638] sm:$0xff]
        %v527 = vld [vmem:[#allocation2 + $0x640] sm:$0xff]
        %v528 = vld [vmem:[#allocation2 + $0x648] sm:$0xff]
        %v529 = vld [vmem:[#allocation2 + $0x650] sm:$0xff]
        %v530 = vld [vmem:[#allocation2 + $0x658] sm:$0xff]
        %v531 = vld [vmem:[#allocation2 + $0x660] sm:$0xff]
        %v532 = vld [vmem:[#allocation2 + $0x668] sm:$0xff]
        %v533 = vld [vmem:[#allocation2 + $0x670] sm:$0xff]
        %v534 = vld [vmem:[#allocation2 + $0x678] sm:$0xff]
        %v535 = vld [vmem:[#allocation2 + $0x680] sm:$0xff]
        %v536 = vld [vmem:[#allocation2 + $0x688] sm:$0xff]
        %v537 = vld [vmem:[#allocation2 + $0x690] sm:$0xff]
        %v538 = vld [vmem:[#allocation2 + $0x698] sm:$0xff]
        %v539 = vld [vmem:[#allocation2 + $0x6a0] sm:$0xff]
        %v540 = vld [vmem:[#allocation2 + $0x6a8] sm:$0xff]
        %v541 = vld [vmem:[#allocation2 + $0x6b0] sm:$0xff]
        %v542 = vld [vmem:[#allocation2 + $0x6b8] sm:$0xff]
        %v543 = vld [vmem:[#allocation2 + $0x6c0] sm:$0xff]
        %v544 = vld [vmem:[#allocation2 + $0x6c8] sm:$0xff]
        %v545 = vld [vmem:[#allocation2 + $0x6d0] sm:$0xff]
        %v546 = vld [vmem:[#allocation2 + $0x6d8] sm:$0xff]
        %v547 = vld [vmem:[#allocation2 + $0x6e0] sm:$0xff]
        %v548 = vld [vmem:[#allocation2 + $0x6e8] sm:$0xff]
        %v549 = vld [vmem:[#allocation2 + $0x6f0] sm:$0xff]
        %v550 = vld [vmem:[#allocation2 + $0x6f8] sm:$0xff]
        %v551 = vld [vmem:[#allocation2 + $0x700] sm:$0xff]
        %v552 = vld [vmem:[#allocation2 + $0x708] sm:$0xff]
        %v553 = vld [vmem:[#allocation2 + $0x710] sm:$0xff]
        %v554 = vld [vmem:[#allocation2 + $0x718] sm:$0xff]
        %v555 = vld [vmem:[#allocation2 + $0x720] sm:$0xff]
        %v556 = vld [vmem:[#allocation2 + $0x728] sm:$0xff]
        %v557 = vld [vmem:[#allocation2 + $0x730] sm:$0xff]
        %v558 = vld [vmem:[#allocation2 + $0x738] sm:$0xff]
        %v559 = vld [vmem:[#allocation2 + $0x740] sm:$0xff]
        %v560 = vld [vmem:[#allocation2 + $0x748] sm:$0xff]
        %v561 = vld [vmem:[#allocation2 + $0x750] sm:$0xff]
        %v562 = vld [vmem:[#allocation2 + $0x758] sm:$0xff]
        %v563 = vld [vmem:[#allocation2 + $0x760] sm:$0xff]
        %v564 = vld [vmem:[#allocation2 + $0x768] sm:$0xff]
        %v565 = vld [vmem:[#allocation2 + $0x770] sm:$0xff]
        %v566 = vld [vmem:[#allocation2 + $0x778] sm:$0xff]
        %v567 = vld [vmem:[#allocation2 + $0x780] sm:$0xff]
        %v568 = vld [vmem:[#allocation2 + $0x788] sm:$0xff]
        %v569 = vld [vmem:[#allocation2 + $0x790] sm:$0xff]
        %v570 = vld [vmem:[#allocation2 + $0x798] sm:$0xff]
        %v571 = vld [vmem:[#allocation2 + $0x7a0] sm:$0xff]
        %v572 = vld [vmem:[#allocation2 + $0x7a8] sm:$0xff]
        %v573 = vld [vmem:[#allocation2 + $0x7b0] sm:$0xff]
        %v574 = vld [vmem:[#allocation2 + $0x7b8] sm:$0xff]
        %v575 = vld [vmem:[#allocation2 + $0x7c0] sm:$0xff]
        %v576 = vld [vmem:[#allocation2 + $0x7c8] sm:$0xff]
        %v577 = vld [vmem:[#allocation2 + $0x7d0] sm:$0xff]
        %v578 = vld [vmem:[#allocation2 + $0x7d8] sm:$0xff]
        %v579 = vld [vmem:[#allocation2 + $0x7e0] sm:$0xff]
        %v580 = vld [vmem:[#allocation2 + $0x7e8] sm:$0xff]
        %v581 = vld [vmem:[#allocation2 + $0x7f0] sm:$0xff]
        %v582 = vld [vmem:[#allocation2 + $0x7f8] sm:$0xff]
        %v583 = vld [vmem:[#allocation2 + $0x800] sm:$0xff]
        %v584 = vld [vmem:[#allocation2 + $0x808] sm:$0xff]
        %v585 = vld [vmem:[#allocation2 + $0x810] sm:$0xff]
        %v586 = vld [vmem:[#allocation2 + $0x818] sm:$0xff]
        %v587 = vld [vmem:[#allocation2 + $0x820] sm:$0xff]
        %v588 = vld [vmem:[#allocation2 + $0x828] sm:$0xff]
        %v589 = vld [vmem:[#allocation2 + $0x830] sm:$0xff]
        %v590 = vld [vmem:[#allocation2 + $0x838] sm:$0xff]
        %v591 = vld [vmem:[#allocation2 + $0x840] sm:$0xff]
        %v592 = vld [vmem:[#allocation2 + $0x848] sm:$0xff]
        %v593 = vld [vmem:[#allocation2 + $0x850] sm:$0xff]
        %v594 = vld [vmem:[#allocation2 + $0x858] sm:$0xff]
        %v595 = vld [vmem:[#allocation2 + $0x860] sm:$0xff]
        %v596 = vld [vmem:[#allocation2 + $0x868] sm:$0xff]
        %v597 = vld [vmem:[#allocation2 + $0x870] sm:$0xff]
        %v598 = vld [vmem:[#allocation2 + $0x878] sm:$0xff]
        %v599 = vld [vmem:[#allocation2 + $0x880] sm:$0xff]
        %v600 = vld [vmem:[#allocation2 + $0x888] sm:$0xff]
        %v601 = vld [vmem:[#allocation2 + $0x890] sm:$0xff]
        %v602 = vld [vmem:[#allocation2 + $0x898] sm:$0xff]
        %v603 = vld [vmem:[#allocation2 + $0x8a0] sm:$0xff]
        %v604 = vld [vmem:[#allocation2 + $0x8a8] sm:$0xff]
        %v605 = vld [vmem:[#allocation2 + $0x8b0] sm:$0xff]
        %v606 = vld [vmem:[#allocation2 + $0x8b8] sm:$0xff]
        %v607 = vld [vmem:[#allocation2 + $0x8c0] sm:$0xff]
        %v608 = vld [vmem:[#allocation2 + $0x8c8] sm:$0xff]
        %v609 = vld [vmem:[#allocation2 + $0x8d0] sm:$0xff]
        %v610 = vld [vmem:[#allocation2 + $0x8d8] sm:$0xff]
        %v611 = vld [vmem:[#allocation2 + $0x8e0] sm:$0xff]
        %v612 = vld [vmem:[#allocation2 + $0x8e8] sm:$0xff]
        %v613 = vld [vmem:[#allocation2 + $0x8f0] sm:$0xff]
        %v614 = vld [vmem:[#allocation2 + $0x8f8] sm:$0xff]
        %v615 = vld [vmem:[#allocation2 + $0x900] sm:$0xff]
        %v616 = vld [vmem:[#allocation2 + $0x908] sm:$0xff]
        %v617 = vld [vmem:[#allocation2 + $0x910] sm:$0xff]
        %v618 = vld [vmem:[#allocation2 + $0x918] sm:$0xff]
        %v619 = vld [vmem:[#allocation2 + $0x920] sm:$0xff]
        %v620 = vld [vmem:[#allocation2 + $0x928] sm:$0xff]
        %v621 = vld [vmem:[#allocation2 + $0x930] sm:$0xff]
        %v622 = vld [vmem:[#allocation2 + $0x938] sm:$0xff]
        %v623 = vld [vmem:[#allocation2 + $0x940] sm:$0xff]
        %v624 = vld [vmem:[#allocation2 + $0x948] sm:$0xff]
        %v625 = vld [vmem:[#allocation2 + $0x950] sm:$0xff]
        %v626 = vld [vmem:[#allocation2 + $0x958] sm:$0xff]
        %v627 = vld [vmem:[#allocation2 + $0x960] sm:$0xff]
        %v628 = vld [vmem:[#allocation2 + $0x968] sm:$0xff]
        %v629 = vld [vmem:[#allocation2 + $0x970] sm:$0xff]
        %v630 = vld [vmem:[#allocation2 + $0x978] sm:$0xff]
        %v631 = vld [vmem:[#allocation2 + $0x980] sm:$0xff]
        %v632 = vld [vmem:[#allocation2 + $0x988] sm:$0xff]
        %v633 = vld [vmem:[#allocation2 + $0x990] sm:$0xff]
        %v634 = vld [vmem:[#allocation2 + $0x998] sm:$0xff]
        %v635 = vld [vmem:[#allocation2 + $0x9a0] sm:$0xff]
        %v636 = vld [vmem:[#allocation2 + $0x9a8] sm:$0xff]
        %v637 = vld [vmem:[#allocation2 + $0x9b0] sm:$0xff]
        %v638 = vld [vmem:[#allocation2 + $0x9b8] sm:$0xff]
        %v639 = vld [vmem:[#allocation2 + $0x9c0] sm:$0xff]
        %v640 = vld [vmem:[#allocation2 + $0x9c8] sm:$0xff]
        %v641 = vld [vmem:[#allocation2 + $0x9d0] sm:$0xff]
        %v642 = vld [vmem:[#allocation2 + $0x9d8] sm:$0xff]
        %v643 = vld [vmem:[#allocation2 + $0x9e0] sm:$0xff]
        %v644 = vld [vmem:[#allocation2 + $0x9e8] sm:$0xff]
        %v645 = vld [vmem:[#allocation2 + $0x9f0] sm:$0xff]
        %v646 = vld [vmem:[#allocation2 + $0x9f8] sm:$0xff]
        %vm647 = vsmask.f32 7424
        %v649 = vshrl.u32 %v323, 16
        %v651 = vshll.u32 %v323, 16
        %v653 = vrot.slane %v651, 1
        %v654 = vor.u32 %v649, %v653
        %v656 = vshll.u32 %v485, 16
        %v658 = vrot.slane %v656, 1
        %v659 = vsel %vm647, %v654, %v658
        %v661 = vshrl.u32 %v324, 16
        %v663 = vshll.u32 %v324, 16
        %v665 = vrot.slane %v663, 1
        %v666 = vor.u32 %v661, %v665
        %v668 = vshll.u32 %v486, 16
        %v670 = vrot.slane %v668, 1
        %v671 = vsel %vm647, %v666, %v670
        %v834 = vunpack.c.l.b16 %v487
        %v835 = vunpack.c.h.b16 %v487
        %v836 = vunpack.c.l.b16 %v488
        %v837 = vunpack.c.h.b16 %v488
        %v838 = vunpack.c.l.b16 %v489
        %v839 = vunpack.c.h.b16 %v489
        %v840 = vunpack.c.l.b16 %v490
        %v841 = vunpack.c.h.b16 %v490
        %v842 = vunpack.c.l.b16 %v491
        %v843 = vunpack.c.h.b16 %v491
        %v844 = vunpack.c.l.b16 %v492
        %v845 = vunpack.c.h.b16 %v492
        %v846 = vunpack.c.l.b16 %v493
        %v847 = vunpack.c.h.b16 %v493
        %v848 = vunpack.c.l.b16 %v494
        %v849 = vunpack.c.h.b16 %v494
        %v850 = vunpack.c.l.b16 %v495
        %v851 = vunpack.c.h.b16 %v495
        %v852 = vunpack.c.l.b16 %v496
        %v853 = vunpack.c.h.b16 %v496
        %v854 = vunpack.c.l.b16 %v497
        %v855 = vunpack.c.h.b16 %v497
        %v856 = vunpack.c.l.b16 %v498
        %v857 = vunpack.c.h.b16 %v498
        %v858 = vunpack.c.l.b16 %v499
        %v859 = vunpack.c.h.b16 %v499
        %v860 = vunpack.c.l.b16 %v500
        %v861 = vunpack.c.h.b16 %v500
        %v862 = vunpack.c.l.b16 %v501
        %v863 = vunpack.c.h.b16 %v501
        %v864 = vunpack.c.l.b16 %v502
        %v865 = vunpack.c.h.b16 %v502
        %v866 = vunpack.c.l.b16 %v503
        %v867 = vunpack.c.h.b16 %v503
        %v868 = vunpack.c.l.b16 %v504
        %v869 = vunpack.c.h.b16 %v504
        %v870 = vunpack.c.l.b16 %v505
        %v871 = vunpack.c.h.b16 %v505
        %v872 = vunpack.c.l.b16 %v506
        %v873 = vunpack.c.h.b16 %v506
        %v874 = vunpack.c.l.b16 %v507
        %v875 = vunpack.c.h.b16 %v507
        %v876 = vunpack.c.l.b16 %v508
        %v877 = vunpack.c.h.b16 %v508
        %v878 = vunpack.c.l.b16 %v509
        %v879 = vunpack.c.h.b16 %v509
        %v880 = vunpack.c.l.b16 %v510
        %v881 = vunpack.c.h.b16 %v510
        %v882 = vunpack.c.l.b16 %v511
        %v883 = vunpack.c.h.b16 %v511
        %v884 = vunpack.c.l.b16 %v512
        %v885 = vunpack.c.h.b16 %v512
        %v886 = vunpack.c.l.b16 %v513
        %v887 = vunpack.c.h.b16 %v513
        %v888 = vunpack.c.l.b16 %v514
        %v889 = vunpack.c.h.b16 %v514
        %v890 = vunpack.c.l.b16 %v515
        %v891 = vunpack.c.h.b16 %v515
        %v892 = vunpack.c.l.b16 %v516
        %v893 = vunpack.c.h.b16 %v516
        %v894 = vunpack.c.l.b16 %v517
        %v895 = vunpack.c.h.b16 %v517
        %v896 = vunpack.c.l.b16 %v518
        %v897 = vunpack.c.h.b16 %v518
        %v898 = vunpack.c.l.b16 %v519
        %v899 = vunpack.c.h.b16 %v519
        %v900 = vunpack.c.l.b16 %v520
        %v901 = vunpack.c.h.b16 %v520
        %v902 = vunpack.c.l.b16 %v521
        %v903 = vunpack.c.h.b16 %v521
        %v904 = vunpack.c.l.b16 %v522
        %v905 = vunpack.c.h.b16 %v522
        %v906 = vunpack.c.l.b16 %v523
        %v907 = vunpack.c.h.b16 %v523
        %v908 = vunpack.c.l.b16 %v524
        %v909 = vunpack.c.h.b16 %v524
        %v910 = vunpack.c.l.b16 %v525
        %v911 = vunpack.c.h.b16 %v525
        %v912 = vunpack.c.l.b16 %v526
        %v913 = vunpack.c.h.b16 %v526
        %v914 = vunpack.c.l.b16 %v527
        %v915 = vunpack.c.h.b16 %v527
        %v916 = vunpack.c.l.b16 %v528
        %v917 = vunpack.c.h.b16 %v528
        %v918 = vunpack.c.l.b16 %v529
        %v919 = vunpack.c.h.b16 %v529
        %v920 = vunpack.c.l.b16 %v530
        %v921 = vunpack.c.h.b16 %v530
        %v922 = vunpack.c.l.b16 %v531
        %v923 = vunpack.c.h.b16 %v531
        %v924 = vunpack.c.l.b16 %v532
        %v925 = vunpack.c.h.b16 %v532
        %v926 = vunpack.c.l.b16 %v533
        %v927 = vunpack.c.h.b16 %v533
        %v928 = vunpack.c.l.b16 %v534
        %v929 = vunpack.c.h.b16 %v534
        %v930 = vunpack.c.l.b16 %v535
        %v931 = vunpack.c.h.b16 %v535
        %v932 = vunpack.c.l.b16 %v536
        %v933 = vunpack.c.h.b16 %v536
        %v934 = vunpack.c.l.b16 %v537
        %v935 = vunpack.c.h.b16 %v537
        %v936 = vunpack.c.l.b16 %v538
        %v937 = vunpack.c.h.b16 %v538
        %v938 = vunpack.c.l.b16 %v539
        %v939 = vunpack.c.h.b16 %v539
        %v940 = vunpack.c.l.b16 %v540
        %v941 = vunpack.c.h.b16 %v540
        %v942 = vunpack.c.l.b16 %v541
        %v943 = vunpack.c.h.b16 %v541
        %v944 = vunpack.c.l.b16 %v542
        %v945 = vunpack.c.h.b16 %v542
        %v946 = vunpack.c.l.b16 %v543
        %v947 = vunpack.c.h.b16 %v543
        %v948 = vunpack.c.l.b16 %v544
        %v949 = vunpack.c.h.b16 %v544
        %v950 = vunpack.c.l.b16 %v545
        %v951 = vunpack.c.h.b16 %v545
        %v952 = vunpack.c.l.b16 %v546
        %v953 = vunpack.c.h.b16 %v546
        %v954 = vunpack.c.l.b16 %v547
        %v955 = vunpack.c.h.b16 %v547
        %v956 = vunpack.c.l.b16 %v548
        %v957 = vunpack.c.h.b16 %v548
        %v958 = vunpack.c.l.b16 %v549
        %v959 = vunpack.c.h.b16 %v549
        %v960 = vunpack.c.l.b16 %v550
        %v961 = vunpack.c.h.b16 %v550
        %v962 = vunpack.c.l.b16 %v551
        %v963 = vunpack.c.h.b16 %v551
        %v964 = vunpack.c.l.b16 %v552
        %v965 = vunpack.c.h.b16 %v552
        %v966 = vunpack.c.l.b16 %v553
        %v967 = vunpack.c.h.b16 %v553
        %v968 = vunpack.c.l.b16 %v554
        %v969 = vunpack.c.h.b16 %v554
        %v970 = vunpack.c.l.b16 %v555
        %v971 = vunpack.c.h.b16 %v555
        %v972 = vunpack.c.l.b16 %v556
        %v973 = vunpack.c.h.b16 %v556
        %v974 = vunpack.c.l.b16 %v557
        %v975 = vunpack.c.h.b16 %v557
        %v976 = vunpack.c.l.b16 %v558
        %v977 = vunpack.c.h.b16 %v558
        %v978 = vunpack.c.l.b16 %v559
        %v979 = vunpack.c.h.b16 %v559
        %v980 = vunpack.c.l.b16 %v560
        %v981 = vunpack.c.h.b16 %v560
        %v982 = vunpack.c.l.b16 %v561
        %v983 = vunpack.c.h.b16 %v561
        %v984 = vunpack.c.l.b16 %v562
        %v985 = vunpack.c.h.b16 %v562
        %v986 = vunpack.c.l.b16 %v563
        %v987 = vunpack.c.h.b16 %v563
        %v988 = vunpack.c.l.b16 %v564
        %v989 = vunpack.c.h.b16 %v564
        %v990 = vunpack.c.l.b16 %v565
        %v991 = vunpack.c.h.b16 %v565
        %v992 = vunpack.c.l.b16 %v566
        %v993 = vunpack.c.h.b16 %v566
        %v994 = vunpack.c.l.b16 %v567
        %v995 = vunpack.c.h.b16 %v567
        %v996 = vunpack.c.l.b16 %v568
        %v997 = vunpack.c.h.b16 %v568
        %v998 = vunpack.c.l.b16 %v569
        %v999 = vunpack.c.h.b16 %v569
        %v1000 = vunpack.c.l.b16 %v570
        %v1001 = vunpack.c.h.b16 %v570
        %v1002 = vunpack.c.l.b16 %v571
        %v1003 = vunpack.c.h.b16 %v571
        %v1004 = vunpack.c.l.b16 %v572
        %v1005 = vunpack.c.h.b16 %v572
        %v1006 = vunpack.c.l.b16 %v573
        %v1007 = vunpack.c.h.b16 %v573
        %v1008 = vunpack.c.l.b16 %v574
        %v1009 = vunpack.c.h.b16 %v574
        %v1010 = vunpack.c.l.b16 %v575
        %v1011 = vunpack.c.h.b16 %v575
        %v1012 = vunpack.c.l.b16 %v576
        %v1013 = vunpack.c.h.b16 %v576
        %v1014 = vunpack.c.l.b16 %v577
        %v1015 = vunpack.c.h.b16 %v577
        %v1016 = vunpack.c.l.b16 %v578
        %v1017 = vunpack.c.h.b16 %v578
        %v1018 = vunpack.c.l.b16 %v579
        %v1019 = vunpack.c.h.b16 %v579
        %v1020 = vunpack.c.l.b16 %v580
        %v1021 = vunpack.c.h.b16 %v580
        %v1022 = vunpack.c.l.b16 %v581
        %v1023 = vunpack.c.h.b16 %v581
        %v1024 = vunpack.c.l.b16 %v582
        %v1025 = vunpack.c.h.b16 %v582
        %v1026 = vunpack.c.l.b16 %v583
        %v1027 = vunpack.c.h.b16 %v583
        %v1028 = vunpack.c.l.b16 %v584
        %v1029 = vunpack.c.h.b16 %v584
        %v1030 = vunpack.c.l.b16 %v585
        %v1031 = vunpack.c.h.b16 %v585
        %v1032 = vunpack.c.l.b16 %v586
        %v1033 = vunpack.c.h.b16 %v586
        %v1034 = vunpack.c.l.b16 %v587
        %v1035 = vunpack.c.h.b16 %v587
        %v1036 = vunpack.c.l.b16 %v588
        %v1037 = vunpack.c.h.b16 %v588
        %v1038 = vunpack.c.l.b16 %v589
        %v1039 = vunpack.c.h.b16 %v589
        %v1040 = vunpack.c.l.b16 %v590
        %v1041 = vunpack.c.h.b16 %v590
        %v1042 = vunpack.c.l.b16 %v591
        %v1043 = vunpack.c.h.b16 %v591
        %v1044 = vunpack.c.l.b16 %v592
        %v1045 = vunpack.c.h.b16 %v592
        %v1046 = vunpack.c.l.b16 %v593
        %v1047 = vunpack.c.h.b16 %v593
        %v1048 = vunpack.c.l.b16 %v594
        %v1049 = vunpack.c.h.b16 %v594
        %v1050 = vunpack.c.l.b16 %v595
        %v1051 = vunpack.c.h.b16 %v595
        %v1052 = vunpack.c.l.b16 %v596
        %v1053 = vunpack.c.h.b16 %v596
        %v1054 = vunpack.c.l.b16 %v597
        %v1055 = vunpack.c.h.b16 %v597
        %v1056 = vunpack.c.l.b16 %v598
        %v1057 = vunpack.c.h.b16 %v598
        %v1058 = vunpack.c.l.b16 %v599
        %v1059 = vunpack.c.h.b16 %v599
        %v1060 = vunpack.c.l.b16 %v600
        %v1061 = vunpack.c.h.b16 %v600
        %v1062 = vunpack.c.l.b16 %v601
        %v1063 = vunpack.c.h.b16 %v601
        %v1064 = vunpack.c.l.b16 %v602
        %v1065 = vunpack.c.h.b16 %v602
        %v1066 = vunpack.c.l.b16 %v603
        %v1067 = vunpack.c.h.b16 %v603
        %v1068 = vunpack.c.l.b16 %v604
        %v1069 = vunpack.c.h.b16 %v604
        %v1070 = vunpack.c.l.b16 %v605
        %v1071 = vunpack.c.h.b16 %v605
        %v1072 = vunpack.c.l.b16 %v606
        %v1073 = vunpack.c.h.b16 %v606
        %v1074 = vunpack.c.l.b16 %v607
        %v1075 = vunpack.c.h.b16 %v607
        %v1076 = vunpack.c.l.b16 %v608
        %v1077 = vunpack.c.h.b16 %v608
        %v1078 = vunpack.c.l.b16 %v609
        %v1079 = vunpack.c.h.b16 %v609
        %v1080 = vunpack.c.l.b16 %v610
        %v1081 = vunpack.c.h.b16 %v610
        %v1082 = vunpack.c.l.b16 %v611
        %v1083 = vunpack.c.h.b16 %v611
        %v1084 = vunpack.c.l.b16 %v612
        %v1085 = vunpack.c.h.b16 %v612
        %v1086 = vunpack.c.l.b16 %v613
        %v1087 = vunpack.c.h.b16 %v613
        %v1088 = vunpack.c.l.b16 %v614
        %v1089 = vunpack.c.h.b16 %v614
        %v1090 = vunpack.c.l.b16 %v615
        %v1091 = vunpack.c.h.b16 %v615
        %v1092 = vunpack.c.l.b16 %v616
        %v1093 = vunpack.c.h.b16 %v616
        %v1094 = vunpack.c.l.b16 %v617
        %v1095 = vunpack.c.h.b16 %v617
        %v1096 = vunpack.c.l.b16 %v618
        %v1097 = vunpack.c.h.b16 %v618
        %v1098 = vunpack.c.l.b16 %v619
        %v1099 = vunpack.c.h.b16 %v619
        %v1100 = vunpack.c.l.b16 %v620
        %v1101 = vunpack.c.h.b16 %v620
        %v1102 = vunpack.c.l.b16 %v621
        %v1103 = vunpack.c.h.b16 %v621
        %v1104 = vunpack.c.l.b16 %v622
        %v1105 = vunpack.c.h.b16 %v622
        %v1106 = vunpack.c.l.b16 %v623
        %v1107 = vunpack.c.h.b16 %v623
        %v1108 = vunpack.c.l.b16 %v624
        %v1109 = vunpack.c.h.b16 %v624
        %v1110 = vunpack.c.l.b16 %v625
        %v1111 = vunpack.c.h.b16 %v625
        %v1112 = vunpack.c.l.b16 %v626
        %v1113 = vunpack.c.h.b16 %v626
        %v1114 = vunpack.c.l.b16 %v627
        %v1115 = vunpack.c.h.b16 %v627
        %v1116 = vunpack.c.l.b16 %v628
        %v1117 = vunpack.c.h.b16 %v628
        %v1118 = vunpack.c.l.b16 %v629
        %v1119 = vunpack.c.h.b16 %v629
        %v1120 = vunpack.c.l.b16 %v630
        %v1121 = vunpack.c.h.b16 %v630
        %v1122 = vunpack.c.l.b16 %v631
        %v1123 = vunpack.c.h.b16 %v631
        %v1124 = vunpack.c.l.b16 %v632
        %v1125 = vunpack.c.h.b16 %v632
        %v1126 = vunpack.c.l.b16 %v633
        %v1127 = vunpack.c.h.b16 %v633
        %v1128 = vunpack.c.l.b16 %v634
        %v1129 = vunpack.c.h.b16 %v634
        %v1130 = vunpack.c.l.b16 %v635
        %v1131 = vunpack.c.h.b16 %v635
        %v1132 = vunpack.c.l.b16 %v636
        %v1133 = vunpack.c.h.b16 %v636
        %v1134 = vunpack.c.l.b16 %v637
        %v1135 = vunpack.c.h.b16 %v637
        %v1136 = vunpack.c.l.b16 %v638
        %v1137 = vunpack.c.h.b16 %v638
        %v1138 = vunpack.c.l.b16 %v639
        %v1139 = vunpack.c.h.b16 %v639
        %v1140 = vunpack.c.l.b16 %v640
        %v1141 = vunpack.c.h.b16 %v640
        %v1142 = vunpack.c.l.b16 %v641
        %v1143 = vunpack.c.h.b16 %v641
        %v1144 = vunpack.c.l.b16 %v642
        %v1145 = vunpack.c.h.b16 %v642
        %v1146 = vunpack.c.l.b16 %v643
        %v1147 = vunpack.c.h.b16 %v643
        %v1148 = vunpack.c.l.b16 %v644
        %v1149 = vunpack.c.h.b16 %v644
        %v1150 = vunpack.c.l.b16 %v645
        %v1151 = vunpack.c.h.b16 %v645
        %v1152 = vunpack.c.l.b16 %v646
        %v1153 = vunpack.c.h.b16 %v646
        %v1154 = vpack.c.b16 %v844, %v834
        %v1155 = vpack.c.b16 %v845, %v835
        %v1156 = vpack.c.b16 %v846, %v836
        %v1157 = vpack.c.b16 %v847, %v837
        %v1158 = vpack.c.b16 %v848, %v838
        %v1159 = vpack.c.b16 %v849, %v839
        %v1160 = vpack.c.b16 %v850, %v840
        %v1161 = vpack.c.b16 %v851, %v841
        %v1162 = vpack.c.b16 %v852, %v842
        %v1163 = vpack.c.b16 %v853, %v843
        %v1164 = vpack.c.b16 %v864, %v854
        %v1165 = vpack.c.b16 %v865, %v855
        %v1166 = vpack.c.b16 %v866, %v856
        %v1167 = vpack.c.b16 %v867, %v857
        %v1168 = vpack.c.b16 %v868, %v858
        %v1169 = vpack.c.b16 %v869, %v859
        %v1170 = vpack.c.b16 %v870, %v860
        %v1171 = vpack.c.b16 %v871, %v861
        %v1172 = vpack.c.b16 %v872, %v862
        %v1173 = vpack.c.b16 %v873, %v863
        %v1174 = vpack.c.b16 %v884, %v874
        %v1175 = vpack.c.b16 %v885, %v875
        %v1176 = vpack.c.b16 %v886, %v876
        %v1177 = vpack.c.b16 %v887, %v877
        %v1178 = vpack.c.b16 %v888, %v878
        %v1179 = vpack.c.b16 %v889, %v879
        %v1180 = vpack.c.b16 %v890, %v880
        %v1181 = vpack.c.b16 %v891, %v881
        %v1182 = vpack.c.b16 %v892, %v882
        %v1183 = vpack.c.b16 %v893, %v883
        %v1184 = vpack.c.b16 %v904, %v894
        %v1185 = vpack.c.b16 %v905, %v895
        %v1186 = vpack.c.b16 %v906, %v896
        %v1187 = vpack.c.b16 %v907, %v897
        %v1188 = vpack.c.b16 %v908, %v898
        %v1189 = vpack.c.b16 %v909, %v899
        %v1190 = vpack.c.b16 %v910, %v900
        %v1191 = vpack.c.b16 %v911, %v901
        %v1192 = vpack.c.b16 %v912, %v902
        %v1193 = vpack.c.b16 %v913, %v903
        %v1194 = vpack.c.b16 %v924, %v914
        %v1195 = vpack.c.b16 %v925, %v915
        %v1196 = vpack.c.b16 %v926, %v916
        %v1197 = vpack.c.b16 %v927, %v917
        %v1198 = vpack.c.b16 %v928, %v918
        %v1199 = vpack.c.b16 %v929, %v919
        %v1200 = vpack.c.b16 %v930, %v920
        %v1201 = vpack.c.b16 %v931, %v921
        %v1202 = vpack.c.b16 %v932, %v922
        %v1203 = vpack.c.b16 %v933, %v923
        %v1204 = vpack.c.b16 %v944, %v934
        %v1205 = vpack.c.b16 %v945, %v935
        %v1206 = vpack.c.b16 %v946, %v936
        %v1207 = vpack.c.b16 %v947, %v937
        %v1208 = vpack.c.b16 %v948, %v938
        %v1209 = vpack.c.b16 %v949, %v939
        %v1210 = vpack.c.b16 %v950, %v940
        %v1211 = vpack.c.b16 %v951, %v941
        %v1212 = vpack.c.b16 %v952, %v942
        %v1213 = vpack.c.b16 %v953, %v943
        %v1214 = vpack.c.b16 %v964, %v954
        %v1215 = vpack.c.b16 %v965, %v955
        %v1216 = vpack.c.b16 %v966, %v956
        %v1217 = vpack.c.b16 %v967, %v957
        %v1218 = vpack.c.b16 %v968, %v958
        %v1219 = vpack.c.b16 %v969, %v959
        %v1220 = vpack.c.b16 %v970, %v960
        %v1221 = vpack.c.b16 %v971, %v961
        %v1222 = vpack.c.b16 %v972, %v962
        %v1223 = vpack.c.b16 %v973, %v963
        %v1224 = vpack.c.b16 %v984, %v974
        %v1225 = vpack.c.b16 %v985, %v975
        %v1226 = vpack.c.b16 %v986, %v976
        %v1227 = vpack.c.b16 %v987, %v977
        %v1228 = vpack.c.b16 %v988, %v978
        %v1229 = vpack.c.b16 %v989, %v979
        %v1230 = vpack.c.b16 %v990, %v980
        %v1231 = vpack.c.b16 %v991, %v981
        %v1232 = vpack.c.b16 %v992, %v982
        %v1233 = vpack.c.b16 %v993, %v983
        %v1234 = vpack.c.b16 %v1004, %v994
        %v1235 = vpack.c.b16 %v1005, %v995
        %v1236 = vpack.c.b16 %v1006, %v996
        %v1237 = vpack.c.b16 %v1007, %v997
        %v1238 = vpack.c.b16 %v1008, %v998
        %v1239 = vpack.c.b16 %v1009, %v999
        %v1240 = vpack.c.b16 %v1010, %v1000
        %v1241 = vpack.c.b16 %v1011, %v1001
        %v1242 = vpack.c.b16 %v1012, %v1002
        %v1243 = vpack.c.b16 %v1013, %v1003
        %v1244 = vpack.c.b16 %v1024, %v1014
        %v1245 = vpack.c.b16 %v1025, %v1015
        %v1246 = vpack.c.b16 %v1026, %v1016
        %v1247 = vpack.c.b16 %v1027, %v1017
        %v1248 = vpack.c.b16 %v1028, %v1018
        %v1249 = vpack.c.b16 %v1029, %v1019
        %v1250 = vpack.c.b16 %v1030, %v1020
        %v1251 = vpack.c.b16 %v1031, %v1021
        %v1252 = vpack.c.b16 %v1032, %v1022
        %v1253 = vpack.c.b16 %v1033, %v1023
        %v1254 = vpack.c.b16 %v1044, %v1034
        %v1255 = vpack.c.b16 %v1045, %v1035
        %v1256 = vpack.c.b16 %v1046, %v1036
        %v1257 = vpack.c.b16 %v1047, %v1037
        %v1258 = vpack.c.b16 %v1048, %v1038
        %v1259 = vpack.c.b16 %v1049, %v1039
        %v1260 = vpack.c.b16 %v1050, %v1040
        %v1261 = vpack.c.b16 %v1051, %v1041
        %v1262 = vpack.c.b16 %v1052, %v1042
        %v1263 = vpack.c.b16 %v1053, %v1043
        %v1264 = vpack.c.b16 %v1064, %v1054
        %v1265 = vpack.c.b16 %v1065, %v1055
        %v1266 = vpack.c.b16 %v1066, %v1056
        %v1267 = vpack.c.b16 %v1067, %v1057
        %v1268 = vpack.c.b16 %v1068, %v1058
        %v1269 = vpack.c.b16 %v1069, %v1059
        %v1270 = vpack.c.b16 %v1070, %v1060
        %v1271 = vpack.c.b16 %v1071, %v1061
        %v1272 = vpack.c.b16 %v1072, %v1062
        %v1273 = vpack.c.b16 %v1073, %v1063
        %v1274 = vpack.c.b16 %v1084, %v1074
        %v1275 = vpack.c.b16 %v1085, %v1075
        %v1276 = vpack.c.b16 %v1086, %v1076
        %v1277 = vpack.c.b16 %v1087, %v1077
        %v1278 = vpack.c.b16 %v1088, %v1078
        %v1279 = vpack.c.b16 %v1089, %v1079
        %v1280 = vpack.c.b16 %v1090, %v1080
        %v1281 = vpack.c.b16 %v1091, %v1081
        %v1282 = vpack.c.b16 %v1092, %v1082
        %v1283 = vpack.c.b16 %v1093, %v1083
        %v1284 = vpack.c.b16 %v1104, %v1094
        %v1285 = vpack.c.b16 %v1105, %v1095
        %v1286 = vpack.c.b16 %v1106, %v1096
        %v1287 = vpack.c.b16 %v1107, %v1097
        %v1288 = vpack.c.b16 %v1108, %v1098
        %v1289 = vpack.c.b16 %v1109, %v1099
        %v1290 = vpack.c.b16 %v1110, %v1100
        %v1291 = vpack.c.b16 %v1111, %v1101
        %v1292 = vpack.c.b16 %v1112, %v1102
        %v1293 = vpack.c.b16 %v1113, %v1103
        %v1294 = vpack.c.b16 %v1124, %v1114
        %v1295 = vpack.c.b16 %v1125, %v1115
        %v1296 = vpack.c.b16 %v1126, %v1116
        %v1297 = vpack.c.b16 %v1127, %v1117
        %v1298 = vpack.c.b16 %v1128, %v1118
        %v1299 = vpack.c.b16 %v1129, %v1119
        %v1300 = vpack.c.b16 %v1130, %v1120
        %v1301 = vpack.c.b16 %v1131, %v1121
        %v1302 = vpack.c.b16 %v1132, %v1122
        %v1303 = vpack.c.b16 %v1133, %v1123
        %v1304 = vpack.c.b16 %v1144, %v1134
        %v1305 = vpack.c.b16 %v1145, %v1135
        %v1306 = vpack.c.b16 %v1146, %v1136
        %v1307 = vpack.c.b16 %v1147, %v1137
        %v1308 = vpack.c.b16 %v1148, %v1138
        %v1309 = vpack.c.b16 %v1149, %v1139
        %v1310 = vpack.c.b16 %v1150, %v1140
        %v1311 = vpack.c.b16 %v1151, %v1141
        %v1312 = vpack.c.b16 %v1152, %v1142
        %v1313 = vpack.c.b16 %v1153, %v1143
        %1474 = vmatpush.bf16.msra.mxu0 %v1224
        %1475 = vmatpush.bf16.msra.mxu0 %v1214
        %1476 = vmatpush.bf16.msra.mxu0 %v1204
        %1477 = vmatpush.bf16.msra.mxu0 %v1194
        %1478 = vmatpush.bf16.msra.mxu0 %v1184
        %1479 = vmatpush.bf16.msra.mxu0 %v1174
        %1480 = vmatpush.bf16.msra.mxu0 %v1164
        %1481 = vmatpush.bf16.msra.mxu0 %v1154
        %1482 = vmatmul.bf16.gmra.mxu0 %v659
        %v1483 = vpop.f32.mrf.mxu0
        %v1484 = vadd.f32 0.0, %v1483
        %v1485 = vpop.f32.mrf.mxu0
        %v1486 = vadd.f32 0.0, %v1485
        %1487 = vdwg.mxu0
        %1488 = vmatpush.bf16.msra.mxu0 %v1304
        %1489 = vmatpush.bf16.msra.mxu0 %v1294
        %1490 = vmatpush.bf16.msra.mxu0 %v1284
        %1491 = vmatpush.bf16.msra.mxu0 %v1274
        %1492 = vmatpush.bf16.msra.mxu0 %v1264
        %1493 = vmatpush.bf16.msra.mxu0 %v1254
        %1494 = vmatpush.bf16.msra.mxu0 %v1244
        %1495 = vmatpush.bf16.msra.mxu0 %v1234
        %1496 = vmatmul.bf16.gmra.mxu0 %v671
        %v1497 = vpop.f32.mrf.mxu0
        %v1498 = vadd.f32 %v1484, %v1497
        %v1499 = vpop.f32.mrf.mxu0
        %v1500 = vadd.f32 %v1486, %v1499
        %1501 = vdwg.mxu0
        %1502 = vmatpush.bf16.msra.mxu0 %v1225
        %1503 = vmatpush.bf16.msra.mxu0 %v1215
        %1504 = vmatpush.bf16.msra.mxu0 %v1205
        %1505 = vmatpush.bf16.msra.mxu0 %v1195
        %1506 = vmatpush.bf16.msra.mxu0 %v1185
        %1507 = vmatpush.bf16.msra.mxu0 %v1175
        %1508 = vmatpush.bf16.msra.mxu0 %v1165
        %1509 = vmatpush.bf16.msra.mxu0 %v1155
        %1510 = vmatmul.bf16.gmra.mxu0 %v659
        %v1511 = vpop.f32.mrf.mxu0
        %v1512 = vadd.f32 0.0, %v1511
        %v1513 = vpop.f32.mrf.mxu0
        %v1514 = vadd.f32 0.0, %v1513
        %1515 = vdwg.mxu0
        %1516 = vmatpush.bf16.msra.mxu0 %v1305
        %1517 = vmatpush.bf16.msra.mxu0 %v1295
        %1518 = vmatpush.bf16.msra.mxu0 %v1285
        %1519 = vmatpush.bf16.msra.mxu0 %v1275
        %1520 = vmatpush.bf16.msra.mxu0 %v1265
        %1521 = vmatpush.bf16.msra.mxu0 %v1255
        %1522 = vmatpush.bf16.msra.mxu0 %v1245
        %1523 = vmatpush.bf16.msra.mxu0 %v1235
        %1524 = vmatmul.bf16.gmra.mxu0 %v671
        %v1525 = vpop.f32.mrf.mxu0
        %v1526 = vadd.f32 %v1512, %v1525
        %v1527 = vpop.f32.mrf.mxu0
        %v1528 = vadd.f32 %v1514, %v1527
        %1529 = vdwg.mxu0
        %1530 = vmatpush.bf16.msra.mxu0 %v1226
        %1531 = vmatpush.bf16.msra.mxu0 %v1216
        %1532 = vmatpush.bf16.msra.mxu0 %v1206
        %1533 = vmatpush.bf16.msra.mxu0 %v1196
        %1534 = vmatpush.bf16.msra.mxu0 %v1186
        %1535 = vmatpush.bf16.msra.mxu0 %v1176
        %1536 = vmatpush.bf16.msra.mxu0 %v1166
        %1537 = vmatpush.bf16.msra.mxu0 %v1156
        %1538 = vmatmul.bf16.gmra.mxu0 %v659
        %v1539 = vpop.f32.mrf.mxu0
        %v1540 = vadd.f32 0.0, %v1539
        %v1541 = vpop.f32.mrf.mxu0
        %v1542 = vadd.f32 0.0, %v1541
        %1543 = vdwg.mxu0
        %1544 = vmatpush.bf16.msra.mxu0 %v1306
        %1545 = vmatpush.bf16.msra.mxu0 %v1296
        %1546 = vmatpush.bf16.msra.mxu0 %v1286
        %1547 = vmatpush.bf16.msra.mxu0 %v1276
        %1548 = vmatpush.bf16.msra.mxu0 %v1266
        %1549 = vmatpush.bf16.msra.mxu0 %v1256
        %1550 = vmatpush.bf16.msra.mxu0 %v1246
        %1551 = vmatpush.bf16.msra.mxu0 %v1236
        %1552 = vmatmul.bf16.gmra.mxu0 %v671
        %v1553 = vpop.f32.mrf.mxu0
        %v1554 = vadd.f32 %v1540, %v1553
        %v1555 = vpop.f32.mrf.mxu0
        %v1556 = vadd.f32 %v1542, %v1555
        %1557 = vdwg.mxu0
        %1558 = vmatpush.bf16.msra.mxu0 %v1227
        %1559 = vmatpush.bf16.msra.mxu0 %v1217
        %1560 = vmatpush.bf16.msra.mxu0 %v1207
        %1561 = vmatpush.bf16.msra.mxu0 %v1197
        %1562 = vmatpush.bf16.msra.mxu0 %v1187
        %1563 = vmatpush.bf16.msra.mxu0 %v1177
        %1564 = vmatpush.bf16.msra.mxu0 %v1167
        %1565 = vmatpush.bf16.msra.mxu0 %v1157
        %1566 = vmatmul.bf16.gmra.mxu0 %v659
        %v1567 = vpop.f32.mrf.mxu0
        %v1568 = vadd.f32 0.0, %v1567
        %v1569 = vpop.f32.mrf.mxu0
        %v1570 = vadd.f32 0.0, %v1569
        %1571 = vdwg.mxu0
        %1572 = vmatpush.bf16.msra.mxu0 %v1307
        %1573 = vmatpush.bf16.msra.mxu0 %v1297
        %1574 = vmatpush.bf16.msra.mxu0 %v1287
        %1575 = vmatpush.bf16.msra.mxu0 %v1277
        %1576 = vmatpush.bf16.msra.mxu0 %v1267
        %1577 = vmatpush.bf16.msra.mxu0 %v1257
        %1578 = vmatpush.bf16.msra.mxu0 %v1247
        %1579 = vmatpush.bf16.msra.mxu0 %v1237
        %1580 = vmatmul.bf16.gmra.mxu0 %v671
        %v1581 = vpop.f32.mrf.mxu0
        %v1582 = vadd.f32 %v1568, %v1581
        %v1583 = vpop.f32.mrf.mxu0
        %v1584 = vadd.f32 %v1570, %v1583
        %1585 = vdwg.mxu0
        %1586 = vmatpush.bf16.msra.mxu0 %v1228
        %1587 = vmatpush.bf16.msra.mxu0 %v1218
        %1588 = vmatpush.bf16.msra.mxu0 %v1208
        %1589 = vmatpush.bf16.msra.mxu0 %v1198
        %1590 = vmatpush.bf16.msra.mxu0 %v1188
        %1591 = vmatpush.bf16.msra.mxu0 %v1178
        %1592 = vmatpush.bf16.msra.mxu0 %v1168
        %1593 = vmatpush.bf16.msra.mxu0 %v1158
        %1594 = vmatmul.bf16.gmra.mxu0 %v659
        %v1595 = vpop.f32.mrf.mxu0
        %v1596 = vadd.f32 0.0, %v1595
        %v1597 = vpop.f32.mrf.mxu0
        %v1598 = vadd.f32 0.0, %v1597
        %1599 = vdwg.mxu0
        %1600 = vmatpush.bf16.msra.mxu0 %v1308
        %1601 = vmatpush.bf16.msra.mxu0 %v1298
        %1602 = vmatpush.bf16.msra.mxu0 %v1288
        %1603 = vmatpush.bf16.msra.mxu0 %v1278
        %1604 = vmatpush.bf16.msra.mxu0 %v1268
        %1605 = vmatpush.bf16.msra.mxu0 %v1258
        %1606 = vmatpush.bf16.msra.mxu0 %v1248
        %1607 = vmatpush.bf16.msra.mxu0 %v1238
        %1608 = vmatmul.bf16.gmra.mxu0 %v671
        %v1609 = vpop.f32.mrf.mxu0
        %v1610 = vadd.f32 %v1596, %v1609
        %v1611 = vpop.f32.mrf.mxu0
        %v1612 = vadd.f32 %v1598, %v1611
        %1613 = vdwg.mxu0
        %1614 = vmatpush.bf16.msra.mxu0 %v1229
        %1615 = vmatpush.bf16.msra.mxu0 %v1219
        %1616 = vmatpush.bf16.msra.mxu0 %v1209
        %1617 = vmatpush.bf16.msra.mxu0 %v1199
        %1618 = vmatpush.bf16.msra.mxu0 %v1189
        %1619 = vmatpush.bf16.msra.mxu0 %v1179
        %1620 = vmatpush.bf16.msra.mxu0 %v1169
        %1621 = vmatpush.bf16.msra.mxu0 %v1159
        %1622 = vmatmul.bf16.gmra.mxu0 %v659
        %v1623 = vpop.f32.mrf.mxu0
        %v1624 = vadd.f32 0.0, %v1623
        %v1625 = vpop.f32.mrf.mxu0
        %v1626 = vadd.f32 0.0, %v1625
        %1627 = vdwg.mxu0
        %1628 = vmatpush.bf16.msra.mxu0 %v1309
        %1629 = vmatpush.bf16.msra.mxu0 %v1299
        %1630 = vmatpush.bf16.msra.mxu0 %v1289
        %1631 = vmatpush.bf16.msra.mxu0 %v1279
        %1632 = vmatpush.bf16.msra.mxu0 %v1269
        %1633 = vmatpush.bf16.msra.mxu0 %v1259
        %1634 = vmatpush.bf16.msra.mxu0 %v1249
        %1635 = vmatpush.bf16.msra.mxu0 %v1239
        %1636 = vmatmul.bf16.gmra.mxu0 %v671
        %v1637 = vpop.f32.mrf.mxu0
        %v1638 = vadd.f32 %v1624, %v1637
        %v1639 = vpop.f32.mrf.mxu0
        %v1640 = vadd.f32 %v1626, %v1639
        %1641 = vdwg.mxu0
        %1642 = vmatpush.bf16.msra.mxu0 %v1230
        %1643 = vmatpush.bf16.msra.mxu0 %v1220
        %1644 = vmatpush.bf16.msra.mxu0 %v1210
        %1645 = vmatpush.bf16.msra.mxu0 %v1200
        %1646 = vmatpush.bf16.msra.mxu0 %v1190
        %1647 = vmatpush.bf16.msra.mxu0 %v1180
        %1648 = vmatpush.bf16.msra.mxu0 %v1170
        %1649 = vmatpush.bf16.msra.mxu0 %v1160
        %1650 = vmatmul.bf16.gmra.mxu0 %v659
        %v1651 = vpop.f32.mrf.mxu0
        %v1652 = vadd.f32 0.0, %v1651
        %v1653 = vpop.f32.mrf.mxu0
        %v1654 = vadd.f32 0.0, %v1653
        %1655 = vdwg.mxu0
        %1656 = vmatpush.bf16.msra.mxu0 %v1310
        %1657 = vmatpush.bf16.msra.mxu0 %v1300
        %1658 = vmatpush.bf16.msra.mxu0 %v1290
        %1659 = vmatpush.bf16.msra.mxu0 %v1280
        %1660 = vmatpush.bf16.msra.mxu0 %v1270
        %1661 = vmatpush.bf16.msra.mxu0 %v1260
        %1662 = vmatpush.bf16.msra.mxu0 %v1250
        %1663 = vmatpush.bf16.msra.mxu0 %v1240
        %1664 = vmatmul.bf16.gmra.mxu0 %v671
        %v1665 = vpop.f32.mrf.mxu0
        %v1666 = vadd.f32 %v1652, %v1665
        %v1667 = vpop.f32.mrf.mxu0
        %v1668 = vadd.f32 %v1654, %v1667
        %1669 = vdwg.mxu0
        %1670 = vmatpush.bf16.msra.mxu0 %v1231
        %1671 = vmatpush.bf16.msra.mxu0 %v1221
        %1672 = vmatpush.bf16.msra.mxu0 %v1211
        %1673 = vmatpush.bf16.msra.mxu0 %v1201
        %1674 = vmatpush.bf16.msra.mxu0 %v1191
        %1675 = vmatpush.bf16.msra.mxu0 %v1181
        %1676 = vmatpush.bf16.msra.mxu0 %v1171
        %1677 = vmatpush.bf16.msra.mxu0 %v1161
        %1678 = vmatmul.bf16.gmra.mxu0 %v659
        %v1679 = vpop.f32.mrf.mxu0
        %v1680 = vadd.f32 0.0, %v1679
        %v1681 = vpop.f32.mrf.mxu0
        %v1682 = vadd.f32 0.0, %v1681
        %1683 = vdwg.mxu0
        %1684 = vmatpush.bf16.msra.mxu0 %v1311
        %1685 = vmatpush.bf16.msra.mxu0 %v1301
        %1686 = vmatpush.bf16.msra.mxu0 %v1291
        %1687 = vmatpush.bf16.msra.mxu0 %v1281
        %1688 = vmatpush.bf16.msra.mxu0 %v1271
        %1689 = vmatpush.bf16.msra.mxu0 %v1261
        %1690 = vmatpush.bf16.msra.mxu0 %v1251
        %1691 = vmatpush.bf16.msra.mxu0 %v1241
        %1692 = vmatmul.bf16.gmra.mxu0 %v671
        %v1693 = vpop.f32.mrf.mxu0
        %v1694 = vadd.f32 %v1680, %v1693
        %v1695 = vpop.f32.mrf.mxu0
        %v1696 = vadd.f32 %v1682, %v1695
        %1697 = vdwg.mxu0
        %1698 = vmatpush.bf16.msra.mxu0 %v1232
        %1699 = vmatpush.bf16.msra.mxu0 %v1222
        %1700 = vmatpush.bf16.msra.mxu0 %v1212
        %1701 = vmatpush.bf16.msra.mxu0 %v1202
        %1702 = vmatpush.bf16.msra.mxu0 %v1192
        %1703 = vmatpush.bf16.msra.mxu0 %v1182
        %1704 = vmatpush.bf16.msra.mxu0 %v1172
        %1705 = vmatpush.bf16.msra.mxu0 %v1162
        %1706 = vmatmul.bf16.gmra.mxu0 %v659
        %v1707 = vpop.f32.mrf.mxu0
        %v1708 = vadd.f32 0.0, %v1707
        %v1709 = vpop.f32.mrf.mxu0
        %v1710 = vadd.f32 0.0, %v1709
        %1711 = vdwg.mxu0
        %1712 = vmatpush.bf16.msra.mxu0 %v1312
        %1713 = vmatpush.bf16.msra.mxu0 %v1302
        %1714 = vmatpush.bf16.msra.mxu0 %v1292
        %1715 = vmatpush.bf16.msra.mxu0 %v1282
        %1716 = vmatpush.bf16.msra.mxu0 %v1272
        %1717 = vmatpush.bf16.msra.mxu0 %v1262
        %1718 = vmatpush.bf16.msra.mxu0 %v1252
        %1719 = vmatpush.bf16.msra.mxu0 %v1242
        %1720 = vmatmul.bf16.gmra.mxu0 %v671
        %v1721 = vpop.f32.mrf.mxu0
        %v1722 = vadd.f32 %v1708, %v1721
        %v1723 = vpop.f32.mrf.mxu0
        %v1724 = vadd.f32 %v1710, %v1723
        %1725 = vdwg.mxu0
        %1726 = vmatpush.bf16.msra.mxu0 %v1233
        %1727 = vmatpush.bf16.msra.mxu0 %v1223
        %1728 = vmatpush.bf16.msra.mxu0 %v1213
        %1729 = vmatpush.bf16.msra.mxu0 %v1203
        %1730 = vmatpush.bf16.msra.mxu0 %v1193
        %1731 = vmatpush.bf16.msra.mxu0 %v1183
        %1732 = vmatpush.bf16.msra.mxu0 %v1173
        %1733 = vmatpush.bf16.msra.mxu0 %v1163
        %1734 = vmatmul.bf16.gmra.mxu0 %v659
        %v1735 = vpop.f32.mrf.mxu0
        %v1736 = vadd.f32 0.0, %v1735
        %v1737 = vpop.f32.mrf.mxu0
        %v1738 = vadd.f32 0.0, %v1737
        %1739 = vdwg.mxu0
        %1740 = vmatpush.bf16.msra.mxu0 %v1313
        %1741 = vmatpush.bf16.msra.mxu0 %v1303
        %1742 = vmatpush.bf16.msra.mxu0 %v1293
        %1743 = vmatpush.bf16.msra.mxu0 %v1283
        %1744 = vmatpush.bf16.msra.mxu0 %v1273
        %1745 = vmatpush.bf16.msra.mxu0 %v1263
        %1746 = vmatpush.bf16.msra.mxu0 %v1253
        %1747 = vmatpush.bf16.msra.mxu0 %v1243
        %1748 = vmatmul.bf16.gmra.mxu0 %v671
        %v1749 = vpop.f32.mrf.mxu0
        %v1750 = vadd.f32 %v1736, %v1749
        %v1751 = vpop.f32.mrf.mxu0
        %v1752 = vadd.f32 %v1738, %v1751
        %1753 = vdwg.mxu0
        %v1914 = vunpack.c.l.b16 %v325
        %v1915 = vunpack.c.h.b16 %v325
        %v1916 = vunpack.c.l.b16 %v326
        %v1917 = vunpack.c.h.b16 %v326
        %v1918 = vunpack.c.l.b16 %v327
        %v1919 = vunpack.c.h.b16 %v327
        %v1920 = vunpack.c.l.b16 %v328
        %v1921 = vunpack.c.h.b16 %v328
        %v1922 = vunpack.c.l.b16 %v329
        %v1923 = vunpack.c.h.b16 %v329
        %v1924 = vunpack.c.l.b16 %v330
        %v1925 = vunpack.c.h.b16 %v330
        %v1926 = vunpack.c.l.b16 %v331
        %v1927 = vunpack.c.h.b16 %v331
        %v1928 = vunpack.c.l.b16 %v332
        %v1929 = vunpack.c.h.b16 %v332
        %v1930 = vunpack.c.l.b16 %v333
        %v1931 = vunpack.c.h.b16 %v333
        %v1932 = vunpack.c.l.b16 %v334
        %v1933 = vunpack.c.h.b16 %v334
        %v1934 = vunpack.c.l.b16 %v335
        %v1935 = vunpack.c.h.b16 %v335
        %v1936 = vunpack.c.l.b16 %v336
        %v1937 = vunpack.c.h.b16 %v336
        %v1938 = vunpack.c.l.b16 %v337
        %v1939 = vunpack.c.h.b16 %v337
        %v1940 = vunpack.c.l.b16 %v338
        %v1941 = vunpack.c.h.b16 %v338
        %v1942 = vunpack.c.l.b16 %v339
        %v1943 = vunpack.c.h.b16 %v339
        %v1944 = vunpack.c.l.b16 %v340
        %v1945 = vunpack.c.h.b16 %v340
        %v1946 = vunpack.c.l.b16 %v341
        %v1947 = vunpack.c.h.b16 %v341
        %v1948 = vunpack.c.l.b16 %v342
        %v1949 = vunpack.c.h.b16 %v342
        %v1950 = vunpack.c.l.b16 %v343
        %v1951 = vunpack.c.h.b16 %v343
        %v1952 = vunpack.c.l.b16 %v344
        %v1953 = vunpack.c.h.b16 %v344
        %v1954 = vunpack.c.l.b16 %v345
        %v1955 = vunpack.c.h.b16 %v345
        %v1956 = vunpack.c.l.b16 %v346
        %v1957 = vunpack.c.h.b16 %v346
        %v1958 = vunpack.c.l.b16 %v347
        %v1959 = vunpack.c.h.b16 %v347
        %v1960 = vunpack.c.l.b16 %v348
        %v1961 = vunpack.c.h.b16 %v348
        %v1962 = vunpack.c.l.b16 %v349
        %v1963 = vunpack.c.h.b16 %v349
        %v1964 = vunpack.c.l.b16 %v350
        %v1965 = vunpack.c.h.b16 %v350
        %v1966 = vunpack.c.l.b16 %v351
        %v1967 = vunpack.c.h.b16 %v351
        %v1968 = vunpack.c.l.b16 %v352
        %v1969 = vunpack.c.h.b16 %v352
        %v1970 = vunpack.c.l.b16 %v353
        %v1971 = vunpack.c.h.b16 %v353
        %v1972 = vunpack.c.l.b16 %v354
        %v1973 = vunpack.c.h.b16 %v354
        %v1974 = vunpack.c.l.b16 %v355
        %v1975 = vunpack.c.h.b16 %v355
        %v1976 = vunpack.c.l.b16 %v356
        %v1977 = vunpack.c.h.b16 %v356
        %v1978 = vunpack.c.l.b16 %v357
        %v1979 = vunpack.c.h.b16 %v357
        %v1980 = vunpack.c.l.b16 %v358
        %v1981 = vunpack.c.h.b16 %v358
        %v1982 = vunpack.c.l.b16 %v359
        %v1983 = vunpack.c.h.b16 %v359
        %v1984 = vunpack.c.l.b16 %v360
        %v1985 = vunpack.c.h.b16 %v360
        %v1986 = vunpack.c.l.b16 %v361
        %v1987 = vunpack.c.h.b16 %v361
        %v1988 = vunpack.c.l.b16 %v362
        %v1989 = vunpack.c.h.b16 %v362
        %v1990 = vunpack.c.l.b16 %v363
        %v1991 = vunpack.c.h.b16 %v363
        %v1992 = vunpack.c.l.b16 %v364
        %v1993 = vunpack.c.h.b16 %v364
        %v1994 = vunpack.c.l.b16 %v365
        %v1995 = vunpack.c.h.b16 %v365
        %v1996 = vunpack.c.l.b16 %v366
        %v1997 = vunpack.c.h.b16 %v366
        %v1998 = vunpack.c.l.b16 %v367
        %v1999 = vunpack.c.h.b16 %v367
        %v2000 = vunpack.c.l.b16 %v368
        %v2001 = vunpack.c.h.b16 %v368
        %v2002 = vunpack.c.l.b16 %v369
        %v2003 = vunpack.c.h.b16 %v369
        %v2004 = vunpack.c.l.b16 %v370
        %v2005 = vunpack.c.h.b16 %v370
        %v2006 = vunpack.c.l.b16 %v371
        %v2007 = vunpack.c.h.b16 %v371
        %v2008 = vunpack.c.l.b16 %v372
        %v2009 = vunpack.c.h.b16 %v372
        %v2010 = vunpack.c.l.b16 %v373
        %v2011 = vunpack.c.h.b16 %v373
        %v2012 = vunpack.c.l.b16 %v374
        %v2013 = vunpack.c.h.b16 %v374
        %v2014 = vunpack.c.l.b16 %v375
        %v2015 = vunpack.c.h.b16 %v375
        %v2016 = vunpack.c.l.b16 %v376
        %v2017 = vunpack.c.h.b16 %v376
        %v2018 = vunpack.c.l.b16 %v377
        %v2019 = vunpack.c.h.b16 %v377
        %v2020 = vunpack.c.l.b16 %v378
        %v2021 = vunpack.c.h.b16 %v378
        %v2022 = vunpack.c.l.b16 %v379
        %v2023 = vunpack.c.h.b16 %v379
        %v2024 = vunpack.c.l.b16 %v380
        %v2025 = vunpack.c.h.b16 %v380
        %v2026 = vunpack.c.l.b16 %v381
        %v2027 = vunpack.c.h.b16 %v381
        %v2028 = vunpack.c.l.b16 %v382
        %v2029 = vunpack.c.h.b16 %v382
        %v2030 = vunpack.c.l.b16 %v383
        %v2031 = vunpack.c.h.b16 %v383
        %v2032 = vunpack.c.l.b16 %v384
        %v2033 = vunpack.c.h.b16 %v384
        %v2034 = vunpack.c.l.b16 %v385
        %v2035 = vunpack.c.h.b16 %v385
        %v2036 = vunpack.c.l.b16 %v386
        %v2037 = vunpack.c.h.b16 %v386
        %v2038 = vunpack.c.l.b16 %v387
        %v2039 = vunpack.c.h.b16 %v387
        %v2040 = vunpack.c.l.b16 %v388
        %v2041 = vunpack.c.h.b16 %v388
        %v2042 = vunpack.c.l.b16 %v389
        %v2043 = vunpack.c.h.b16 %v389
        %v2044 = vunpack.c.l.b16 %v390
        %v2045 = vunpack.c.h.b16 %v390
        %v2046 = vunpack.c.l.b16 %v391
        %v2047 = vunpack.c.h.b16 %v391
        %v2048 = vunpack.c.l.b16 %v392
        %v2049 = vunpack.c.h.b16 %v392
        %v2050 = vunpack.c.l.b16 %v393
        %v2051 = vunpack.c.h.b16 %v393
        %v2052 = vunpack.c.l.b16 %v394
        %v2053 = vunpack.c.h.b16 %v394
        %v2054 = vunpack.c.l.b16 %v395
        %v2055 = vunpack.c.h.b16 %v395
        %v2056 = vunpack.c.l.b16 %v396
        %v2057 = vunpack.c.h.b16 %v396
        %v2058 = vunpack.c.l.b16 %v397
        %v2059 = vunpack.c.h.b16 %v397
        %v2060 = vunpack.c.l.b16 %v398
        %v2061 = vunpack.c.h.b16 %v398
        %v2062 = vunpack.c.l.b16 %v399
        %v2063 = vunpack.c.h.b16 %v399
        %v2064 = vunpack.c.l.b16 %v400
        %v2065 = vunpack.c.h.b16 %v400
        %v2066 = vunpack.c.l.b16 %v401
        %v2067 = vunpack.c.h.b16 %v401
        %v2068 = vunpack.c.l.b16 %v402
        %v2069 = vunpack.c.h.b16 %v402
        %v2070 = vunpack.c.l.b16 %v403
        %v2071 = vunpack.c.h.b16 %v403
        %v2072 = vunpack.c.l.b16 %v404
        %v2073 = vunpack.c.h.b16 %v404
        %v2074 = vunpack.c.l.b16 %v405
        %v2075 = vunpack.c.h.b16 %v405
        %v2076 = vunpack.c.l.b16 %v406
        %v2077 = vunpack.c.h.b16 %v406
        %v2078 = vunpack.c.l.b16 %v407
        %v2079 = vunpack.c.h.b16 %v407
        %v2080 = vunpack.c.l.b16 %v408
        %v2081 = vunpack.c.h.b16 %v408
        %v2082 = vunpack.c.l.b16 %v409
        %v2083 = vunpack.c.h.b16 %v409
        %v2084 = vunpack.c.l.b16 %v410
        %v2085 = vunpack.c.h.b16 %v410
        %v2086 = vunpack.c.l.b16 %v411
        %v2087 = vunpack.c.h.b16 %v411
        %v2088 = vunpack.c.l.b16 %v412
        %v2089 = vunpack.c.h.b16 %v412
        %v2090 = vunpack.c.l.b16 %v413
        %v2091 = vunpack.c.h.b16 %v413
        %v2092 = vunpack.c.l.b16 %v414
        %v2093 = vunpack.c.h.b16 %v414
        %v2094 = vunpack.c.l.b16 %v415
        %v2095 = vunpack.c.h.b16 %v415
        %v2096 = vunpack.c.l.b16 %v416
        %v2097 = vunpack.c.h.b16 %v416
        %v2098 = vunpack.c.l.b16 %v417
        %v2099 = vunpack.c.h.b16 %v417
        %v2100 = vunpack.c.l.b16 %v418
        %v2101 = vunpack.c.h.b16 %v418
        %v2102 = vunpack.c.l.b16 %v419
        %v2103 = vunpack.c.h.b16 %v419
        %v2104 = vunpack.c.l.b16 %v420
        %v2105 = vunpack.c.h.b16 %v420
        %v2106 = vunpack.c.l.b16 %v421
        %v2107 = vunpack.c.h.b16 %v421
        %v2108 = vunpack.c.l.b16 %v422
        %v2109 = vunpack.c.h.b16 %v422
        %v2110 = vunpack.c.l.b16 %v423
        %v2111 = vunpack.c.h.b16 %v423
        %v2112 = vunpack.c.l.b16 %v424
        %v2113 = vunpack.c.h.b16 %v424
        %v2114 = vunpack.c.l.b16 %v425
        %v2115 = vunpack.c.h.b16 %v425
        %v2116 = vunpack.c.l.b16 %v426
        %v2117 = vunpack.c.h.b16 %v426
        %v2118 = vunpack.c.l.b16 %v427
        %v2119 = vunpack.c.h.b16 %v427
        %v2120 = vunpack.c.l.b16 %v428
        %v2121 = vunpack.c.h.b16 %v428
        %v2122 = vunpack.c.l.b16 %v429
        %v2123 = vunpack.c.h.b16 %v429
        %v2124 = vunpack.c.l.b16 %v430
        %v2125 = vunpack.c.h.b16 %v430
        %v2126 = vunpack.c.l.b16 %v431
        %v2127 = vunpack.c.h.b16 %v431
        %v2128 = vunpack.c.l.b16 %v432
        %v2129 = vunpack.c.h.b16 %v432
        %v2130 = vunpack.c.l.b16 %v433
        %v2131 = vunpack.c.h.b16 %v433
        %v2132 = vunpack.c.l.b16 %v434
        %v2133 = vunpack.c.h.b16 %v434
        %v2134 = vunpack.c.l.b16 %v435
        %v2135 = vunpack.c.h.b16 %v435
        %v2136 = vunpack.c.l.b16 %v436
        %v2137 = vunpack.c.h.b16 %v436
        %v2138 = vunpack.c.l.b16 %v437
        %v2139 = vunpack.c.h.b16 %v437
        %v2140 = vunpack.c.l.b16 %v438
        %v2141 = vunpack.c.h.b16 %v438
        %v2142 = vunpack.c.l.b16 %v439
        %v2143 = vunpack.c.h.b16 %v439
        %v2144 = vunpack.c.l.b16 %v440
        %v2145 = vunpack.c.h.b16 %v440
        %v2146 = vunpack.c.l.b16 %v441
        %v2147 = vunpack.c.h.b16 %v441
        %v2148 = vunpack.c.l.b16 %v442
        %v2149 = vunpack.c.h.b16 %v442
        %v2150 = vunpack.c.l.b16 %v443
        %v2151 = vunpack.c.h.b16 %v443
        %v2152 = vunpack.c.l.b16 %v444
        %v2153 = vunpack.c.h.b16 %v444
        %v2154 = vunpack.c.l.b16 %v445
        %v2155 = vunpack.c.h.b16 %v445
        %v2156 = vunpack.c.l.b16 %v446
        %v2157 = vunpack.c.h.b16 %v446
        %v2158 = vunpack.c.l.b16 %v447
        %v2159 = vunpack.c.h.b16 %v447
        %v2160 = vunpack.c.l.b16 %v448
        %v2161 = vunpack.c.h.b16 %v448
        %v2162 = vunpack.c.l.b16 %v449
        %v2163 = vunpack.c.h.b16 %v449
        %v2164 = vunpack.c.l.b16 %v450
        %v2165 = vunpack.c.h.b16 %v450
        %v2166 = vunpack.c.l.b16 %v451
        %v2167 = vunpack.c.h.b16 %v451
        %v2168 = vunpack.c.l.b16 %v452
        %v2169 = vunpack.c.h.b16 %v452
        %v2170 = vunpack.c.l.b16 %v453
        %v2171 = vunpack.c.h.b16 %v453
        %v2172 = vunpack.c.l.b16 %v454
        %v2173 = vunpack.c.h.b16 %v454
        %v2174 = vunpack.c.l.b16 %v455
        %v2175 = vunpack.c.h.b16 %v455
        %v2176 = vunpack.c.l.b16 %v456
        %v2177 = vunpack.c.h.b16 %v456
        %v2178 = vunpack.c.l.b16 %v457
        %v2179 = vunpack.c.h.b16 %v457
        %v2180 = vunpack.c.l.b16 %v458
        %v2181 = vunpack.c.h.b16 %v458
        %v2182 = vunpack.c.l.b16 %v459
        %v2183 = vunpack.c.h.b16 %v459
        %v2184 = vunpack.c.l.b16 %v460
        %v2185 = vunpack.c.h.b16 %v460
        %v2186 = vunpack.c.l.b16 %v461
        %v2187 = vunpack.c.h.b16 %v461
        %v2188 = vunpack.c.l.b16 %v462
        %v2189 = vunpack.c.h.b16 %v462
        %v2190 = vunpack.c.l.b16 %v463
        %v2191 = vunpack.c.h.b16 %v463
        %v2192 = vunpack.c.l.b16 %v464
        %v2193 = vunpack.c.h.b16 %v464
        %v2194 = vunpack.c.l.b16 %v465
        %v2195 = vunpack.c.h.b16 %v465
        %v2196 = vunpack.c.l.b16 %v466
        %v2197 = vunpack.c.h.b16 %v466
        %v2198 = vunpack.c.l.b16 %v467
        %v2199 = vunpack.c.h.b16 %v467
        %v2200 = vunpack.c.l.b16 %v468
        %v2201 = vunpack.c.h.b16 %v468
        %v2202 = vunpack.c.l.b16 %v469
        %v2203 = vunpack.c.h.b16 %v469
        %v2204 = vunpack.c.l.b16 %v470
        %v2205 = vunpack.c.h.b16 %v470
        %v2206 = vunpack.c.l.b16 %v471
        %v2207 = vunpack.c.h.b16 %v471
        %v2208 = vunpack.c.l.b16 %v472
        %v2209 = vunpack.c.h.b16 %v472
        %v2210 = vunpack.c.l.b16 %v473
        %v2211 = vunpack.c.h.b16 %v473
        %v2212 = vunpack.c.l.b16 %v474
        %v2213 = vunpack.c.h.b16 %v474
        %v2214 = vunpack.c.l.b16 %v475
        %v2215 = vunpack.c.h.b16 %v475
        %v2216 = vunpack.c.l.b16 %v476
        %v2217 = vunpack.c.h.b16 %v476
        %v2218 = vunpack.c.l.b16 %v477
        %v2219 = vunpack.c.h.b16 %v477
        %v2220 = vunpack.c.l.b16 %v478
        %v2221 = vunpack.c.h.b16 %v478
        %v2222 = vunpack.c.l.b16 %v479
        %v2223 = vunpack.c.h.b16 %v479
        %v2224 = vunpack.c.l.b16 %v480
        %v2225 = vunpack.c.h.b16 %v480
        %v2226 = vunpack.c.l.b16 %v481
        %v2227 = vunpack.c.h.b16 %v481
        %v2228 = vunpack.c.l.b16 %v482
        %v2229 = vunpack.c.h.b16 %v482
        %v2230 = vunpack.c.l.b16 %v483
        %v2231 = vunpack.c.h.b16 %v483
        %v2232 = vunpack.c.l.b16 %v484
        %v2233 = vunpack.c.h.b16 %v484
        %v2234 = vpack.c.b16 %v1924, %v1914
        %v2235 = vpack.c.b16 %v1925, %v1915
        %v2236 = vpack.c.b16 %v1926, %v1916
        %v2237 = vpack.c.b16 %v1927, %v1917
        %v2238 = vpack.c.b16 %v1928, %v1918
        %v2239 = vpack.c.b16 %v1929, %v1919
        %v2240 = vpack.c.b16 %v1930, %v1920
        %v2241 = vpack.c.b16 %v1931, %v1921
        %v2242 = vpack.c.b16 %v1932, %v1922
        %v2243 = vpack.c.b16 %v1933, %v1923
        %v2244 = vpack.c.b16 %v1944, %v1934
        %v2245 = vpack.c.b16 %v1945, %v1935
        %v2246 = vpack.c.b16 %v1946, %v1936
        %v2247 = vpack.c.b16 %v1947, %v1937
        %v2248 = vpack.c.b16 %v1948, %v1938
        %v2249 = vpack.c.b16 %v1949, %v1939
        %v2250 = vpack.c.b16 %v1950, %v1940
        %v2251 = vpack.c.b16 %v1951, %v1941
        %v2252 = vpack.c.b16 %v1952, %v1942
        %v2253 = vpack.c.b16 %v1953, %v1943
        %v2254 = vpack.c.b16 %v1964, %v1954
        %v2255 = vpack.c.b16 %v1965, %v1955
        %v2256 = vpack.c.b16 %v1966, %v1956
        %v2257 = vpack.c.b16 %v1967, %v1957
        %v2258 = vpack.c.b16 %v1968, %v1958
        %v2259 = vpack.c.b16 %v1969, %v1959
        %v2260 = vpack.c.b16 %v1970, %v1960
        %v2261 = vpack.c.b16 %v1971, %v1961
        %v2262 = vpack.c.b16 %v1972, %v1962
        %v2263 = vpack.c.b16 %v1973, %v1963
        %v2264 = vpack.c.b16 %v1984, %v1974
        %v2265 = vpack.c.b16 %v1985, %v1975
        %v2266 = vpack.c.b16 %v1986, %v1976
        %v2267 = vpack.c.b16 %v1987, %v1977
        %v2268 = vpack.c.b16 %v1988, %v1978
        %v2269 = vpack.c.b16 %v1989, %v1979
        %v2270 = vpack.c.b16 %v1990, %v1980
        %v2271 = vpack.c.b16 %v1991, %v1981
        %v2272 = vpack.c.b16 %v1992, %v1982
        %v2273 = vpack.c.b16 %v1993, %v1983
        %v2274 = vpack.c.b16 %v2004, %v1994
        %v2275 = vpack.c.b16 %v2005, %v1995
        %v2276 = vpack.c.b16 %v2006, %v1996
        %v2277 = vpack.c.b16 %v2007, %v1997
        %v2278 = vpack.c.b16 %v2008, %v1998
        %v2279 = vpack.c.b16 %v2009, %v1999
        %v2280 = vpack.c.b16 %v2010, %v2000
        %v2281 = vpack.c.b16 %v2011, %v2001
        %v2282 = vpack.c.b16 %v2012, %v2002
        %v2283 = vpack.c.b16 %v2013, %v2003
        %v2284 = vpack.c.b16 %v2024, %v2014
        %v2285 = vpack.c.b16 %v2025, %v2015
        %v2286 = vpack.c.b16 %v2026, %v2016
        %v2287 = vpack.c.b16 %v2027, %v2017
        %v2288 = vpack.c.b16 %v2028, %v2018
        %v2289 = vpack.c.b16 %v2029, %v2019
        %v2290 = vpack.c.b16 %v2030, %v2020
        %v2291 = vpack.c.b16 %v2031, %v2021
        %v2292 = vpack.c.b16 %v2032, %v2022
        %v2293 = vpack.c.b16 %v2033, %v2023
        %v2294 = vpack.c.b16 %v2044, %v2034
        %v2295 = vpack.c.b16 %v2045, %v2035
        %v2296 = vpack.c.b16 %v2046, %v2036
        %v2297 = vpack.c.b16 %v2047, %v2037
        %v2298 = vpack.c.b16 %v2048, %v2038
        %v2299 = vpack.c.b16 %v2049, %v2039
        %v2300 = vpack.c.b16 %v2050, %v2040
        %v2301 = vpack.c.b16 %v2051, %v2041
        %v2302 = vpack.c.b16 %v2052, %v2042
        %v2303 = vpack.c.b16 %v2053, %v2043
        %v2304 = vpack.c.b16 %v2064, %v2054
        %v2305 = vpack.c.b16 %v2065, %v2055
        %v2306 = vpack.c.b16 %v2066, %v2056
        %v2307 = vpack.c.b16 %v2067, %v2057
        %v2308 = vpack.c.b16 %v2068, %v2058
        %v2309 = vpack.c.b16 %v2069, %v2059
        %v2310 = vpack.c.b16 %v2070, %v2060
        %v2311 = vpack.c.b16 %v2071, %v2061
        %v2312 = vpack.c.b16 %v2072, %v2062
        %v2313 = vpack.c.b16 %v2073, %v2063
        %v2314 = vpack.c.b16 %v2084, %v2074
        %v2315 = vpack.c.b16 %v2085, %v2075
        %v2316 = vpack.c.b16 %v2086, %v2076
        %v2317 = vpack.c.b16 %v2087, %v2077
        %v2318 = vpack.c.b16 %v2088, %v2078
        %v2319 = vpack.c.b16 %v2089, %v2079
        %v2320 = vpack.c.b16 %v2090, %v2080
        %v2321 = vpack.c.b16 %v2091, %v2081
        %v2322 = vpack.c.b16 %v2092, %v2082
        %v2323 = vpack.c.b16 %v2093, %v2083
        %v2324 = vpack.c.b16 %v2104, %v2094
        %v2325 = vpack.c.b16 %v2105, %v2095
        %v2326 = vpack.c.b16 %v2106, %v2096
        %v2327 = vpack.c.b16 %v2107, %v2097
        %v2328 = vpack.c.b16 %v2108, %v2098
        %v2329 = vpack.c.b16 %v2109, %v2099
        %v2330 = vpack.c.b16 %v2110, %v2100
        %v2331 = vpack.c.b16 %v2111, %v2101
        %v2332 = vpack.c.b16 %v2112, %v2102
        %v2333 = vpack.c.b16 %v2113, %v2103
        %v2334 = vpack.c.b16 %v2124, %v2114
        %v2335 = vpack.c.b16 %v2125, %v2115
        %v2336 = vpack.c.b16 %v2126, %v2116
        %v2337 = vpack.c.b16 %v2127, %v2117
        %v2338 = vpack.c.b16 %v2128, %v2118
        %v2339 = vpack.c.b16 %v2129, %v2119
        %v2340 = vpack.c.b16 %v2130, %v2120
        %v2341 = vpack.c.b16 %v2131, %v2121
        %v2342 = vpack.c.b16 %v2132, %v2122
        %v2343 = vpack.c.b16 %v2133, %v2123
        %v2344 = vpack.c.b16 %v2144, %v2134
        %v2345 = vpack.c.b16 %v2145, %v2135
        %v2346 = vpack.c.b16 %v2146, %v2136
        %v2347 = vpack.c.b16 %v2147, %v2137
        %v2348 = vpack.c.b16 %v2148, %v2138
        %v2349 = vpack.c.b16 %v2149, %v2139
        %v2350 = vpack.c.b16 %v2150, %v2140
        %v2351 = vpack.c.b16 %v2151, %v2141
        %v2352 = vpack.c.b16 %v2152, %v2142
        %v2353 = vpack.c.b16 %v2153, %v2143
        %v2354 = vpack.c.b16 %v2164, %v2154
        %v2355 = vpack.c.b16 %v2165, %v2155
        %v2356 = vpack.c.b16 %v2166, %v2156
        %v2357 = vpack.c.b16 %v2167, %v2157
        %v2358 = vpack.c.b16 %v2168, %v2158
        %v2359 = vpack.c.b16 %v2169, %v2159
        %v2360 = vpack.c.b16 %v2170, %v2160
        %v2361 = vpack.c.b16 %v2171, %v2161
        %v2362 = vpack.c.b16 %v2172, %v2162
        %v2363 = vpack.c.b16 %v2173, %v2163
        %v2364 = vpack.c.b16 %v2184, %v2174
        %v2365 = vpack.c.b16 %v2185, %v2175
        %v2366 = vpack.c.b16 %v2186, %v2176
        %v2367 = vpack.c.b16 %v2187, %v2177
        %v2368 = vpack.c.b16 %v2188, %v2178
        %v2369 = vpack.c.b16 %v2189, %v2179
        %v2370 = vpack.c.b16 %v2190, %v2180
        %v2371 = vpack.c.b16 %v2191, %v2181
        %v2372 = vpack.c.b16 %v2192, %v2182
        %v2373 = vpack.c.b16 %v2193, %v2183
        %v2374 = vpack.c.b16 %v2204, %v2194
        %v2375 = vpack.c.b16 %v2205, %v2195
        %v2376 = vpack.c.b16 %v2206, %v2196
        %v2377 = vpack.c.b16 %v2207, %v2197
        %v2378 = vpack.c.b16 %v2208, %v2198
        %v2379 = vpack.c.b16 %v2209, %v2199
        %v2380 = vpack.c.b16 %v2210, %v2200
        %v2381 = vpack.c.b16 %v2211, %v2201
        %v2382 = vpack.c.b16 %v2212, %v2202
        %v2383 = vpack.c.b16 %v2213, %v2203
        %v2384 = vpack.c.b16 %v2224, %v2214
        %v2385 = vpack.c.b16 %v2225, %v2215
        %v2386 = vpack.c.b16 %v2226, %v2216
        %v2387 = vpack.c.b16 %v2227, %v2217
        %v2388 = vpack.c.b16 %v2228, %v2218
        %v2389 = vpack.c.b16 %v2229, %v2219
        %v2390 = vpack.c.b16 %v2230, %v2220
        %v2391 = vpack.c.b16 %v2231, %v2221
        %v2392 = vpack.c.b16 %v2232, %v2222
        %v2393 = vpack.c.b16 %v2233, %v2223
        %2554 = vmatpush.bf16.msra.mxu0 %v2304
        %2555 = vmatpush.bf16.msra.mxu0 %v2294
        %2556 = vmatpush.bf16.msra.mxu0 %v2284
        %2557 = vmatpush.bf16.msra.mxu0 %v2274
        %2558 = vmatpush.bf16.msra.mxu0 %v2264
        %2559 = vmatpush.bf16.msra.mxu0 %v2254
        %2560 = vmatpush.bf16.msra.mxu0 %v2244
        %2561 = vmatpush.bf16.msra.mxu0 %v2234
        %2562 = vmatmul.bf16.gmra.mxu0 %v323
        %v2563 = vpop.f32.mrf.mxu0
        %v2564 = vadd.f32 %v1498, %v2563
        %v2565 = vpop.f32.mrf.mxu0
        %v2566 = vadd.f32 %v1500, %v2565
        %2567 = vdwg.mxu0
        %2568 = vmatpush.bf16.msra.mxu0 %v2384
        %2569 = vmatpush.bf16.msra.mxu0 %v2374
        %2570 = vmatpush.bf16.msra.mxu0 %v2364
        %2571 = vmatpush.bf16.msra.mxu0 %v2354
        %2572 = vmatpush.bf16.msra.mxu0 %v2344
        %2573 = vmatpush.bf16.msra.mxu0 %v2334
        %2574 = vmatpush.bf16.msra.mxu0 %v2324
        %2575 = vmatpush.bf16.msra.mxu0 %v2314
        %2576 = vmatmul.bf16.gmra.mxu0 %v324
        %v2577 = vpop.f32.mrf.mxu0
        %v2578 = vadd.f32 %v2564, %v2577
        %v2579 = vpop.f32.mrf.mxu0
        %v2580 = vadd.f32 %v2566, %v2579
        %2581 = vdwg.mxu0
        %2582 = vmatpush.bf16.msra.mxu0 %v2305
        %2583 = vmatpush.bf16.msra.mxu0 %v2295
        %2584 = vmatpush.bf16.msra.mxu0 %v2285
        %2585 = vmatpush.bf16.msra.mxu0 %v2275
        %2586 = vmatpush.bf16.msra.mxu0 %v2265
        %2587 = vmatpush.bf16.msra.mxu0 %v2255
        %2588 = vmatpush.bf16.msra.mxu0 %v2245
        %2589 = vmatpush.bf16.msra.mxu0 %v2235
        %2590 = vmatmul.bf16.gmra.mxu0 %v323
        %v2591 = vpop.f32.mrf.mxu0
        %v2592 = vadd.f32 %v1526, %v2591
        %v2593 = vpop.f32.mrf.mxu0
        %v2594 = vadd.f32 %v1528, %v2593
        %2595 = vdwg.mxu0
        %2596 = vmatpush.bf16.msra.mxu0 %v2385
        %2597 = vmatpush.bf16.msra.mxu0 %v2375
        %2598 = vmatpush.bf16.msra.mxu0 %v2365
        %2599 = vmatpush.bf16.msra.mxu0 %v2355
        %2600 = vmatpush.bf16.msra.mxu0 %v2345
        %2601 = vmatpush.bf16.msra.mxu0 %v2335
        %2602 = vmatpush.bf16.msra.mxu0 %v2325
        %2603 = vmatpush.bf16.msra.mxu0 %v2315
        %2604 = vmatmul.bf16.gmra.mxu0 %v324
        %v2605 = vpop.f32.mrf.mxu0
        %v2606 = vadd.f32 %v2592, %v2605
        %v2607 = vpop.f32.mrf.mxu0
        %v2608 = vadd.f32 %v2594, %v2607
        %2609 = vdwg.mxu0
        %2610 = vmatpush.bf16.msra.mxu0 %v2306
        %2611 = vmatpush.bf16.msra.mxu0 %v2296
        %2612 = vmatpush.bf16.msra.mxu0 %v2286
        %2613 = vmatpush.bf16.msra.mxu0 %v2276
        %2614 = vmatpush.bf16.msra.mxu0 %v2266
        %2615 = vmatpush.bf16.msra.mxu0 %v2256
        %2616 = vmatpush.bf16.msra.mxu0 %v2246
        %2617 = vmatpush.bf16.msra.mxu0 %v2236
        %2618 = vmatmul.bf16.gmra.mxu0 %v323
        %v2619 = vpop.f32.mrf.mxu0
        %v2620 = vadd.f32 %v1554, %v2619
        %v2621 = vpop.f32.mrf.mxu0
        %v2622 = vadd.f32 %v1556, %v2621
        %2623 = vdwg.mxu0
        %2624 = vmatpush.bf16.msra.mxu0 %v2386
        %2625 = vmatpush.bf16.msra.mxu0 %v2376
        %2626 = vmatpush.bf16.msra.mxu0 %v2366
        %2627 = vmatpush.bf16.msra.mxu0 %v2356
        %2628 = vmatpush.bf16.msra.mxu0 %v2346
        %2629 = vmatpush.bf16.msra.mxu0 %v2336
        %2630 = vmatpush.bf16.msra.mxu0 %v2326
        %2631 = vmatpush.bf16.msra.mxu0 %v2316
        %2632 = vmatmul.bf16.gmra.mxu0 %v324
        %v2633 = vpop.f32.mrf.mxu0
        %v2634 = vadd.f32 %v2620, %v2633
        %v2635 = vpop.f32.mrf.mxu0
        %v2636 = vadd.f32 %v2622, %v2635
        %2637 = vdwg.mxu0
        %2638 = vmatpush.bf16.msra.mxu0 %v2307
        %2639 = vmatpush.bf16.msra.mxu0 %v2297
        %2640 = vmatpush.bf16.msra.mxu0 %v2287
        %2641 = vmatpush.bf16.msra.mxu0 %v2277
        %2642 = vmatpush.bf16.msra.mxu0 %v2267
        %2643 = vmatpush.bf16.msra.mxu0 %v2257
        %2644 = vmatpush.bf16.msra.mxu0 %v2247
        %2645 = vmatpush.bf16.msra.mxu0 %v2237
        %2646 = vmatmul.bf16.gmra.mxu0 %v323
        %v2647 = vpop.f32.mrf.mxu0
        %v2648 = vadd.f32 %v1582, %v2647
        %v2649 = vpop.f32.mrf.mxu0
        %v2650 = vadd.f32 %v1584, %v2649
        %2651 = vdwg.mxu0
        %2652 = vmatpush.bf16.msra.mxu0 %v2387
        %2653 = vmatpush.bf16.msra.mxu0 %v2377
        %2654 = vmatpush.bf16.msra.mxu0 %v2367
        %2655 = vmatpush.bf16.msra.mxu0 %v2357
        %2656 = vmatpush.bf16.msra.mxu0 %v2347
        %2657 = vmatpush.bf16.msra.mxu0 %v2337
        %2658 = vmatpush.bf16.msra.mxu0 %v2327
        %2659 = vmatpush.bf16.msra.mxu0 %v2317
        %2660 = vmatmul.bf16.gmra.mxu0 %v324
        %v2661 = vpop.f32.mrf.mxu0
        %v2662 = vadd.f32 %v2648, %v2661
        %v2663 = vpop.f32.mrf.mxu0
        %v2664 = vadd.f32 %v2650, %v2663
        %2665 = vdwg.mxu0
        %2666 = vmatpush.bf16.msra.mxu0 %v2308
        %2667 = vmatpush.bf16.msra.mxu0 %v2298
        %2668 = vmatpush.bf16.msra.mxu0 %v2288
        %2669 = vmatpush.bf16.msra.mxu0 %v2278
        %2670 = vmatpush.bf16.msra.mxu0 %v2268
        %2671 = vmatpush.bf16.msra.mxu0 %v2258
        %2672 = vmatpush.bf16.msra.mxu0 %v2248
        %2673 = vmatpush.bf16.msra.mxu0 %v2238
        %2674 = vmatmul.bf16.gmra.mxu0 %v323
        %v2675 = vpop.f32.mrf.mxu0
        %v2676 = vadd.f32 %v1610, %v2675
        %v2677 = vpop.f32.mrf.mxu0
        %v2678 = vadd.f32 %v1612, %v2677
        %2679 = vdwg.mxu0
        %2680 = vmatpush.bf16.msra.mxu0 %v2388
        %2681 = vmatpush.bf16.msra.mxu0 %v2378
        %2682 = vmatpush.bf16.msra.mxu0 %v2368
        %2683 = vmatpush.bf16.msra.mxu0 %v2358
        %2684 = vmatpush.bf16.msra.mxu0 %v2348
        %2685 = vmatpush.bf16.msra.mxu0 %v2338
        %2686 = vmatpush.bf16.msra.mxu0 %v2328
        %2687 = vmatpush.bf16.msra.mxu0 %v2318
        %2688 = vmatmul.bf16.gmra.mxu0 %v324
        %v2689 = vpop.f32.mrf.mxu0
        %v2690 = vadd.f32 %v2676, %v2689
        %v2691 = vpop.f32.mrf.mxu0
        %v2692 = vadd.f32 %v2678, %v2691
        %2693 = vdwg.mxu0
        %2694 = vmatpush.bf16.msra.mxu0 %v2309
        %2695 = vmatpush.bf16.msra.mxu0 %v2299
        %2696 = vmatpush.bf16.msra.mxu0 %v2289
        %2697 = vmatpush.bf16.msra.mxu0 %v2279
        %2698 = vmatpush.bf16.msra.mxu0 %v2269
        %2699 = vmatpush.bf16.msra.mxu0 %v2259
        %2700 = vmatpush.bf16.msra.mxu0 %v2249
        %2701 = vmatpush.bf16.msra.mxu0 %v2239
        %2702 = vmatmul.bf16.gmra.mxu0 %v323
        %v2703 = vpop.f32.mrf.mxu0
        %v2704 = vadd.f32 %v1638, %v2703
        %v2705 = vpop.f32.mrf.mxu0
        %v2706 = vadd.f32 %v1640, %v2705
        %2707 = vdwg.mxu0
        %2708 = vmatpush.bf16.msra.mxu0 %v2389
        %2709 = vmatpush.bf16.msra.mxu0 %v2379
        %2710 = vmatpush.bf16.msra.mxu0 %v2369
        %2711 = vmatpush.bf16.msra.mxu0 %v2359
        %2712 = vmatpush.bf16.msra.mxu0 %v2349
        %2713 = vmatpush.bf16.msra.mxu0 %v2339
        %2714 = vmatpush.bf16.msra.mxu0 %v2329
        %2715 = vmatpush.bf16.msra.mxu0 %v2319
        %2716 = vmatmul.bf16.gmra.mxu0 %v324
        %v2717 = vpop.f32.mrf.mxu0
        %v2718 = vadd.f32 %v2704, %v2717
        %v2719 = vpop.f32.mrf.mxu0
        %v2720 = vadd.f32 %v2706, %v2719
        %2721 = vdwg.mxu0
        %2722 = vmatpush.bf16.msra.mxu0 %v2310
        %2723 = vmatpush.bf16.msra.mxu0 %v2300
        %2724 = vmatpush.bf16.msra.mxu0 %v2290
        %2725 = vmatpush.bf16.msra.mxu0 %v2280
        %2726 = vmatpush.bf16.msra.mxu0 %v2270
        %2727 = vmatpush.bf16.msra.mxu0 %v2260
        %2728 = vmatpush.bf16.msra.mxu0 %v2250
        %2729 = vmatpush.bf16.msra.mxu0 %v2240
        %2730 = vmatmul.bf16.gmra.mxu0 %v323
        %v2731 = vpop.f32.mrf.mxu0
        %v2732 = vadd.f32 %v1666, %v2731
        %v2733 = vpop.f32.mrf.mxu0
        %v2734 = vadd.f32 %v1668, %v2733
        %2735 = vdwg.mxu0
        %2736 = vmatpush.bf16.msra.mxu0 %v2390
        %2737 = vmatpush.bf16.msra.mxu0 %v2380
        %2738 = vmatpush.bf16.msra.mxu0 %v2370
        %2739 = vmatpush.bf16.msra.mxu0 %v2360
        %2740 = vmatpush.bf16.msra.mxu0 %v2350
        %2741 = vmatpush.bf16.msra.mxu0 %v2340
        %2742 = vmatpush.bf16.msra.mxu0 %v2330
        %2743 = vmatpush.bf16.msra.mxu0 %v2320
        %2744 = vmatmul.bf16.gmra.mxu0 %v324
        %v2745 = vpop.f32.mrf.mxu0
        %v2746 = vadd.f32 %v2732, %v2745
        %v2747 = vpop.f32.mrf.mxu0
        %v2748 = vadd.f32 %v2734, %v2747
        %2749 = vdwg.mxu0
        %2750 = vmatpush.bf16.msra.mxu0 %v2311
        %2751 = vmatpush.bf16.msra.mxu0 %v2301
        %2752 = vmatpush.bf16.msra.mxu0 %v2291
        %2753 = vmatpush.bf16.msra.mxu0 %v2281
        %2754 = vmatpush.bf16.msra.mxu0 %v2271
        %2755 = vmatpush.bf16.msra.mxu0 %v2261
        %2756 = vmatpush.bf16.msra.mxu0 %v2251
        %2757 = vmatpush.bf16.msra.mxu0 %v2241
        %2758 = vmatmul.bf16.gmra.mxu0 %v323
        %v2759 = vpop.f32.mrf.mxu0
        %v2760 = vadd.f32 %v1694, %v2759
        %v2761 = vpop.f32.mrf.mxu0
        %v2762 = vadd.f32 %v1696, %v2761
        %2763 = vdwg.mxu0
        %2764 = vmatpush.bf16.msra.mxu0 %v2391
        %2765 = vmatpush.bf16.msra.mxu0 %v2381
        %2766 = vmatpush.bf16.msra.mxu0 %v2371
        %2767 = vmatpush.bf16.msra.mxu0 %v2361
        %2768 = vmatpush.bf16.msra.mxu0 %v2351
        %2769 = vmatpush.bf16.msra.mxu0 %v2341
        %2770 = vmatpush.bf16.msra.mxu0 %v2331
        %2771 = vmatpush.bf16.msra.mxu0 %v2321
        %2772 = vmatmul.bf16.gmra.mxu0 %v324
        %v2773 = vpop.f32.mrf.mxu0
        %v2774 = vadd.f32 %v2760, %v2773
        %v2775 = vpop.f32.mrf.mxu0
        %v2776 = vadd.f32 %v2762, %v2775
        %2777 = vdwg.mxu0
        %2778 = vmatpush.bf16.msra.mxu0 %v2312
        %2779 = vmatpush.bf16.msra.mxu0 %v2302
        %2780 = vmatpush.bf16.msra.mxu0 %v2292
        %2781 = vmatpush.bf16.msra.mxu0 %v2282
        %2782 = vmatpush.bf16.msra.mxu0 %v2272
        %2783 = vmatpush.bf16.msra.mxu0 %v2262
        %2784 = vmatpush.bf16.msra.mxu0 %v2252
        %2785 = vmatpush.bf16.msra.mxu0 %v2242
        %2786 = vmatmul.bf16.gmra.mxu0 %v323
        %v2787 = vpop.f32.mrf.mxu0
        %v2788 = vadd.f32 %v1722, %v2787
        %v2789 = vpop.f32.mrf.mxu0
        %v2790 = vadd.f32 %v1724, %v2789
        %2791 = vdwg.mxu0
        %2792 = vmatpush.bf16.msra.mxu0 %v2392
        %2793 = vmatpush.bf16.msra.mxu0 %v2382
        %2794 = vmatpush.bf16.msra.mxu0 %v2372
        %2795 = vmatpush.bf16.msra.mxu0 %v2362
        %2796 = vmatpush.bf16.msra.mxu0 %v2352
        %2797 = vmatpush.bf16.msra.mxu0 %v2342
        %2798 = vmatpush.bf16.msra.mxu0 %v2332
        %2799 = vmatpush.bf16.msra.mxu0 %v2322
        %2800 = vmatmul.bf16.gmra.mxu0 %v324
        %v2801 = vpop.f32.mrf.mxu0
        %v2802 = vadd.f32 %v2788, %v2801
        %v2803 = vpop.f32.mrf.mxu0
        %v2804 = vadd.f32 %v2790, %v2803
        %2805 = vdwg.mxu0
        %2806 = vmatpush.bf16.msra.mxu0 %v2313
        %2807 = vmatpush.bf16.msra.mxu0 %v2303
        %2808 = vmatpush.bf16.msra.mxu0 %v2293
        %2809 = vmatpush.bf16.msra.mxu0 %v2283
        %2810 = vmatpush.bf16.msra.mxu0 %v2273
        %2811 = vmatpush.bf16.msra.mxu0 %v2263
        %2812 = vmatpush.bf16.msra.mxu0 %v2253
        %2813 = vmatpush.bf16.msra.mxu0 %v2243
        %2814 = vmatmul.bf16.gmra.mxu0 %v323
        %v2815 = vpop.f32.mrf.mxu0
        %v2816 = vadd.f32 %v1750, %v2815
        %v2817 = vpop.f32.mrf.mxu0
        %v2818 = vadd.f32 %v1752, %v2817
        %2819 = vdwg.mxu0
        %2820 = vmatpush.bf16.msra.mxu0 %v2393
        %2821 = vmatpush.bf16.msra.mxu0 %v2383
        %2822 = vmatpush.bf16.msra.mxu0 %v2373
        %2823 = vmatpush.bf16.msra.mxu0 %v2363
        %2824 = vmatpush.bf16.msra.mxu0 %v2353
        %2825 = vmatpush.bf16.msra.mxu0 %v2343
        %2826 = vmatpush.bf16.msra.mxu0 %v2333
        %2827 = vmatpush.bf16.msra.mxu0 %v2323
        %2828 = vmatmul.bf16.gmra.mxu0 %v324
        %v2829 = vpop.f32.mrf.mxu0
        %v2830 = vadd.f32 %v2816, %v2829
        %v2831 = vpop.f32.mrf.mxu0
        %v2832 = vadd.f32 %v2818, %v2831
        %2833 = vdwg.mxu0
        %v2834 = vld [vmem:[#allocation2 + $0xa00] sm:$0xff]
        %v2835 = vld [vmem:[#allocation2 + $0xa08] sm:$0xff]
        %v2836 = vld [vmem:[#allocation2 + $0xa10] sm:$0xff]
        %v2837 = vld [vmem:[#allocation2 + $0xa18] sm:$0xff]
        %v2838 = vld [vmem:[#allocation2 + $0xa20] sm:$0xff]
        %v2839 = vld [vmem:[#allocation2 + $0xa28] sm:$0xff]
        %v2840 = vld [vmem:[#allocation2 + $0xa30] sm:$0xff]
        %v2841 = vld [vmem:[#allocation2 + $0xa38] sm:$0xff]
        %v2842 = vld [vmem:[#allocation2 + $0xa40] sm:$0xff]
        %v2843 = vld [vmem:[#allocation2 + $0xa48] sm:$0xff]
        %v2844 = vld [vmem:[#allocation2 + $0xa50] sm:$0xff]
        %v2845 = vld [vmem:[#allocation2 + $0xa58] sm:$0xff]
        %v2846 = vld [vmem:[#allocation2 + $0xa60] sm:$0xff]
        %v2847 = vld [vmem:[#allocation2 + $0xa68] sm:$0xff]
        %v2848 = vld [vmem:[#allocation2 + $0xa70] sm:$0xff]
        %v2849 = vld [vmem:[#allocation2 + $0xa78] sm:$0xff]
        %v2850 = vld [vmem:[#allocation2 + $0xa80] sm:$0xff]
        %v2851 = vld [vmem:[#allocation2 + $0xa88] sm:$0xff]
        %v2852 = vld [vmem:[#allocation2 + $0xa90] sm:$0xff]
        %v2853 = vld [vmem:[#allocation2 + $0xa98] sm:$0xff]
        %v2854 = vld [vmem:[#allocation2 + $0xaa0] sm:$0xff]
        %v2855 = vld [vmem:[#allocation2 + $0xaa8] sm:$0xff]
        %v2856 = vld [vmem:[#allocation2 + $0xab0] sm:$0xff]
        %v2857 = vld [vmem:[#allocation2 + $0xab8] sm:$0xff]
        %v2858 = vld [vmem:[#allocation2 + $0xac0] sm:$0xff]
        %v2859 = vld [vmem:[#allocation2 + $0xac8] sm:$0xff]
        %v2860 = vld [vmem:[#allocation2 + $0xad0] sm:$0xff]
        %v2861 = vld [vmem:[#allocation2 + $0xad8] sm:$0xff]
        %v2862 = vld [vmem:[#allocation2 + $0xae0] sm:$0xff]
        %v2863 = vld [vmem:[#allocation2 + $0xae8] sm:$0xff]
        %v2864 = vld [vmem:[#allocation2 + $0xaf0] sm:$0xff]
        %v2865 = vld [vmem:[#allocation2 + $0xaf8] sm:$0xff]
        %v2866 = vld [vmem:[#allocation2 + $0xb00] sm:$0xff]
        %v2867 = vld [vmem:[#allocation2 + $0xb08] sm:$0xff]
        %v2868 = vld [vmem:[#allocation2 + $0xb10] sm:$0xff]
        %v2869 = vld [vmem:[#allocation2 + $0xb18] sm:$0xff]
        %v2870 = vld [vmem:[#allocation2 + $0xb20] sm:$0xff]
        %v2871 = vld [vmem:[#allocation2 + $0xb28] sm:$0xff]
        %v2872 = vld [vmem:[#allocation2 + $0xb30] sm:$0xff]
        %v2873 = vld [vmem:[#allocation2 + $0xb38] sm:$0xff]
        %v2874 = vld [vmem:[#allocation2 + $0xb40] sm:$0xff]
        %v2875 = vld [vmem:[#allocation2 + $0xb48] sm:$0xff]
        %v2876 = vld [vmem:[#allocation2 + $0xb50] sm:$0xff]
        %v2877 = vld [vmem:[#allocation2 + $0xb58] sm:$0xff]
        %v2878 = vld [vmem:[#allocation2 + $0xb60] sm:$0xff]
        %v2879 = vld [vmem:[#allocation2 + $0xb68] sm:$0xff]
        %v2880 = vld [vmem:[#allocation2 + $0xb70] sm:$0xff]
        %v2881 = vld [vmem:[#allocation2 + $0xb78] sm:$0xff]
        %v2882 = vld [vmem:[#allocation2 + $0xb80] sm:$0xff]
        %v2883 = vld [vmem:[#allocation2 + $0xb88] sm:$0xff]
        %v2884 = vld [vmem:[#allocation2 + $0xb90] sm:$0xff]
        %v2885 = vld [vmem:[#allocation2 + $0xb98] sm:$0xff]
        %v2886 = vld [vmem:[#allocation2 + $0xba0] sm:$0xff]
        %v2887 = vld [vmem:[#allocation2 + $0xba8] sm:$0xff]
        %v2888 = vld [vmem:[#allocation2 + $0xbb0] sm:$0xff]
        %v2889 = vld [vmem:[#allocation2 + $0xbb8] sm:$0xff]
        %v2890 = vld [vmem:[#allocation2 + $0xbc0] sm:$0xff]
        %v2891 = vld [vmem:[#allocation2 + $0xbc8] sm:$0xff]
        %v2892 = vld [vmem:[#allocation2 + $0xbd0] sm:$0xff]
        %v2893 = vld [vmem:[#allocation2 + $0xbd8] sm:$0xff]
        %v2894 = vld [vmem:[#allocation2 + $0xbe0] sm:$0xff]
        %v2895 = vld [vmem:[#allocation2 + $0xbe8] sm:$0xff]
        %v2896 = vld [vmem:[#allocation2 + $0xbf0] sm:$0xff]
        %v2897 = vld [vmem:[#allocation2 + $0xbf8] sm:$0xff]
        %v2898 = vld [vmem:[#allocation2 + $0xc00] sm:$0xff]
        %v2899 = vld [vmem:[#allocation2 + $0xc08] sm:$0xff]
        %v2900 = vld [vmem:[#allocation2 + $0xc10] sm:$0xff]
        %v2901 = vld [vmem:[#allocation2 + $0xc18] sm:$0xff]
        %v2902 = vld [vmem:[#allocation2 + $0xc20] sm:$0xff]
        %v2903 = vld [vmem:[#allocation2 + $0xc28] sm:$0xff]
        %v2904 = vld [vmem:[#allocation2 + $0xc30] sm:$0xff]
        %v2905 = vld [vmem:[#allocation2 + $0xc38] sm:$0xff]
        %v2906 = vld [vmem:[#allocation2 + $0xc40] sm:$0xff]
        %v2907 = vld [vmem:[#allocation2 + $0xc48] sm:$0xff]
        %v2908 = vld [vmem:[#allocation2 + $0xc50] sm:$0xff]
        %v2909 = vld [vmem:[#allocation2 + $0xc58] sm:$0xff]
        %v2910 = vld [vmem:[#allocation2 + $0xc60] sm:$0xff]
        %v2911 = vld [vmem:[#allocation2 + $0xc68] sm:$0xff]
        %v2912 = vld [vmem:[#allocation2 + $0xc70] sm:$0xff]
        %v2913 = vld [vmem:[#allocation2 + $0xc78] sm:$0xff]
        %v2914 = vld [vmem:[#allocation2 + $0xc80] sm:$0xff]
        %v2915 = vld [vmem:[#allocation2 + $0xc88] sm:$0xff]
        %v2916 = vld [vmem:[#allocation2 + $0xc90] sm:$0xff]
        %v2917 = vld [vmem:[#allocation2 + $0xc98] sm:$0xff]
        %v2918 = vld [vmem:[#allocation2 + $0xca0] sm:$0xff]
        %v2919 = vld [vmem:[#allocation2 + $0xca8] sm:$0xff]
        %v2920 = vld [vmem:[#allocation2 + $0xcb0] sm:$0xff]
        %v2921 = vld [vmem:[#allocation2 + $0xcb8] sm:$0xff]
        %v2922 = vld [vmem:[#allocation2 + $0xcc0] sm:$0xff]
        %v2923 = vld [vmem:[#allocation2 + $0xcc8] sm:$0xff]
        %v2924 = vld [vmem:[#allocation2 + $0xcd0] sm:$0xff]
        %v2925 = vld [vmem:[#allocation2 + $0xcd8] sm:$0xff]
        %v2926 = vld [vmem:[#allocation2 + $0xce0] sm:$0xff]
        %v2927 = vld [vmem:[#allocation2 + $0xce8] sm:$0xff]
        %v2928 = vld [vmem:[#allocation2 + $0xcf0] sm:$0xff]
        %v2929 = vld [vmem:[#allocation2 + $0xcf8] sm:$0xff]
        %v2930 = vld [vmem:[#allocation2 + $0xd00] sm:$0xff]
        %v2931 = vld [vmem:[#allocation2 + $0xd08] sm:$0xff]
        %v2932 = vld [vmem:[#allocation2 + $0xd10] sm:$0xff]
        %v2933 = vld [vmem:[#allocation2 + $0xd18] sm:$0xff]
        %v2934 = vld [vmem:[#allocation2 + $0xd20] sm:$0xff]
        %v2935 = vld [vmem:[#allocation2 + $0xd28] sm:$0xff]
        %v2936 = vld [vmem:[#allocation2 + $0xd30] sm:$0xff]
        %v2937 = vld [vmem:[#allocation2 + $0xd38] sm:$0xff]
        %v2938 = vld [vmem:[#allocation2 + $0xd40] sm:$0xff]
        %v2939 = vld [vmem:[#allocation2 + $0xd48] sm:$0xff]
        %v2940 = vld [vmem:[#allocation2 + $0xd50] sm:$0xff]
        %v2941 = vld [vmem:[#allocation2 + $0xd58] sm:$0xff]
        %v2942 = vld [vmem:[#allocation2 + $0xd60] sm:$0xff]
        %v2943 = vld [vmem:[#allocation2 + $0xd68] sm:$0xff]
        %v2944 = vld [vmem:[#allocation2 + $0xd70] sm:$0xff]
        %v2945 = vld [vmem:[#allocation2 + $0xd78] sm:$0xff]
        %v2946 = vld [vmem:[#allocation2 + $0xd80] sm:$0xff]
        %v2947 = vld [vmem:[#allocation2 + $0xd88] sm:$0xff]
        %v2948 = vld [vmem:[#allocation2 + $0xd90] sm:$0xff]
        %v2949 = vld [vmem:[#allocation2 + $0xd98] sm:$0xff]
        %v2950 = vld [vmem:[#allocation2 + $0xda0] sm:$0xff]
        %v2951 = vld [vmem:[#allocation2 + $0xda8] sm:$0xff]
        %v2952 = vld [vmem:[#allocation2 + $0xdb0] sm:$0xff]
        %v2953 = vld [vmem:[#allocation2 + $0xdb8] sm:$0xff]
        %v2954 = vld [vmem:[#allocation2 + $0xdc0] sm:$0xff]
        %v2955 = vld [vmem:[#allocation2 + $0xdc8] sm:$0xff]
        %v2956 = vld [vmem:[#allocation2 + $0xdd0] sm:$0xff]
        %v2957 = vld [vmem:[#allocation2 + $0xdd8] sm:$0xff]
        %v2958 = vld [vmem:[#allocation2 + $0xde0] sm:$0xff]
        %v2959 = vld [vmem:[#allocation2 + $0xde8] sm:$0xff]
        %v2960 = vld [vmem:[#allocation2 + $0xdf0] sm:$0xff]
        %v2961 = vld [vmem:[#allocation2 + $0xdf8] sm:$0xff]
        %v2962 = vld [vmem:[#allocation2 + $0xe00] sm:$0xff]
        %v2963 = vld [vmem:[#allocation2 + $0xe08] sm:$0xff]
        %v2964 = vld [vmem:[#allocation2 + $0xe10] sm:$0xff]
        %v2965 = vld [vmem:[#allocation2 + $0xe18] sm:$0xff]
        %v2966 = vld [vmem:[#allocation2 + $0xe20] sm:$0xff]
        %v2967 = vld [vmem:[#allocation2 + $0xe28] sm:$0xff]
        %v2968 = vld [vmem:[#allocation2 + $0xe30] sm:$0xff]
        %v2969 = vld [vmem:[#allocation2 + $0xe38] sm:$0xff]
        %v2970 = vld [vmem:[#allocation2 + $0xe40] sm:$0xff]
        %v2971 = vld [vmem:[#allocation2 + $0xe48] sm:$0xff]
        %v2972 = vld [vmem:[#allocation2 + $0xe50] sm:$0xff]
        %v2973 = vld [vmem:[#allocation2 + $0xe58] sm:$0xff]
        %v2974 = vld [vmem:[#allocation2 + $0xe60] sm:$0xff]
        %v2975 = vld [vmem:[#allocation2 + $0xe68] sm:$0xff]
        %v2976 = vld [vmem:[#allocation2 + $0xe70] sm:$0xff]
        %v2977 = vld [vmem:[#allocation2 + $0xe78] sm:$0xff]
        %v2978 = vld [vmem:[#allocation2 + $0xe80] sm:$0xff]
        %v2979 = vld [vmem:[#allocation2 + $0xe88] sm:$0xff]
        %v2980 = vld [vmem:[#allocation2 + $0xe90] sm:$0xff]
        %v2981 = vld [vmem:[#allocation2 + $0xe98] sm:$0xff]
        %v2982 = vld [vmem:[#allocation2 + $0xea0] sm:$0xff]
        %v2983 = vld [vmem:[#allocation2 + $0xea8] sm:$0xff]
        %v2984 = vld [vmem:[#allocation2 + $0xeb0] sm:$0xff]
        %v2985 = vld [vmem:[#allocation2 + $0xeb8] sm:$0xff]
        %v2986 = vld [vmem:[#allocation2 + $0xec0] sm:$0xff]
        %v2987 = vld [vmem:[#allocation2 + $0xec8] sm:$0xff]
        %v2988 = vld [vmem:[#allocation2 + $0xed0] sm:$0xff]
        %v2989 = vld [vmem:[#allocation2 + $0xed8] sm:$0xff]
        %v2990 = vld [vmem:[#allocation2 + $0xee0] sm:$0xff]
        %v2991 = vld [vmem:[#allocation2 + $0xee8] sm:$0xff]
        %v2992 = vld [vmem:[#allocation2 + $0xef0] sm:$0xff]
        %v2993 = vld [vmem:[#allocation2 + $0xef8] sm:$0xff]
        %vm2998 = vcmask 1046528
        %v2999 = vrot.slane %v323, 1
        %v3000 = vrot.slane %v485, 1
        %v3001 = vsel %vm2998, %v2999, %v3000
        %v3002 = vrot.slane %v324, 1
        %v3003 = vrot.slane %v486, 1
        %v3004 = vsel %vm2998, %v3002, %v3003
        %v3167 = vunpack.c.l.b16 %v2834
        %v3168 = vunpack.c.h.b16 %v2834
        %v3169 = vunpack.c.l.b16 %v2835
        %v3170 = vunpack.c.h.b16 %v2835
        %v3171 = vunpack.c.l.b16 %v2836
        %v3172 = vunpack.c.h.b16 %v2836
        %v3173 = vunpack.c.l.b16 %v2837
        %v3174 = vunpack.c.h.b16 %v2837
        %v3175 = vunpack.c.l.b16 %v2838
        %v3176 = vunpack.c.h.b16 %v2838
        %v3177 = vunpack.c.l.b16 %v2839
        %v3178 = vunpack.c.h.b16 %v2839
        %v3179 = vunpack.c.l.b16 %v2840
        %v3180 = vunpack.c.h.b16 %v2840
        %v3181 = vunpack.c.l.b16 %v2841
        %v3182 = vunpack.c.h.b16 %v2841
        %v3183 = vunpack.c.l.b16 %v2842
        %v3184 = vunpack.c.h.b16 %v2842
        %v3185 = vunpack.c.l.b16 %v2843
        %v3186 = vunpack.c.h.b16 %v2843
        %v3187 = vunpack.c.l.b16 %v2844
        %v3188 = vunpack.c.h.b16 %v2844
        %v3189 = vunpack.c.l.b16 %v2845
        %v3190 = vunpack.c.h.b16 %v2845
        %v3191 = vunpack.c.l.b16 %v2846
        %v3192 = vunpack.c.h.b16 %v2846
        %v3193 = vunpack.c.l.b16 %v2847
        %v3194 = vunpack.c.h.b16 %v2847
        %v3195 = vunpack.c.l.b16 %v2848
        %v3196 = vunpack.c.h.b16 %v2848
        %v3197 = vunpack.c.l.b16 %v2849
        %v3198 = vunpack.c.h.b16 %v2849
        %v3199 = vunpack.c.l.b16 %v2850
        %v3200 = vunpack.c.h.b16 %v2850
        %v3201 = vunpack.c.l.b16 %v2851
        %v3202 = vunpack.c.h.b16 %v2851
        %v3203 = vunpack.c.l.b16 %v2852
        %v3204 = vunpack.c.h.b16 %v2852
        %v3205 = vunpack.c.l.b16 %v2853
        %v3206 = vunpack.c.h.b16 %v2853
        %v3207 = vunpack.c.l.b16 %v2854
        %v3208 = vunpack.c.h.b16 %v2854
        %v3209 = vunpack.c.l.b16 %v2855
        %v3210 = vunpack.c.h.b16 %v2855
        %v3211 = vunpack.c.l.b16 %v2856
        %v3212 = vunpack.c.h.b16 %v2856
        %v3213 = vunpack.c.l.b16 %v2857
        %v3214 = vunpack.c.h.b16 %v2857
        %v3215 = vunpack.c.l.b16 %v2858
        %v3216 = vunpack.c.h.b16 %v2858
        %v3217 = vunpack.c.l.b16 %v2859
        %v3218 = vunpack.c.h.b16 %v2859
        %v3219 = vunpack.c.l.b16 %v2860
        %v3220 = vunpack.c.h.b16 %v2860
        %v3221 = vunpack.c.l.b16 %v2861
        %v3222 = vunpack.c.h.b16 %v2861
        %v3223 = vunpack.c.l.b16 %v2862
        %v3224 = vunpack.c.h.b16 %v2862
        %v3225 = vunpack.c.l.b16 %v2863
        %v3226 = vunpack.c.h.b16 %v2863
        %v3227 = vunpack.c.l.b16 %v2864
        %v3228 = vunpack.c.h.b16 %v2864
        %v3229 = vunpack.c.l.b16 %v2865
        %v3230 = vunpack.c.h.b16 %v2865
        %v3231 = vunpack.c.l.b16 %v2866
        %v3232 = vunpack.c.h.b16 %v2866
        %v3233 = vunpack.c.l.b16 %v2867
        %v3234 = vunpack.c.h.b16 %v2867
        %v3235 = vunpack.c.l.b16 %v2868
        %v3236 = vunpack.c.h.b16 %v2868
        %v3237 = vunpack.c.l.b16 %v2869
        %v3238 = vunpack.c.h.b16 %v2869
        %v3239 = vunpack.c.l.b16 %v2870
        %v3240 = vunpack.c.h.b16 %v2870
        %v3241 = vunpack.c.l.b16 %v2871
        %v3242 = vunpack.c.h.b16 %v2871
        %v3243 = vunpack.c.l.b16 %v2872
        %v3244 = vunpack.c.h.b16 %v2872
        %v3245 = vunpack.c.l.b16 %v2873
        %v3246 = vunpack.c.h.b16 %v2873
        %v3247 = vunpack.c.l.b16 %v2874
        %v3248 = vunpack.c.h.b16 %v2874
        %v3249 = vunpack.c.l.b16 %v2875
        %v3250 = vunpack.c.h.b16 %v2875
        %v3251 = vunpack.c.l.b16 %v2876
        %v3252 = vunpack.c.h.b16 %v2876
        %v3253 = vunpack.c.l.b16 %v2877
        %v3254 = vunpack.c.h.b16 %v2877
        %v3255 = vunpack.c.l.b16 %v2878
        %v3256 = vunpack.c.h.b16 %v2878
        %v3257 = vunpack.c.l.b16 %v2879
        %v3258 = vunpack.c.h.b16 %v2879
        %v3259 = vunpack.c.l.b16 %v2880
        %v3260 = vunpack.c.h.b16 %v2880
        %v3261 = vunpack.c.l.b16 %v2881
        %v3262 = vunpack.c.h.b16 %v2881
        %v3263 = vunpack.c.l.b16 %v2882
        %v3264 = vunpack.c.h.b16 %v2882
        %v3265 = vunpack.c.l.b16 %v2883
        %v3266 = vunpack.c.h.b16 %v2883
        %v3267 = vunpack.c.l.b16 %v2884
        %v3268 = vunpack.c.h.b16 %v2884
        %v3269 = vunpack.c.l.b16 %v2885
        %v3270 = vunpack.c.h.b16 %v2885
        %v3271 = vunpack.c.l.b16 %v2886
        %v3272 = vunpack.c.h.b16 %v2886
        %v3273 = vunpack.c.l.b16 %v2887
        %v3274 = vunpack.c.h.b16 %v2887
        %v3275 = vunpack.c.l.b16 %v2888
        %v3276 = vunpack.c.h.b16 %v2888
        %v3277 = vunpack.c.l.b16 %v2889
        %v3278 = vunpack.c.h.b16 %v2889
        %v3279 = vunpack.c.l.b16 %v2890
        %v3280 = vunpack.c.h.b16 %v2890
        %v3281 = vunpack.c.l.b16 %v2891
        %v3282 = vunpack.c.h.b16 %v2891
        %v3283 = vunpack.c.l.b16 %v2892
        %v3284 = vunpack.c.h.b16 %v2892
        %v3285 = vunpack.c.l.b16 %v2893
        %v3286 = vunpack.c.h.b16 %v2893
        %v3287 = vunpack.c.l.b16 %v2894
        %v3288 = vunpack.c.h.b16 %v2894
        %v3289 = vunpack.c.l.b16 %v2895
        %v3290 = vunpack.c.h.b16 %v2895
        %v3291 = vunpack.c.l.b16 %v2896
        %v3292 = vunpack.c.h.b16 %v2896
        %v3293 = vunpack.c.l.b16 %v2897
        %v3294 = vunpack.c.h.b16 %v2897
        %v3295 = vunpack.c.l.b16 %v2898
        %v3296 = vunpack.c.h.b16 %v2898
        %v3297 = vunpack.c.l.b16 %v2899
        %v3298 = vunpack.c.h.b16 %v2899
        %v3299 = vunpack.c.l.b16 %v2900
        %v3300 = vunpack.c.h.b16 %v2900
        %v3301 = vunpack.c.l.b16 %v2901
        %v3302 = vunpack.c.h.b16 %v2901
        %v3303 = vunpack.c.l.b16 %v2902
        %v3304 = vunpack.c.h.b16 %v2902
        %v3305 = vunpack.c.l.b16 %v2903
        %v3306 = vunpack.c.h.b16 %v2903
        %v3307 = vunpack.c.l.b16 %v2904
        %v3308 = vunpack.c.h.b16 %v2904
        %v3309 = vunpack.c.l.b16 %v2905
        %v3310 = vunpack.c.h.b16 %v2905
        %v3311 = vunpack.c.l.b16 %v2906
        %v3312 = vunpack.c.h.b16 %v2906
        %v3313 = vunpack.c.l.b16 %v2907
        %v3314 = vunpack.c.h.b16 %v2907
        %v3315 = vunpack.c.l.b16 %v2908
        %v3316 = vunpack.c.h.b16 %v2908
        %v3317 = vunpack.c.l.b16 %v2909
        %v3318 = vunpack.c.h.b16 %v2909
        %v3319 = vunpack.c.l.b16 %v2910
        %v3320 = vunpack.c.h.b16 %v2910
        %v3321 = vunpack.c.l.b16 %v2911
        %v3322 = vunpack.c.h.b16 %v2911
        %v3323 = vunpack.c.l.b16 %v2912
        %v3324 = vunpack.c.h.b16 %v2912
        %v3325 = vunpack.c.l.b16 %v2913
        %v3326 = vunpack.c.h.b16 %v2913
        %v3327 = vunpack.c.l.b16 %v2914
        %v3328 = vunpack.c.h.b16 %v2914
        %v3329 = vunpack.c.l.b16 %v2915
        %v3330 = vunpack.c.h.b16 %v2915
        %v3331 = vunpack.c.l.b16 %v2916
        %v3332 = vunpack.c.h.b16 %v2916
        %v3333 = vunpack.c.l.b16 %v2917
        %v3334 = vunpack.c.h.b16 %v2917
        %v3335 = vunpack.c.l.b16 %v2918
        %v3336 = vunpack.c.h.b16 %v2918
        %v3337 = vunpack.c.l.b16 %v2919
        %v3338 = vunpack.c.h.b16 %v2919
        %v3339 = vunpack.c.l.b16 %v2920
        %v3340 = vunpack.c.h.b16 %v2920
        %v3341 = vunpack.c.l.b16 %v2921
        %v3342 = vunpack.c.h.b16 %v2921
        %v3343 = vunpack.c.l.b16 %v2922
        %v3344 = vunpack.c.h.b16 %v2922
        %v3345 = vunpack.c.l.b16 %v2923
        %v3346 = vunpack.c.h.b16 %v2923
        %v3347 = vunpack.c.l.b16 %v2924
        %v3348 = vunpack.c.h.b16 %v2924
        %v3349 = vunpack.c.l.b16 %v2925
        %v3350 = vunpack.c.h.b16 %v2925
        %v3351 = vunpack.c.l.b16 %v2926
        %v3352 = vunpack.c.h.b16 %v2926
        %v3353 = vunpack.c.l.b16 %v2927
        %v3354 = vunpack.c.h.b16 %v2927
        %v3355 = vunpack.c.l.b16 %v2928
        %v3356 = vunpack.c.h.b16 %v2928
        %v3357 = vunpack.c.l.b16 %v2929
        %v3358 = vunpack.c.h.b16 %v2929
        %v3359 = vunpack.c.l.b16 %v2930
        %v3360 = vunpack.c.h.b16 %v2930
        %v3361 = vunpack.c.l.b16 %v2931
        %v3362 = vunpack.c.h.b16 %v2931
        %v3363 = vunpack.c.l.b16 %v2932
        %v3364 = vunpack.c.h.b16 %v2932
        %v3365 = vunpack.c.l.b16 %v2933
        %v3366 = vunpack.c.h.b16 %v2933
        %v3367 = vunpack.c.l.b16 %v2934
        %v3368 = vunpack.c.h.b16 %v2934
        %v3369 = vunpack.c.l.b16 %v2935
        %v3370 = vunpack.c.h.b16 %v2935
        %v3371 = vunpack.c.l.b16 %v2936
        %v3372 = vunpack.c.h.b16 %v2936
        %v3373 = vunpack.c.l.b16 %v2937
        %v3374 = vunpack.c.h.b16 %v2937
        %v3375 = vunpack.c.l.b16 %v2938
        %v3376 = vunpack.c.h.b16 %v2938
        %v3377 = vunpack.c.l.b16 %v2939
        %v3378 = vunpack.c.h.b16 %v2939
        %v3379 = vunpack.c.l.b16 %v2940
        %v3380 = vunpack.c.h.b16 %v2940
        %v3381 = vunpack.c.l.b16 %v2941
        %v3382 = vunpack.c.h.b16 %v2941
        %v3383 = vunpack.c.l.b16 %v2942
        %v3384 = vunpack.c.h.b16 %v2942
        %v3385 = vunpack.c.l.b16 %v2943
        %v3386 = vunpack.c.h.b16 %v2943
        %v3387 = vunpack.c.l.b16 %v2944
        %v3388 = vunpack.c.h.b16 %v2944
        %v3389 = vunpack.c.l.b16 %v2945
        %v3390 = vunpack.c.h.b16 %v2945
        %v3391 = vunpack.c.l.b16 %v2946
        %v3392 = vunpack.c.h.b16 %v2946
        %v3393 = vunpack.c.l.b16 %v2947
        %v3394 = vunpack.c.h.b16 %v2947
        %v3395 = vunpack.c.l.b16 %v2948
        %v3396 = vunpack.c.h.b16 %v2948
        %v3397 = vunpack.c.l.b16 %v2949
        %v3398 = vunpack.c.h.b16 %v2949
        %v3399 = vunpack.c.l.b16 %v2950
        %v3400 = vunpack.c.h.b16 %v2950
        %v3401 = vunpack.c.l.b16 %v2951
        %v3402 = vunpack.c.h.b16 %v2951
        %v3403 = vunpack.c.l.b16 %v2952
        %v3404 = vunpack.c.h.b16 %v2952
        %v3405 = vunpack.c.l.b16 %v2953
        %v3406 = vunpack.c.h.b16 %v2953
        %v3407 = vunpack.c.l.b16 %v2954
        %v3408 = vunpack.c.h.b16 %v2954
        %v3409 = vunpack.c.l.b16 %v2955
        %v3410 = vunpack.c.h.b16 %v2955
        %v3411 = vunpack.c.l.b16 %v2956
        %v3412 = vunpack.c.h.b16 %v2956
        %v3413 = vunpack.c.l.b16 %v2957
        %v3414 = vunpack.c.h.b16 %v2957
        %v3415 = vunpack.c.l.b16 %v2958
        %v3416 = vunpack.c.h.b16 %v2958
        %v3417 = vunpack.c.l.b16 %v2959
        %v3418 = vunpack.c.h.b16 %v2959
        %v3419 = vunpack.c.l.b16 %v2960
        %v3420 = vunpack.c.h.b16 %v2960
        %v3421 = vunpack.c.l.b16 %v2961
        %v3422 = vunpack.c.h.b16 %v2961
        %v3423 = vunpack.c.l.b16 %v2962
        %v3424 = vunpack.c.h.b16 %v2962
        %v3425 = vunpack.c.l.b16 %v2963
        %v3426 = vunpack.c.h.b16 %v2963
        %v3427 = vunpack.c.l.b16 %v2964
        %v3428 = vunpack.c.h.b16 %v2964
        %v3429 = vunpack.c.l.b16 %v2965
        %v3430 = vunpack.c.h.b16 %v2965
        %v3431 = vunpack.c.l.b16 %v2966
        %v3432 = vunpack.c.h.b16 %v2966
        %v3433 = vunpack.c.l.b16 %v2967
        %v3434 = vunpack.c.h.b16 %v2967
        %v3435 = vunpack.c.l.b16 %v2968
        %v3436 = vunpack.c.h.b16 %v2968
        %v3437 = vunpack.c.l.b16 %v2969
        %v3438 = vunpack.c.h.b16 %v2969
        %v3439 = vunpack.c.l.b16 %v2970
        %v3440 = vunpack.c.h.b16 %v2970
        %v3441 = vunpack.c.l.b16 %v2971
        %v3442 = vunpack.c.h.b16 %v2971
        %v3443 = vunpack.c.l.b16 %v2972
        %v3444 = vunpack.c.h.b16 %v2972
        %v3445 = vunpack.c.l.b16 %v2973
        %v3446 = vunpack.c.h.b16 %v2973
        %v3447 = vunpack.c.l.b16 %v2974
        %v3448 = vunpack.c.h.b16 %v2974
        %v3449 = vunpack.c.l.b16 %v2975
        %v3450 = vunpack.c.h.b16 %v2975
        %v3451 = vunpack.c.l.b16 %v2976
        %v3452 = vunpack.c.h.b16 %v2976
        %v3453 = vunpack.c.l.b16 %v2977
        %v3454 = vunpack.c.h.b16 %v2977
        %v3455 = vunpack.c.l.b16 %v2978
        %v3456 = vunpack.c.h.b16 %v2978
        %v3457 = vunpack.c.l.b16 %v2979
        %v3458 = vunpack.c.h.b16 %v2979
        %v3459 = vunpack.c.l.b16 %v2980
        %v3460 = vunpack.c.h.b16 %v2980
        %v3461 = vunpack.c.l.b16 %v2981
        %v3462 = vunpack.c.h.b16 %v2981
        %v3463 = vunpack.c.l.b16 %v2982
        %v3464 = vunpack.c.h.b16 %v2982
        %v3465 = vunpack.c.l.b16 %v2983
        %v3466 = vunpack.c.h.b16 %v2983
        %v3467 = vunpack.c.l.b16 %v2984
        %v3468 = vunpack.c.h.b16 %v2984
        %v3469 = vunpack.c.l.b16 %v2985
        %v3470 = vunpack.c.h.b16 %v2985
        %v3471 = vunpack.c.l.b16 %v2986
        %v3472 = vunpack.c.h.b16 %v2986
        %v3473 = vunpack.c.l.b16 %v2987
        %v3474 = vunpack.c.h.b16 %v2987
        %v3475 = vunpack.c.l.b16 %v2988
        %v3476 = vunpack.c.h.b16 %v2988
        %v3477 = vunpack.c.l.b16 %v2989
        %v3478 = vunpack.c.h.b16 %v2989
        %v3479 = vunpack.c.l.b16 %v2990
        %v3480 = vunpack.c.h.b16 %v2990
        %v3481 = vunpack.c.l.b16 %v2991
        %v3482 = vunpack.c.h.b16 %v2991
        %v3483 = vunpack.c.l.b16 %v2992
        %v3484 = vunpack.c.h.b16 %v2992
        %v3485 = vunpack.c.l.b16 %v2993
        %v3486 = vunpack.c.h.b16 %v2993
        %v3487 = vpack.c.b16 %v3177, %v3167
        %v3488 = vpack.c.b16 %v3178, %v3168
        %v3489 = vpack.c.b16 %v3179, %v3169
        %v3490 = vpack.c.b16 %v3180, %v3170
        %v3491 = vpack.c.b16 %v3181, %v3171
        %v3492 = vpack.c.b16 %v3182, %v3172
        %v3493 = vpack.c.b16 %v3183, %v3173
        %v3494 = vpack.c.b16 %v3184, %v3174
        %v3495 = vpack.c.b16 %v3185, %v3175
        %v3496 = vpack.c.b16 %v3186, %v3176
        %v3497 = vpack.c.b16 %v3197, %v3187
        %v3498 = vpack.c.b16 %v3198, %v3188
        %v3499 = vpack.c.b16 %v3199, %v3189
        %v3500 = vpack.c.b16 %v3200, %v3190
        %v3501 = vpack.c.b16 %v3201, %v3191
        %v3502 = vpack.c.b16 %v3202, %v3192
        %v3503 = vpack.c.b16 %v3203, %v3193
        %v3504 = vpack.c.b16 %v3204, %v3194
        %v3505 = vpack.c.b16 %v3205, %v3195
        %v3506 = vpack.c.b16 %v3206, %v3196
        %v3507 = vpack.c.b16 %v3217, %v3207
        %v3508 = vpack.c.b16 %v3218, %v3208
        %v3509 = vpack.c.b16 %v3219, %v3209
        %v3510 = vpack.c.b16 %v3220, %v3210
        %v3511 = vpack.c.b16 %v3221, %v3211
        %v3512 = vpack.c.b16 %v3222, %v3212
        %v3513 = vpack.c.b16 %v3223, %v3213
        %v3514 = vpack.c.b16 %v3224, %v3214
        %v3515 = vpack.c.b16 %v3225, %v3215
        %v3516 = vpack.c.b16 %v3226, %v3216
        %v3517 = vpack.c.b16 %v3237, %v3227
        %v3518 = vpack.c.b16 %v3238, %v3228
        %v3519 = vpack.c.b16 %v3239, %v3229
        %v3520 = vpack.c.b16 %v3240, %v3230
        %v3521 = vpack.c.b16 %v3241, %v3231
        %v3522 = vpack.c.b16 %v3242, %v3232
        %v3523 = vpack.c.b16 %v3243, %v3233
        %v3524 = vpack.c.b16 %v3244, %v3234
        %v3525 = vpack.c.b16 %v3245, %v3235
        %v3526 = vpack.c.b16 %v3246, %v3236
        %v3527 = vpack.c.b16 %v3257, %v3247
        %v3528 = vpack.c.b16 %v3258, %v3248
        %v3529 = vpack.c.b16 %v3259, %v3249
        %v3530 = vpack.c.b16 %v3260, %v3250
        %v3531 = vpack.c.b16 %v3261, %v3251
        %v3532 = vpack.c.b16 %v3262, %v3252
        %v3533 = vpack.c.b16 %v3263, %v3253
        %v3534 = vpack.c.b16 %v3264, %v3254
        %v3535 = vpack.c.b16 %v3265, %v3255
        %v3536 = vpack.c.b16 %v3266, %v3256
        %v3537 = vpack.c.b16 %v3277, %v3267
        %v3538 = vpack.c.b16 %v3278, %v3268
        %v3539 = vpack.c.b16 %v3279, %v3269
        %v3540 = vpack.c.b16 %v3280, %v3270
        %v3541 = vpack.c.b16 %v3281, %v3271
        %v3542 = vpack.c.b16 %v3282, %v3272
        %v3543 = vpack.c.b16 %v3283, %v3273
        %v3544 = vpack.c.b16 %v3284, %v3274
        %v3545 = vpack.c.b16 %v3285, %v3275
        %v3546 = vpack.c.b16 %v3286, %v3276
        %v3547 = vpack.c.b16 %v3297, %v3287
        %v3548 = vpack.c.b16 %v3298, %v3288
        %v3549 = vpack.c.b16 %v3299, %v3289
        %v3550 = vpack.c.b16 %v3300, %v3290
        %v3551 = vpack.c.b16 %v3301, %v3291
        %v3552 = vpack.c.b16 %v3302, %v3292
        %v3553 = vpack.c.b16 %v3303, %v3293
        %v3554 = vpack.c.b16 %v3304, %v3294
        %v3555 = vpack.c.b16 %v3305, %v3295
        %v3556 = vpack.c.b16 %v3306, %v3296
        %v3557 = vpack.c.b16 %v3317, %v3307
        %v3558 = vpack.c.b16 %v3318, %v3308
        %v3559 = vpack.c.b16 %v3319, %v3309
        %v3560 = vpack.c.b16 %v3320, %v3310
        %v3561 = vpack.c.b16 %v3321, %v3311
        %v3562 = vpack.c.b16 %v3322, %v3312
        %v3563 = vpack.c.b16 %v3323, %v3313
        %v3564 = vpack.c.b16 %v3324, %v3314
        %v3565 = vpack.c.b16 %v3325, %v3315
        %v3566 = vpack.c.b16 %v3326, %v3316
        %v3567 = vpack.c.b16 %v3337, %v3327
        %v3568 = vpack.c.b16 %v3338, %v3328
        %v3569 = vpack.c.b16 %v3339, %v3329
        %v3570 = vpack.c.b16 %v3340, %v3330
        %v3571 = vpack.c.b16 %v3341, %v3331
        %v3572 = vpack.c.b16 %v3342, %v3332
        %v3573 = vpack.c.b16 %v3343, %v3333
        %v3574 = vpack.c.b16 %v3344, %v3334
        %v3575 = vpack.c.b16 %v3345, %v3335
        %v3576 = vpack.c.b16 %v3346, %v3336
        %v3577 = vpack.c.b16 %v3357, %v3347
        %v3578 = vpack.c.b16 %v3358, %v3348
        %v3579 = vpack.c.b16 %v3359, %v3349
        %v3580 = vpack.c.b16 %v3360, %v3350
        %v3581 = vpack.c.b16 %v3361, %v3351
        %v3582 = vpack.c.b16 %v3362, %v3352
        %v3583 = vpack.c.b16 %v3363, %v3353
        %v3584 = vpack.c.b16 %v3364, %v3354
        %v3585 = vpack.c.b16 %v3365, %v3355
        %v3586 = vpack.c.b16 %v3366, %v3356
        %v3587 = vpack.c.b16 %v3377, %v3367
        %v3588 = vpack.c.b16 %v3378, %v3368
        %v3589 = vpack.c.b16 %v3379, %v3369
        %v3590 = vpack.c.b16 %v3380, %v3370
        %v3591 = vpack.c.b16 %v3381, %v3371
        %v3592 = vpack.c.b16 %v3382, %v3372
        %v3593 = vpack.c.b16 %v3383, %v3373
        %v3594 = vpack.c.b16 %v3384, %v3374
        %v3595 = vpack.c.b16 %v3385, %v3375
        %v3596 = vpack.c.b16 %v3386, %v3376
        %v3597 = vpack.c.b16 %v3397, %v3387
        %v3598 = vpack.c.b16 %v3398, %v3388
        %v3599 = vpack.c.b16 %v3399, %v3389
        %v3600 = vpack.c.b16 %v3400, %v3390
        %v3601 = vpack.c.b16 %v3401, %v3391
        %v3602 = vpack.c.b16 %v3402, %v3392
        %v3603 = vpack.c.b16 %v3403, %v3393
        %v3604 = vpack.c.b16 %v3404, %v3394
        %v3605 = vpack.c.b16 %v3405, %v3395
        %v3606 = vpack.c.b16 %v3406, %v3396
        %v3607 = vpack.c.b16 %v3417, %v3407
        %v3608 = vpack.c.b16 %v3418, %v3408
        %v3609 = vpack.c.b16 %v3419, %v3409
        %v3610 = vpack.c.b16 %v3420, %v3410
        %v3611 = vpack.c.b16 %v3421, %v3411
        %v3612 = vpack.c.b16 %v3422, %v3412
        %v3613 = vpack.c.b16 %v3423, %v3413
        %v3614 = vpack.c.b16 %v3424, %v3414
        %v3615 = vpack.c.b16 %v3425, %v3415
        %v3616 = vpack.c.b16 %v3426, %v3416
        %v3617 = vpack.c.b16 %v3437, %v3427
        %v3618 = vpack.c.b16 %v3438, %v3428
        %v3619 = vpack.c.b16 %v3439, %v3429
        %v3620 = vpack.c.b16 %v3440, %v3430
        %v3621 = vpack.c.b16 %v3441, %v3431
        %v3622 = vpack.c.b16 %v3442, %v3432
        %v3623 = vpack.c.b16 %v3443, %v3433
        %v3624 = vpack.c.b16 %v3444, %v3434
        %v3625 = vpack.c.b16 %v3445, %v3435
        %v3626 = vpack.c.b16 %v3446, %v3436
        %v3627 = vpack.c.b16 %v3457, %v3447
        %v3628 = vpack.c.b16 %v3458, %v3448
        %v3629 = vpack.c.b16 %v3459, %v3449
        %v3630 = vpack.c.b16 %v3460, %v3450
        %v3631 = vpack.c.b16 %v3461, %v3451
        %v3632 = vpack.c.b16 %v3462, %v3452
        %v3633 = vpack.c.b16 %v3463, %v3453
        %v3634 = vpack.c.b16 %v3464, %v3454
        %v3635 = vpack.c.b16 %v3465, %v3455
        %v3636 = vpack.c.b16 %v3466, %v3456
        %v3637 = vpack.c.b16 %v3477, %v3467
        %v3638 = vpack.c.b16 %v3478, %v3468
        %v3639 = vpack.c.b16 %v3479, %v3469
        %v3640 = vpack.c.b16 %v3480, %v3470
        %v3641 = vpack.c.b16 %v3481, %v3471
        %v3642 = vpack.c.b16 %v3482, %v3472
        %v3643 = vpack.c.b16 %v3483, %v3473
        %v3644 = vpack.c.b16 %v3484, %v3474
        %v3645 = vpack.c.b16 %v3485, %v3475
        %v3646 = vpack.c.b16 %v3486, %v3476
        %3807 = vmatpush.bf16.msra.mxu0 %v3557
        %3808 = vmatpush.bf16.msra.mxu0 %v3547
        %3809 = vmatpush.bf16.msra.mxu0 %v3537
        %3810 = vmatpush.bf16.msra.mxu0 %v3527
        %3811 = vmatpush.bf16.msra.mxu0 %v3517
        %3812 = vmatpush.bf16.msra.mxu0 %v3507
        %3813 = vmatpush.bf16.msra.mxu0 %v3497
        %3814 = vmatpush.bf16.msra.mxu0 %v3487
        %3815 = vmatmul.bf16.gmra.mxu0 %v3001
        %v3816 = vpop.f32.mrf.mxu0
        %v3817 = vadd.f32 0.0, %v3816
        %v3818 = vpop.f32.mrf.mxu0
        %v3819 = vadd.f32 0.0, %v3818
        %3820 = vdwg.mxu0
        %3821 = vmatpush.bf16.msra.mxu0 %v3637
        %3822 = vmatpush.bf16.msra.mxu0 %v3627
        %3823 = vmatpush.bf16.msra.mxu0 %v3617
        %3824 = vmatpush.bf16.msra.mxu0 %v3607
        %3825 = vmatpush.bf16.msra.mxu0 %v3597
        %3826 = vmatpush.bf16.msra.mxu0 %v3587
        %3827 = vmatpush.bf16.msra.mxu0 %v3577
        %3828 = vmatpush.bf16.msra.mxu0 %v3567
        %3829 = vmatmul.bf16.gmra.mxu0 %v3004
        %v3830 = vpop.f32.mrf.mxu0
        %v3831 = vadd.f32 %v3817, %v3830
        %v3832 = vpop.f32.mrf.mxu0
        %v3833 = vadd.f32 %v3819, %v3832
        %3834 = vdwg.mxu0
        %3835 = vmatpush.bf16.msra.mxu0 %v3558
        %3836 = vmatpush.bf16.msra.mxu0 %v3548
        %3837 = vmatpush.bf16.msra.mxu0 %v3538
        %3838 = vmatpush.bf16.msra.mxu0 %v3528
        %3839 = vmatpush.bf16.msra.mxu0 %v3518
        %3840 = vmatpush.bf16.msra.mxu0 %v3508
        %3841 = vmatpush.bf16.msra.mxu0 %v3498
        %3842 = vmatpush.bf16.msra.mxu0 %v3488
        %3843 = vmatmul.bf16.gmra.mxu0 %v3001
        %v3844 = vpop.f32.mrf.mxu0
        %v3845 = vadd.f32 0.0, %v3844
        %v3846 = vpop.f32.mrf.mxu0
        %v3847 = vadd.f32 0.0, %v3846
        %3848 = vdwg.mxu0
        %3849 = vmatpush.bf16.msra.mxu0 %v3638
        %3850 = vmatpush.bf16.msra.mxu0 %v3628
        %3851 = vmatpush.bf16.msra.mxu0 %v3618
        %3852 = vmatpush.bf16.msra.mxu0 %v3608
        %3853 = vmatpush.bf16.msra.mxu0 %v3598
        %3854 = vmatpush.bf16.msra.mxu0 %v3588
        %3855 = vmatpush.bf16.msra.mxu0 %v3578
        %3856 = vmatpush.bf16.msra.mxu0 %v3568
        %3857 = vmatmul.bf16.gmra.mxu0 %v3004
        %v3858 = vpop.f32.mrf.mxu0
        %v3859 = vadd.f32 %v3845, %v3858
        %v3860 = vpop.f32.mrf.mxu0
        %v3861 = vadd.f32 %v3847, %v3860
        %3862 = vdwg.mxu0
        %3863 = vmatpush.bf16.msra.mxu0 %v3559
        %3864 = vmatpush.bf16.msra.mxu0 %v3549
        %3865 = vmatpush.bf16.msra.mxu0 %v3539
        %3866 = vmatpush.bf16.msra.mxu0 %v3529
        %3867 = vmatpush.bf16.msra.mxu0 %v3519
        %3868 = vmatpush.bf16.msra.mxu0 %v3509
        %3869 = vmatpush.bf16.msra.mxu0 %v3499
        %3870 = vmatpush.bf16.msra.mxu0 %v3489
        %3871 = vmatmul.bf16.gmra.mxu0 %v3001
        %v3872 = vpop.f32.mrf.mxu0
        %v3873 = vadd.f32 0.0, %v3872
        %v3874 = vpop.f32.mrf.mxu0
        %v3875 = vadd.f32 0.0, %v3874
        %3876 = vdwg.mxu0
        %3877 = vmatpush.bf16.msra.mxu0 %v3639
        %3878 = vmatpush.bf16.msra.mxu0 %v3629
        %3879 = vmatpush.bf16.msra.mxu0 %v3619
        %3880 = vmatpush.bf16.msra.mxu0 %v3609
        %3881 = vmatpush.bf16.msra.mxu0 %v3599
        %3882 = vmatpush.bf16.msra.mxu0 %v3589
        %3883 = vmatpush.bf16.msra.mxu0 %v3579
        %3884 = vmatpush.bf16.msra.mxu0 %v3569
        %3885 = vmatmul.bf16.gmra.mxu0 %v3004
        %v3886 = vpop.f32.mrf.mxu0
        %v3887 = vadd.f32 %v3873, %v3886
        %v3888 = vpop.f32.mrf.mxu0
        %v3889 = vadd.f32 %v3875, %v3888
        %3890 = vdwg.mxu0
        %3891 = vmatpush.bf16.msra.mxu0 %v3560
        %3892 = vmatpush.bf16.msra.mxu0 %v3550
        %3893 = vmatpush.bf16.msra.mxu0 %v3540
        %3894 = vmatpush.bf16.msra.mxu0 %v3530
        %3895 = vmatpush.bf16.msra.mxu0 %v3520
        %3896 = vmatpush.bf16.msra.mxu0 %v3510
        %3897 = vmatpush.bf16.msra.mxu0 %v3500
        %3898 = vmatpush.bf16.msra.mxu0 %v3490
        %3899 = vmatmul.bf16.gmra.mxu0 %v3001
        %v3900 = vpop.f32.mrf.mxu0
        %v3901 = vadd.f32 0.0, %v3900
        %v3902 = vpop.f32.mrf.mxu0
        %v3903 = vadd.f32 0.0, %v3902
        %3904 = vdwg.mxu0
        %3905 = vmatpush.bf16.msra.mxu0 %v3640
        %3906 = vmatpush.bf16.msra.mxu0 %v3630
        %3907 = vmatpush.bf16.msra.mxu0 %v3620
        %3908 = vmatpush.bf16.msra.mxu0 %v3610
        %3909 = vmatpush.bf16.msra.mxu0 %v3600
        %3910 = vmatpush.bf16.msra.mxu0 %v3590
        %3911 = vmatpush.bf16.msra.mxu0 %v3580
        %3912 = vmatpush.bf16.msra.mxu0 %v3570
        %3913 = vmatmul.bf16.gmra.mxu0 %v3004
        %v3914 = vpop.f32.mrf.mxu0
        %v3915 = vadd.f32 %v3901, %v3914
        %v3916 = vpop.f32.mrf.mxu0
        %v3917 = vadd.f32 %v3903, %v3916
        %3918 = vdwg.mxu0
        %3919 = vmatpush.bf16.msra.mxu0 %v3561
        %3920 = vmatpush.bf16.msra.mxu0 %v3551
        %3921 = vmatpush.bf16.msra.mxu0 %v3541
        %3922 = vmatpush.bf16.msra.mxu0 %v3531
        %3923 = vmatpush.bf16.msra.mxu0 %v3521
        %3924 = vmatpush.bf16.msra.mxu0 %v3511
        %3925 = vmatpush.bf16.msra.mxu0 %v3501
        %3926 = vmatpush.bf16.msra.mxu0 %v3491
        %3927 = vmatmul.bf16.gmra.mxu0 %v3001
        %v3928 = vpop.f32.mrf.mxu0
        %v3929 = vadd.f32 0.0, %v3928
        %v3930 = vpop.f32.mrf.mxu0
        %v3931 = vadd.f32 0.0, %v3930
        %3932 = vdwg.mxu0
        %3933 = vmatpush.bf16.msra.mxu0 %v3641
        %3934 = vmatpush.bf16.msra.mxu0 %v3631
        %3935 = vmatpush.bf16.msra.mxu0 %v3621
        %3936 = vmatpush.bf16.msra.mxu0 %v3611
        %3937 = vmatpush.bf16.msra.mxu0 %v3601
        %3938 = vmatpush.bf16.msra.mxu0 %v3591
        %3939 = vmatpush.bf16.msra.mxu0 %v3581
        %3940 = vmatpush.bf16.msra.mxu0 %v3571
        %3941 = vmatmul.bf16.gmra.mxu0 %v3004
        %v3942 = vpop.f32.mrf.mxu0
        %v3943 = vadd.f32 %v3929, %v3942
        %v3944 = vpop.f32.mrf.mxu0
        %v3945 = vadd.f32 %v3931, %v3944
        %3946 = vdwg.mxu0
        %3947 = vmatpush.bf16.msra.mxu0 %v3562
        %3948 = vmatpush.bf16.msra.mxu0 %v3552
        %3949 = vmatpush.bf16.msra.mxu0 %v3542
        %3950 = vmatpush.bf16.msra.mxu0 %v3532
        %3951 = vmatpush.bf16.msra.mxu0 %v3522
        %3952 = vmatpush.bf16.msra.mxu0 %v3512
        %3953 = vmatpush.bf16.msra.mxu0 %v3502
        %3954 = vmatpush.bf16.msra.mxu0 %v3492
        %3955 = vmatmul.bf16.gmra.mxu0 %v3001
        %v3956 = vpop.f32.mrf.mxu0
        %v3957 = vadd.f32 0.0, %v3956
        %v3958 = vpop.f32.mrf.mxu0
        %v3959 = vadd.f32 0.0, %v3958
        %3960 = vdwg.mxu0
        %3961 = vmatpush.bf16.msra.mxu0 %v3642
        %3962 = vmatpush.bf16.msra.mxu0 %v3632
        %3963 = vmatpush.bf16.msra.mxu0 %v3622
        %3964 = vmatpush.bf16.msra.mxu0 %v3612
        %3965 = vmatpush.bf16.msra.mxu0 %v3602
        %3966 = vmatpush.bf16.msra.mxu0 %v3592
        %3967 = vmatpush.bf16.msra.mxu0 %v3582
        %3968 = vmatpush.bf16.msra.mxu0 %v3572
        %3969 = vmatmul.bf16.gmra.mxu0 %v3004
        %v3970 = vpop.f32.mrf.mxu0
        %v3971 = vadd.f32 %v3957, %v3970
        %v3972 = vpop.f32.mrf.mxu0
        %v3973 = vadd.f32 %v3959, %v3972
        %3974 = vdwg.mxu0
        %3975 = vmatpush.bf16.msra.mxu0 %v3563
        %3976 = vmatpush.bf16.msra.mxu0 %v3553
        %3977 = vmatpush.bf16.msra.mxu0 %v3543
        %3978 = vmatpush.bf16.msra.mxu0 %v3533
        %3979 = vmatpush.bf16.msra.mxu0 %v3523
        %3980 = vmatpush.bf16.msra.mxu0 %v3513
        %3981 = vmatpush.bf16.msra.mxu0 %v3503
        %3982 = vmatpush.bf16.msra.mxu0 %v3493
        %3983 = vmatmul.bf16.gmra.mxu0 %v3001
        %v3984 = vpop.f32.mrf.mxu0
        %v3985 = vadd.f32 0.0, %v3984
        %v3986 = vpop.f32.mrf.mxu0
        %v3987 = vadd.f32 0.0, %v3986
        %3988 = vdwg.mxu0
        %3989 = vmatpush.bf16.msra.mxu0 %v3643
        %3990 = vmatpush.bf16.msra.mxu0 %v3633
        %3991 = vmatpush.bf16.msra.mxu0 %v3623
        %3992 = vmatpush.bf16.msra.mxu0 %v3613
        %3993 = vmatpush.bf16.msra.mxu0 %v3603
        %3994 = vmatpush.bf16.msra.mxu0 %v3593
        %3995 = vmatpush.bf16.msra.mxu0 %v3583
        %3996 = vmatpush.bf16.msra.mxu0 %v3573
        %3997 = vmatmul.bf16.gmra.mxu0 %v3004
        %v3998 = vpop.f32.mrf.mxu0
        %v3999 = vadd.f32 %v3985, %v3998
        %v4000 = vpop.f32.mrf.mxu0
        %v4001 = vadd.f32 %v3987, %v4000
        %4002 = vdwg.mxu0
        %4003 = vmatpush.bf16.msra.mxu0 %v3564
        %4004 = vmatpush.bf16.msra.mxu0 %v3554
        %4005 = vmatpush.bf16.msra.mxu0 %v3544
        %4006 = vmatpush.bf16.msra.mxu0 %v3534
        %4007 = vmatpush.bf16.msra.mxu0 %v3524
        %4008 = vmatpush.bf16.msra.mxu0 %v3514
        %4009 = vmatpush.bf16.msra.mxu0 %v3504
        %4010 = vmatpush.bf16.msra.mxu0 %v3494
        %4011 = vmatmul.bf16.gmra.mxu0 %v3001
        %v4012 = vpop.f32.mrf.mxu0
        %v4013 = vadd.f32 0.0, %v4012
        %v4014 = vpop.f32.mrf.mxu0
        %v4015 = vadd.f32 0.0, %v4014
        %4016 = vdwg.mxu0
        %4017 = vmatpush.bf16.msra.mxu0 %v3644
        %4018 = vmatpush.bf16.msra.mxu0 %v3634
        %4019 = vmatpush.bf16.msra.mxu0 %v3624
        %4020 = vmatpush.bf16.msra.mxu0 %v3614
        %4021 = vmatpush.bf16.msra.mxu0 %v3604
        %4022 = vmatpush.bf16.msra.mxu0 %v3594
        %4023 = vmatpush.bf16.msra.mxu0 %v3584
        %4024 = vmatpush.bf16.msra.mxu0 %v3574
        %4025 = vmatmul.bf16.gmra.mxu0 %v3004
        %v4026 = vpop.f32.mrf.mxu0
        %v4027 = vadd.f32 %v4013, %v4026
        %v4028 = vpop.f32.mrf.mxu0
        %v4029 = vadd.f32 %v4015, %v4028
        %4030 = vdwg.mxu0
        %4031 = vmatpush.bf16.msra.mxu0 %v3565
        %4032 = vmatpush.bf16.msra.mxu0 %v3555
        %4033 = vmatpush.bf16.msra.mxu0 %v3545
        %4034 = vmatpush.bf16.msra.mxu0 %v3535
        %4035 = vmatpush.bf16.msra.mxu0 %v3525
        %4036 = vmatpush.bf16.msra.mxu0 %v3515
        %4037 = vmatpush.bf16.msra.mxu0 %v3505
        %4038 = vmatpush.bf16.msra.mxu0 %v3495
        %4039 = vmatmul.bf16.gmra.mxu0 %v3001
        %v4040 = vpop.f32.mrf.mxu0
        %v4041 = vadd.f32 0.0, %v4040
        %v4042 = vpop.f32.mrf.mxu0
        %v4043 = vadd.f32 0.0, %v4042
        %4044 = vdwg.mxu0
        %4045 = vmatpush.bf16.msra.mxu0 %v3645
        %4046 = vmatpush.bf16.msra.mxu0 %v3635
        %4047 = vmatpush.bf16.msra.mxu0 %v3625
        %4048 = vmatpush.bf16.msra.mxu0 %v3615
        %4049 = vmatpush.bf16.msra.mxu0 %v3605
        %4050 = vmatpush.bf16.msra.mxu0 %v3595
        %4051 = vmatpush.bf16.msra.mxu0 %v3585
        %4052 = vmatpush.bf16.msra.mxu0 %v3575
        %4053 = vmatmul.bf16.gmra.mxu0 %v3004
        %v4054 = vpop.f32.mrf.mxu0
        %v4055 = vadd.f32 %v4041, %v4054
        %v4056 = vpop.f32.mrf.mxu0
        %v4057 = vadd.f32 %v4043, %v4056
        %4058 = vdwg.mxu0
        %4059 = vmatpush.bf16.msra.mxu0 %v3566
        %4060 = vmatpush.bf16.msra.mxu0 %v3556
        %4061 = vmatpush.bf16.msra.mxu0 %v3546
        %4062 = vmatpush.bf16.msra.mxu0 %v3536
        %4063 = vmatpush.bf16.msra.mxu0 %v3526
        %4064 = vmatpush.bf16.msra.mxu0 %v3516
        %4065 = vmatpush.bf16.msra.mxu0 %v3506
        %4066 = vmatpush.bf16.msra.mxu0 %v3496
        %4067 = vmatmul.bf16.gmra.mxu0 %v3001
        %v4068 = vpop.f32.mrf.mxu0
        %v4069 = vadd.f32 0.0, %v4068
        %v4070 = vpop.f32.mrf.mxu0
        %v4071 = vadd.f32 0.0, %v4070
        %4072 = vdwg.mxu0
        %4073 = vmatpush.bf16.msra.mxu0 %v3646
        %4074 = vmatpush.bf16.msra.mxu0 %v3636
        %4075 = vmatpush.bf16.msra.mxu0 %v3626
        %4076 = vmatpush.bf16.msra.mxu0 %v3616
        %4077 = vmatpush.bf16.msra.mxu0 %v3606
        %4078 = vmatpush.bf16.msra.mxu0 %v3596
        %4079 = vmatpush.bf16.msra.mxu0 %v3586
        %4080 = vmatpush.bf16.msra.mxu0 %v3576
        %4081 = vmatmul.bf16.gmra.mxu0 %v3004
        %v4082 = vpop.f32.mrf.mxu0
        %v4083 = vadd.f32 %v4069, %v4082
        %v4084 = vpop.f32.mrf.mxu0
        %v4085 = vadd.f32 %v4071, %v4084
        %4086 = vdwg.mxu0
        %v4087 = vadd.f32 %v2578, %v3831
        %v4088 = vadd.f32 %v2606, %v3859
        %v4089 = vadd.f32 %v2634, %v3887
        %v4090 = vadd.f32 %v2662, %v3915
        %v4091 = vadd.f32 %v2690, %v3943
        %v4092 = vadd.f32 %v2718, %v3971
        %v4093 = vadd.f32 %v2746, %v3999
        %v4094 = vadd.f32 %v2774, %v4027
        %v4095 = vadd.f32 %v2802, %v4055
        %v4096 = vadd.f32 %v2830, %v4083
        %v4097 = vadd.f32 %v2580, %v3833
        %v4098 = vadd.f32 %v2608, %v3861
        %v4099 = vadd.f32 %v2636, %v3889
        %v4100 = vadd.f32 %v2664, %v3917
        %v4101 = vadd.f32 %v2692, %v3945
        %v4102 = vadd.f32 %v2720, %v3973
        %v4103 = vadd.f32 %v2748, %v4001
        %v4104 = vadd.f32 %v2776, %v4029
        %v4105 = vadd.f32 %v2804, %v4057
        %v4106 = vadd.f32 %v2832, %v4085
        %v4107 = vld [vmem:[#allocation2 + $0xf00] sm:$0xff]
        %v4108 = vld [vmem:[#allocation2 + $0xf08] sm:$0xff]
        %v4109 = vld [vmem:[#allocation2 + $0xf10] sm:$0xff]
        %v4110 = vld [vmem:[#allocation2 + $0xf18] sm:$0xff]
        %v4111 = vld [vmem:[#allocation2 + $0xf20] sm:$0xff]
        %v4112 = vld [vmem:[#allocation2 + $0xf28] sm:$0xff]
        %v4113 = vld [vmem:[#allocation2 + $0xf30] sm:$0xff]
        %v4114 = vld [vmem:[#allocation2 + $0xf38] sm:$0xff]
        %v4115 = vld [vmem:[#allocation2 + $0xf40] sm:$0xff]
        %v4116 = vld [vmem:[#allocation2 + $0xf48] sm:$0xff]
        %v4117 = vld [vmem:[#allocation2 + $0xf50] sm:$0xff]
        %v4118 = vld [vmem:[#allocation2 + $0xf58] sm:$0xff]
        %v4119 = vld [vmem:[#allocation2 + $0xf60] sm:$0xff]
        %v4120 = vld [vmem:[#allocation2 + $0xf68] sm:$0xff]
        %v4121 = vld [vmem:[#allocation2 + $0xf70] sm:$0xff]
        %v4122 = vld [vmem:[#allocation2 + $0xf78] sm:$0xff]
        %v4123 = vld [vmem:[#allocation2 + $0xf80] sm:$0xff]
        %v4124 = vld [vmem:[#allocation2 + $0xf88] sm:$0xff]
        %v4125 = vld [vmem:[#allocation2 + $0xf90] sm:$0xff]
        %v4126 = vld [vmem:[#allocation2 + $0xf98] sm:$0xff]
        %v4127 = vld [vmem:[#allocation2 + $0xfa0] sm:$0xff]
        %v4128 = vld [vmem:[#allocation2 + $0xfa8] sm:$0xff]
        %v4129 = vld [vmem:[#allocation2 + $0xfb0] sm:$0xff]
        %v4130 = vld [vmem:[#allocation2 + $0xfb8] sm:$0xff]
        %v4131 = vld [vmem:[#allocation2 + $0xfc0] sm:$0xff]
        %v4132 = vld [vmem:[#allocation2 + $0xfc8] sm:$0xff]
        %v4133 = vld [vmem:[#allocation2 + $0xfd0] sm:$0xff]
        %v4134 = vld [vmem:[#allocation2 + $0xfd8] sm:$0xff]
        %v4135 = vld [vmem:[#allocation2 + $0xfe0] sm:$0xff]
        %v4136 = vld [vmem:[#allocation2 + $0xfe8] sm:$0xff]
        %v4137 = vld [vmem:[#allocation2 + $0xff0] sm:$0xff]
        %v4138 = vld [vmem:[#allocation2 + $0xff8] sm:$0xff]
        %v4139 = vld [vmem:[#allocation2 + $0x1000] sm:$0xff]
        %v4140 = vld [vmem:[#allocation2 + $0x1008] sm:$0xff]
        %v4141 = vld [vmem:[#allocation2 + $0x1010] sm:$0xff]
        %v4142 = vld [vmem:[#allocation2 + $0x1018] sm:$0xff]
        %v4143 = vld [vmem:[#allocation2 + $0x1020] sm:$0xff]
        %v4144 = vld [vmem:[#allocation2 + $0x1028] sm:$0xff]
        %v4145 = vld [vmem:[#allocation2 + $0x1030] sm:$0xff]
        %v4146 = vld [vmem:[#allocation2 + $0x1038] sm:$0xff]
        %v4147 = vld [vmem:[#allocation2 + $0x1040] sm:$0xff]
        %v4148 = vld [vmem:[#allocation2 + $0x1048] sm:$0xff]
        %v4149 = vld [vmem:[#allocation2 + $0x1050] sm:$0xff]
        %v4150 = vld [vmem:[#allocation2 + $0x1058] sm:$0xff]
        %v4151 = vld [vmem:[#allocation2 + $0x1060] sm:$0xff]
        %v4152 = vld [vmem:[#allocation2 + $0x1068] sm:$0xff]
        %v4153 = vld [vmem:[#allocation2 + $0x1070] sm:$0xff]
        %v4154 = vld [vmem:[#allocation2 + $0x1078] sm:$0xff]
        %v4155 = vld [vmem:[#allocation2 + $0x1080] sm:$0xff]
        %v4156 = vld [vmem:[#allocation2 + $0x1088] sm:$0xff]
        %v4157 = vld [vmem:[#allocation2 + $0x1090] sm:$0xff]
        %v4158 = vld [vmem:[#allocation2 + $0x1098] sm:$0xff]
        %v4159 = vld [vmem:[#allocation2 + $0x10a0] sm:$0xff]
        %v4160 = vld [vmem:[#allocation2 + $0x10a8] sm:$0xff]
        %v4161 = vld [vmem:[#allocation2 + $0x10b0] sm:$0xff]
        %v4162 = vld [vmem:[#allocation2 + $0x10b8] sm:$0xff]
        %v4163 = vld [vmem:[#allocation2 + $0x10c0] sm:$0xff]
        %v4164 = vld [vmem:[#allocation2 + $0x10c8] sm:$0xff]
        %v4165 = vld [vmem:[#allocation2 + $0x10d0] sm:$0xff]
        %v4166 = vld [vmem:[#allocation2 + $0x10d8] sm:$0xff]
        %v4167 = vld [vmem:[#allocation2 + $0x10e0] sm:$0xff]
        %v4168 = vld [vmem:[#allocation2 + $0x10e8] sm:$0xff]
        %v4169 = vld [vmem:[#allocation2 + $0x10f0] sm:$0xff]
        %v4170 = vld [vmem:[#allocation2 + $0x10f8] sm:$0xff]
        %v4171 = vld [vmem:[#allocation2 + $0x1100] sm:$0xff]
        %v4172 = vld [vmem:[#allocation2 + $0x1108] sm:$0xff]
        %v4173 = vld [vmem:[#allocation2 + $0x1110] sm:$0xff]
        %v4174 = vld [vmem:[#allocation2 + $0x1118] sm:$0xff]
        %v4175 = vld [vmem:[#allocation2 + $0x1120] sm:$0xff]
        %v4176 = vld [vmem:[#allocation2 + $0x1128] sm:$0xff]
        %v4177 = vld [vmem:[#allocation2 + $0x1130] sm:$0xff]
        %v4178 = vld [vmem:[#allocation2 + $0x1138] sm:$0xff]
        %v4179 = vld [vmem:[#allocation2 + $0x1140] sm:$0xff]
        %v4180 = vld [vmem:[#allocation2 + $0x1148] sm:$0xff]
        %v4181 = vld [vmem:[#allocation2 + $0x1150] sm:$0xff]
        %v4182 = vld [vmem:[#allocation2 + $0x1158] sm:$0xff]
        %v4183 = vld [vmem:[#allocation2 + $0x1160] sm:$0xff]
        %v4184 = vld [vmem:[#allocation2 + $0x1168] sm:$0xff]
        %v4185 = vld [vmem:[#allocation2 + $0x1170] sm:$0xff]
        %v4186 = vld [vmem:[#allocation2 + $0x1178] sm:$0xff]
        %v4187 = vld [vmem:[#allocation2 + $0x1180] sm:$0xff]
        %v4188 = vld [vmem:[#allocation2 + $0x1188] sm:$0xff]
        %v4189 = vld [vmem:[#allocation2 + $0x1190] sm:$0xff]
        %v4190 = vld [vmem:[#allocation2 + $0x1198] sm:$0xff]
        %v4191 = vld [vmem:[#allocation2 + $0x11a0] sm:$0xff]
        %v4192 = vld [vmem:[#allocation2 + $0x11a8] sm:$0xff]
        %v4193 = vld [vmem:[#allocation2 + $0x11b0] sm:$0xff]
        %v4194 = vld [vmem:[#allocation2 + $0x11b8] sm:$0xff]
        %v4195 = vld [vmem:[#allocation2 + $0x11c0] sm:$0xff]
        %v4196 = vld [vmem:[#allocation2 + $0x11c8] sm:$0xff]
        %v4197 = vld [vmem:[#allocation2 + $0x11d0] sm:$0xff]
        %v4198 = vld [vmem:[#allocation2 + $0x11d8] sm:$0xff]
        %v4199 = vld [vmem:[#allocation2 + $0x11e0] sm:$0xff]
        %v4200 = vld [vmem:[#allocation2 + $0x11e8] sm:$0xff]
        %v4201 = vld [vmem:[#allocation2 + $0x11f0] sm:$0xff]
        %v4202 = vld [vmem:[#allocation2 + $0x11f8] sm:$0xff]
        %v4203 = vld [vmem:[#allocation2 + $0x1200] sm:$0xff]
        %v4204 = vld [vmem:[#allocation2 + $0x1208] sm:$0xff]
        %v4205 = vld [vmem:[#allocation2 + $0x1210] sm:$0xff]
        %v4206 = vld [vmem:[#allocation2 + $0x1218] sm:$0xff]
        %v4207 = vld [vmem:[#allocation2 + $0x1220] sm:$0xff]
        %v4208 = vld [vmem:[#allocation2 + $0x1228] sm:$0xff]
        %v4209 = vld [vmem:[#allocation2 + $0x1230] sm:$0xff]
        %v4210 = vld [vmem:[#allocation2 + $0x1238] sm:$0xff]
        %v4211 = vld [vmem:[#allocation2 + $0x1240] sm:$0xff]
        %v4212 = vld [vmem:[#allocation2 + $0x1248] sm:$0xff]
        %v4213 = vld [vmem:[#allocation2 + $0x1250] sm:$0xff]
        %v4214 = vld [vmem:[#allocation2 + $0x1258] sm:$0xff]
        %v4215 = vld [vmem:[#allocation2 + $0x1260] sm:$0xff]
        %v4216 = vld [vmem:[#allocation2 + $0x1268] sm:$0xff]
        %v4217 = vld [vmem:[#allocation2 + $0x1270] sm:$0xff]
        %v4218 = vld [vmem:[#allocation2 + $0x1278] sm:$0xff]
        %v4219 = vld [vmem:[#allocation2 + $0x1280] sm:$0xff]
        %v4220 = vld [vmem:[#allocation2 + $0x1288] sm:$0xff]
        %v4221 = vld [vmem:[#allocation2 + $0x1290] sm:$0xff]
        %v4222 = vld [vmem:[#allocation2 + $0x1298] sm:$0xff]
        %v4223 = vld [vmem:[#allocation2 + $0x12a0] sm:$0xff]
        %v4224 = vld [vmem:[#allocation2 + $0x12a8] sm:$0xff]
        %v4225 = vld [vmem:[#allocation2 + $0x12b0] sm:$0xff]
        %v4226 = vld [vmem:[#allocation2 + $0x12b8] sm:$0xff]
        %v4227 = vld [vmem:[#allocation2 + $0x12c0] sm:$0xff]
        %v4228 = vld [vmem:[#allocation2 + $0x12c8] sm:$0xff]
        %v4229 = vld [vmem:[#allocation2 + $0x12d0] sm:$0xff]
        %v4230 = vld [vmem:[#allocation2 + $0x12d8] sm:$0xff]
        %v4231 = vld [vmem:[#allocation2 + $0x12e0] sm:$0xff]
        %v4232 = vld [vmem:[#allocation2 + $0x12e8] sm:$0xff]
        %v4233 = vld [vmem:[#allocation2 + $0x12f0] sm:$0xff]
        %v4234 = vld [vmem:[#allocation2 + $0x12f8] sm:$0xff]
        %v4235 = vld [vmem:[#allocation2 + $0x1300] sm:$0xff]
        %v4236 = vld [vmem:[#allocation2 + $0x1308] sm:$0xff]
        %v4237 = vld [vmem:[#allocation2 + $0x1310] sm:$0xff]
        %v4238 = vld [vmem:[#allocation2 + $0x1318] sm:$0xff]
        %v4239 = vld [vmem:[#allocation2 + $0x1320] sm:$0xff]
        %v4240 = vld [vmem:[#allocation2 + $0x1328] sm:$0xff]
        %v4241 = vld [vmem:[#allocation2 + $0x1330] sm:$0xff]
        %v4242 = vld [vmem:[#allocation2 + $0x1338] sm:$0xff]
        %v4243 = vld [vmem:[#allocation2 + $0x1340] sm:$0xff]
        %v4244 = vld [vmem:[#allocation2 + $0x1348] sm:$0xff]
        %v4245 = vld [vmem:[#allocation2 + $0x1350] sm:$0xff]
        %v4246 = vld [vmem:[#allocation2 + $0x1358] sm:$0xff]
        %v4247 = vld [vmem:[#allocation2 + $0x1360] sm:$0xff]
        %v4248 = vld [vmem:[#allocation2 + $0x1368] sm:$0xff]
        %v4249 = vld [vmem:[#allocation2 + $0x1370] sm:$0xff]
        %v4250 = vld [vmem:[#allocation2 + $0x1378] sm:$0xff]
        %v4251 = vld [vmem:[#allocation2 + $0x1380] sm:$0xff]
        %v4252 = vld [vmem:[#allocation2 + $0x1388] sm:$0xff]
        %v4253 = vld [vmem:[#allocation2 + $0x1390] sm:$0xff]
        %v4254 = vld [vmem:[#allocation2 + $0x1398] sm:$0xff]
        %v4255 = vld [vmem:[#allocation2 + $0x13a0] sm:$0xff]
        %v4256 = vld [vmem:[#allocation2 + $0x13a8] sm:$0xff]
        %v4257 = vld [vmem:[#allocation2 + $0x13b0] sm:$0xff]
        %v4258 = vld [vmem:[#allocation2 + $0x13b8] sm:$0xff]
        %v4259 = vld [vmem:[#allocation2 + $0x13c0] sm:$0xff]
        %v4260 = vld [vmem:[#allocation2 + $0x13c8] sm:$0xff]
        %v4261 = vld [vmem:[#allocation2 + $0x13d0] sm:$0xff]
        %v4262 = vld [vmem:[#allocation2 + $0x13d8] sm:$0xff]
        %v4263 = vld [vmem:[#allocation2 + $0x13e0] sm:$0xff]
        %v4264 = vld [vmem:[#allocation2 + $0x13e8] sm:$0xff]
        %v4265 = vld [vmem:[#allocation2 + $0x13f0] sm:$0xff]
        %v4266 = vld [vmem:[#allocation2 + $0x13f8] sm:$0xff]
        %vm4267 = vsmask.f32 6400
        %v4268 = vrot.slane %v649, 1
        %v4269 = vrot.slane %v651, 2
        %v4270 = vor.u32 %v4268, %v4269
        %v4271 = vshrl.u32 %v485, 16
        %v4273 = vrot.slane %v4271, 1
        %v4274 = vrot.slane %v656, 2
        %v4275 = vor.u32 %v4273, %v4274
        %v4276 = vsel %vm4267, %v4270, %v4275
        %v4277 = vrot.slane %v661, 1
        %v4278 = vrot.slane %v663, 2
        %v4279 = vor.u32 %v4277, %v4278
        %v4280 = vshrl.u32 %v486, 16
        %v4282 = vrot.slane %v4280, 1
        %v4283 = vrot.slane %v668, 2
        %v4284 = vor.u32 %v4282, %v4283
        %v4285 = vsel %vm4267, %v4279, %v4284
        %v4448 = vunpack.c.l.b16 %v4107
        %v4449 = vunpack.c.h.b16 %v4107
        %v4450 = vunpack.c.l.b16 %v4108
        %v4451 = vunpack.c.h.b16 %v4108
        %v4452 = vunpack.c.l.b16 %v4109
        %v4453 = vunpack.c.h.b16 %v4109
        %v4454 = vunpack.c.l.b16 %v4110
        %v4455 = vunpack.c.h.b16 %v4110
        %v4456 = vunpack.c.l.b16 %v4111
        %v4457 = vunpack.c.h.b16 %v4111
        %v4458 = vunpack.c.l.b16 %v4112
        %v4459 = vunpack.c.h.b16 %v4112
        %v4460 = vunpack.c.l.b16 %v4113
        %v4461 = vunpack.c.h.b16 %v4113
        %v4462 = vunpack.c.l.b16 %v4114
        %v4463 = vunpack.c.h.b16 %v4114
        %v4464 = vunpack.c.l.b16 %v4115
        %v4465 = vunpack.c.h.b16 %v4115
        %v4466 = vunpack.c.l.b16 %v4116
        %v4467 = vunpack.c.h.b16 %v4116
        %v4468 = vunpack.c.l.b16 %v4117
        %v4469 = vunpack.c.h.b16 %v4117
        %v4470 = vunpack.c.l.b16 %v4118
        %v4471 = vunpack.c.h.b16 %v4118
        %v4472 = vunpack.c.l.b16 %v4119
        %v4473 = vunpack.c.h.b16 %v4119
        %v4474 = vunpack.c.l.b16 %v4120
        %v4475 = vunpack.c.h.b16 %v4120
        %v4476 = vunpack.c.l.b16 %v4121
        %v4477 = vunpack.c.h.b16 %v4121
        %v4478 = vunpack.c.l.b16 %v4122
        %v4479 = vunpack.c.h.b16 %v4122
        %v4480 = vunpack.c.l.b16 %v4123
        %v4481 = vunpack.c.h.b16 %v4123
        %v4482 = vunpack.c.l.b16 %v4124
        %v4483 = vunpack.c.h.b16 %v4124
        %v4484 = vunpack.c.l.b16 %v4125
        %v4485 = vunpack.c.h.b16 %v4125
        %v4486 = vunpack.c.l.b16 %v4126
        %v4487 = vunpack.c.h.b16 %v4126
        %v4488 = vunpack.c.l.b16 %v4127
        %v4489 = vunpack.c.h.b16 %v4127
        %v4490 = vunpack.c.l.b16 %v4128
        %v4491 = vunpack.c.h.b16 %v4128
        %v4492 = vunpack.c.l.b16 %v4129
        %v4493 = vunpack.c.h.b16 %v4129
        %v4494 = vunpack.c.l.b16 %v4130
        %v4495 = vunpack.c.h.b16 %v4130
        %v4496 = vunpack.c.l.b16 %v4131
        %v4497 = vunpack.c.h.b16 %v4131
        %v4498 = vunpack.c.l.b16 %v4132
        %v4499 = vunpack.c.h.b16 %v4132
        %v4500 = vunpack.c.l.b16 %v4133
        %v4501 = vunpack.c.h.b16 %v4133
        %v4502 = vunpack.c.l.b16 %v4134
        %v4503 = vunpack.c.h.b16 %v4134
        %v4504 = vunpack.c.l.b16 %v4135
        %v4505 = vunpack.c.h.b16 %v4135
        %v4506 = vunpack.c.l.b16 %v4136
        %v4507 = vunpack.c.h.b16 %v4136
        %v4508 = vunpack.c.l.b16 %v4137
        %v4509 = vunpack.c.h.b16 %v4137
        %v4510 = vunpack.c.l.b16 %v4138
        %v4511 = vunpack.c.h.b16 %v4138
        %v4512 = vunpack.c.l.b16 %v4139
        %v4513 = vunpack.c.h.b16 %v4139
        %v4514 = vunpack.c.l.b16 %v4140
        %v4515 = vunpack.c.h.b16 %v4140
        %v4516 = vunpack.c.l.b16 %v4141
        %v4517 = vunpack.c.h.b16 %v4141
        %v4518 = vunpack.c.l.b16 %v4142
        %v4519 = vunpack.c.h.b16 %v4142
        %v4520 = vunpack.c.l.b16 %v4143
        %v4521 = vunpack.c.h.b16 %v4143
        %v4522 = vunpack.c.l.b16 %v4144
        %v4523 = vunpack.c.h.b16 %v4144
        %v4524 = vunpack.c.l.b16 %v4145
        %v4525 = vunpack.c.h.b16 %v4145
        %v4526 = vunpack.c.l.b16 %v4146
        %v4527 = vunpack.c.h.b16 %v4146
        %v4528 = vunpack.c.l.b16 %v4147
        %v4529 = vunpack.c.h.b16 %v4147
        %v4530 = vunpack.c.l.b16 %v4148
        %v4531 = vunpack.c.h.b16 %v4148
        %v4532 = vunpack.c.l.b16 %v4149
        %v4533 = vunpack.c.h.b16 %v4149
        %v4534 = vunpack.c.l.b16 %v4150
        %v4535 = vunpack.c.h.b16 %v4150
        %v4536 = vunpack.c.l.b16 %v4151
        %v4537 = vunpack.c.h.b16 %v4151
        %v4538 = vunpack.c.l.b16 %v4152
        %v4539 = vunpack.c.h.b16 %v4152
        %v4540 = vunpack.c.l.b16 %v4153
        %v4541 = vunpack.c.h.b16 %v4153
        %v4542 = vunpack.c.l.b16 %v4154
        %v4543 = vunpack.c.h.b16 %v4154
        %v4544 = vunpack.c.l.b16 %v4155
        %v4545 = vunpack.c.h.b16 %v4155
        %v4546 = vunpack.c.l.b16 %v4156
        %v4547 = vunpack.c.h.b16 %v4156
        %v4548 = vunpack.c.l.b16 %v4157
        %v4549 = vunpack.c.h.b16 %v4157
        %v4550 = vunpack.c.l.b16 %v4158
        %v4551 = vunpack.c.h.b16 %v4158
        %v4552 = vunpack.c.l.b16 %v4159
        %v4553 = vunpack.c.h.b16 %v4159
        %v4554 = vunpack.c.l.b16 %v4160
        %v4555 = vunpack.c.h.b16 %v4160
        %v4556 = vunpack.c.l.b16 %v4161
        %v4557 = vunpack.c.h.b16 %v4161
        %v4558 = vunpack.c.l.b16 %v4162
        %v4559 = vunpack.c.h.b16 %v4162
        %v4560 = vunpack.c.l.b16 %v4163
        %v4561 = vunpack.c.h.b16 %v4163
        %v4562 = vunpack.c.l.b16 %v4164
        %v4563 = vunpack.c.h.b16 %v4164
        %v4564 = vunpack.c.l.b16 %v4165
        %v4565 = vunpack.c.h.b16 %v4165
        %v4566 = vunpack.c.l.b16 %v4166
        %v4567 = vunpack.c.h.b16 %v4166
        %v4568 = vunpack.c.l.b16 %v4167
        %v4569 = vunpack.c.h.b16 %v4167
        %v4570 = vunpack.c.l.b16 %v4168
        %v4571 = vunpack.c.h.b16 %v4168
        %v4572 = vunpack.c.l.b16 %v4169
        %v4573 = vunpack.c.h.b16 %v4169
        %v4574 = vunpack.c.l.b16 %v4170
        %v4575 = vunpack.c.h.b16 %v4170
        %v4576 = vunpack.c.l.b16 %v4171
        %v4577 = vunpack.c.h.b16 %v4171
        %v4578 = vunpack.c.l.b16 %v4172
        %v4579 = vunpack.c.h.b16 %v4172
        %v4580 = vunpack.c.l.b16 %v4173
        %v4581 = vunpack.c.h.b16 %v4173
        %v4582 = vunpack.c.l.b16 %v4174
        %v4583 = vunpack.c.h.b16 %v4174
        %v4584 = vunpack.c.l.b16 %v4175
        %v4585 = vunpack.c.h.b16 %v4175
        %v4586 = vunpack.c.l.b16 %v4176
        %v4587 = vunpack.c.h.b16 %v4176
        %v4588 = vunpack.c.l.b16 %v4177
        %v4589 = vunpack.c.h.b16 %v4177
        %v4590 = vunpack.c.l.b16 %v4178
        %v4591 = vunpack.c.h.b16 %v4178
        %v4592 = vunpack.c.l.b16 %v4179
        %v4593 = vunpack.c.h.b16 %v4179
        %v4594 = vunpack.c.l.b16 %v4180
        %v4595 = vunpack.c.h.b16 %v4180
        %v4596 = vunpack.c.l.b16 %v4181
        %v4597 = vunpack.c.h.b16 %v4181
        %v4598 = vunpack.c.l.b16 %v4182
        %v4599 = vunpack.c.h.b16 %v4182
        %v4600 = vunpack.c.l.b16 %v4183
        %v4601 = vunpack.c.h.b16 %v4183
        %v4602 = vunpack.c.l.b16 %v4184
        %v4603 = vunpack.c.h.b16 %v4184
        %v4604 = vunpack.c.l.b16 %v4185
        %v4605 = vunpack.c.h.b16 %v4185
        %v4606 = vunpack.c.l.b16 %v4186
        %v4607 = vunpack.c.h.b16 %v4186
        %v4608 = vunpack.c.l.b16 %v4187
        %v4609 = vunpack.c.h.b16 %v4187
        %v4610 = vunpack.c.l.b16 %v4188
        %v4611 = vunpack.c.h.b16 %v4188
        %v4612 = vunpack.c.l.b16 %v4189
        %v4613 = vunpack.c.h.b16 %v4189
        %v4614 = vunpack.c.l.b16 %v4190
        %v4615 = vunpack.c.h.b16 %v4190
        %v4616 = vunpack.c.l.b16 %v4191
        %v4617 = vunpack.c.h.b16 %v4191
        %v4618 = vunpack.c.l.b16 %v4192
        %v4619 = vunpack.c.h.b16 %v4192
        %v4620 = vunpack.c.l.b16 %v4193
        %v4621 = vunpack.c.h.b16 %v4193
        %v4622 = vunpack.c.l.b16 %v4194
        %v4623 = vunpack.c.h.b16 %v4194
        %v4624 = vunpack.c.l.b16 %v4195
        %v4625 = vunpack.c.h.b16 %v4195
        %v4626 = vunpack.c.l.b16 %v4196
        %v4627 = vunpack.c.h.b16 %v4196
        %v4628 = vunpack.c.l.b16 %v4197
        %v4629 = vunpack.c.h.b16 %v4197
        %v4630 = vunpack.c.l.b16 %v4198
        %v4631 = vunpack.c.h.b16 %v4198
        %v4632 = vunpack.c.l.b16 %v4199
        %v4633 = vunpack.c.h.b16 %v4199
        %v4634 = vunpack.c.l.b16 %v4200
        %v4635 = vunpack.c.h.b16 %v4200
        %v4636 = vunpack.c.l.b16 %v4201
        %v4637 = vunpack.c.h.b16 %v4201
        %v4638 = vunpack.c.l.b16 %v4202
        %v4639 = vunpack.c.h.b16 %v4202
        %v4640 = vunpack.c.l.b16 %v4203
        %v4641 = vunpack.c.h.b16 %v4203
        %v4642 = vunpack.c.l.b16 %v4204
        %v4643 = vunpack.c.h.b16 %v4204
        %v4644 = vunpack.c.l.b16 %v4205
        %v4645 = vunpack.c.h.b16 %v4205
        %v4646 = vunpack.c.l.b16 %v4206
        %v4647 = vunpack.c.h.b16 %v4206
        %v4648 = vunpack.c.l.b16 %v4207
        %v4649 = vunpack.c.h.b16 %v4207
        %v4650 = vunpack.c.l.b16 %v4208
        %v4651 = vunpack.c.h.b16 %v4208
        %v4652 = vunpack.c.l.b16 %v4209
        %v4653 = vunpack.c.h.b16 %v4209
        %v4654 = vunpack.c.l.b16 %v4210
        %v4655 = vunpack.c.h.b16 %v4210
        %v4656 = vunpack.c.l.b16 %v4211
        %v4657 = vunpack.c.h.b16 %v4211
        %v4658 = vunpack.c.l.b16 %v4212
        %v4659 = vunpack.c.h.b16 %v4212
        %v4660 = vunpack.c.l.b16 %v4213
        %v4661 = vunpack.c.h.b16 %v4213
        %v4662 = vunpack.c.l.b16 %v4214
        %v4663 = vunpack.c.h.b16 %v4214
        %v4664 = vunpack.c.l.b16 %v4215
        %v4665 = vunpack.c.h.b16 %v4215
        %v4666 = vunpack.c.l.b16 %v4216
        %v4667 = vunpack.c.h.b16 %v4216
        %v4668 = vunpack.c.l.b16 %v4217
        %v4669 = vunpack.c.h.b16 %v4217
        %v4670 = vunpack.c.l.b16 %v4218
        %v4671 = vunpack.c.h.b16 %v4218
        %v4672 = vunpack.c.l.b16 %v4219
        %v4673 = vunpack.c.h.b16 %v4219
        %v4674 = vunpack.c.l.b16 %v4220
        %v4675 = vunpack.c.h.b16 %v4220
        %v4676 = vunpack.c.l.b16 %v4221
        %v4677 = vunpack.c.h.b16 %v4221
        %v4678 = vunpack.c.l.b16 %v4222
        %v4679 = vunpack.c.h.b16 %v4222
        %v4680 = vunpack.c.l.b16 %v4223
        %v4681 = vunpack.c.h.b16 %v4223
        %v4682 = vunpack.c.l.b16 %v4224
        %v4683 = vunpack.c.h.b16 %v4224
        %v4684 = vunpack.c.l.b16 %v4225
        %v4685 = vunpack.c.h.b16 %v4225
        %v4686 = vunpack.c.l.b16 %v4226
        %v4687 = vunpack.c.h.b16 %v4226
        %v4688 = vunpack.c.l.b16 %v4227
        %v4689 = vunpack.c.h.b16 %v4227
        %v4690 = vunpack.c.l.b16 %v4228
        %v4691 = vunpack.c.h.b16 %v4228
        %v4692 = vunpack.c.l.b16 %v4229
        %v4693 = vunpack.c.h.b16 %v4229
        %v4694 = vunpack.c.l.b16 %v4230
        %v4695 = vunpack.c.h.b16 %v4230
        %v4696 = vunpack.c.l.b16 %v4231
        %v4697 = vunpack.c.h.b16 %v4231
        %v4698 = vunpack.c.l.b16 %v4232
        %v4699 = vunpack.c.h.b16 %v4232
        %v4700 = vunpack.c.l.b16 %v4233
        %v4701 = vunpack.c.h.b16 %v4233
        %v4702 = vunpack.c.l.b16 %v4234
        %v4703 = vunpack.c.h.b16 %v4234
        %v4704 = vunpack.c.l.b16 %v4235
        %v4705 = vunpack.c.h.b16 %v4235
        %v4706 = vunpack.c.l.b16 %v4236
        %v4707 = vunpack.c.h.b16 %v4236
        %v4708 = vunpack.c.l.b16 %v4237
        %v4709 = vunpack.c.h.b16 %v4237
        %v4710 = vunpack.c.l.b16 %v4238
        %v4711 = vunpack.c.h.b16 %v4238
        %v4712 = vunpack.c.l.b16 %v4239
        %v4713 = vunpack.c.h.b16 %v4239
        %v4714 = vunpack.c.l.b16 %v4240
        %v4715 = vunpack.c.h.b16 %v4240
        %v4716 = vunpack.c.l.b16 %v4241
        %v4717 = vunpack.c.h.b16 %v4241
        %v4718 = vunpack.c.l.b16 %v4242
        %v4719 = vunpack.c.h.b16 %v4242
        %v4720 = vunpack.c.l.b16 %v4243
        %v4721 = vunpack.c.h.b16 %v4243
        %v4722 = vunpack.c.l.b16 %v4244
        %v4723 = vunpack.c.h.b16 %v4244
        %v4724 = vunpack.c.l.b16 %v4245
        %v4725 = vunpack.c.h.b16 %v4245
        %v4726 = vunpack.c.l.b16 %v4246
        %v4727 = vunpack.c.h.b16 %v4246
        %v4728 = vunpack.c.l.b16 %v4247
        %v4729 = vunpack.c.h.b16 %v4247
        %v4730 = vunpack.c.l.b16 %v4248
        %v4731 = vunpack.c.h.b16 %v4248
        %v4732 = vunpack.c.l.b16 %v4249
        %v4733 = vunpack.c.h.b16 %v4249
        %v4734 = vunpack.c.l.b16 %v4250
        %v4735 = vunpack.c.h.b16 %v4250
        %v4736 = vunpack.c.l.b16 %v4251
        %v4737 = vunpack.c.h.b16 %v4251
        %v4738 = vunpack.c.l.b16 %v4252
        %v4739 = vunpack.c.h.b16 %v4252
        %v4740 = vunpack.c.l.b16 %v4253
        %v4741 = vunpack.c.h.b16 %v4253
        %v4742 = vunpack.c.l.b16 %v4254
        %v4743 = vunpack.c.h.b16 %v4254
        %v4744 = vunpack.c.l.b16 %v4255
        %v4745 = vunpack.c.h.b16 %v4255
        %v4746 = vunpack.c.l.b16 %v4256
        %v4747 = vunpack.c.h.b16 %v4256
        %v4748 = vunpack.c.l.b16 %v4257
        %v4749 = vunpack.c.h.b16 %v4257
        %v4750 = vunpack.c.l.b16 %v4258
        %v4751 = vunpack.c.h.b16 %v4258
        %v4752 = vunpack.c.l.b16 %v4259
        %v4753 = vunpack.c.h.b16 %v4259
        %v4754 = vunpack.c.l.b16 %v4260
        %v4755 = vunpack.c.h.b16 %v4260
        %v4756 = vunpack.c.l.b16 %v4261
        %v4757 = vunpack.c.h.b16 %v4261
        %v4758 = vunpack.c.l.b16 %v4262
        %v4759 = vunpack.c.h.b16 %v4262
        %v4760 = vunpack.c.l.b16 %v4263
        %v4761 = vunpack.c.h.b16 %v4263
        %v4762 = vunpack.c.l.b16 %v4264
        %v4763 = vunpack.c.h.b16 %v4264
        %v4764 = vunpack.c.l.b16 %v4265
        %v4765 = vunpack.c.h.b16 %v4265
        %v4766 = vunpack.c.l.b16 %v4266
        %v4767 = vunpack.c.h.b16 %v4266
        %v4768 = vpack.c.b16 %v4458, %v4448
        %v4769 = vpack.c.b16 %v4459, %v4449
        %v4770 = vpack.c.b16 %v4460, %v4450
        %v4771 = vpack.c.b16 %v4461, %v4451
        %v4772 = vpack.c.b16 %v4462, %v4452
        %v4773 = vpack.c.b16 %v4463, %v4453
        %v4774 = vpack.c.b16 %v4464, %v4454
        %v4775 = vpack.c.b16 %v4465, %v4455
        %v4776 = vpack.c.b16 %v4466, %v4456
        %v4777 = vpack.c.b16 %v4467, %v4457
        %v4778 = vpack.c.b16 %v4478, %v4468
        %v4779 = vpack.c.b16 %v4479, %v4469
        %v4780 = vpack.c.b16 %v4480, %v4470
        %v4781 = vpack.c.b16 %v4481, %v4471
        %v4782 = vpack.c.b16 %v4482, %v4472
        %v4783 = vpack.c.b16 %v4483, %v4473
        %v4784 = vpack.c.b16 %v4484, %v4474
        %v4785 = vpack.c.b16 %v4485, %v4475
        %v4786 = vpack.c.b16 %v4486, %v4476
        %v4787 = vpack.c.b16 %v4487, %v4477
        %v4788 = vpack.c.b16 %v4498, %v4488
        %v4789 = vpack.c.b16 %v4499, %v4489
        %v4790 = vpack.c.b16 %v4500, %v4490
        %v4791 = vpack.c.b16 %v4501, %v4491
        %v4792 = vpack.c.b16 %v4502, %v4492
        %v4793 = vpack.c.b16 %v4503, %v4493
        %v4794 = vpack.c.b16 %v4504, %v4494
        %v4795 = vpack.c.b16 %v4505, %v4495
        %v4796 = vpack.c.b16 %v4506, %v4496
        %v4797 = vpack.c.b16 %v4507, %v4497
        %v4798 = vpack.c.b16 %v4518, %v4508
        %v4799 = vpack.c.b16 %v4519, %v4509
        %v4800 = vpack.c.b16 %v4520, %v4510
        %v4801 = vpack.c.b16 %v4521, %v4511
        %v4802 = vpack.c.b16 %v4522, %v4512
        %v4803 = vpack.c.b16 %v4523, %v4513
        %v4804 = vpack.c.b16 %v4524, %v4514
        %v4805 = vpack.c.b16 %v4525, %v4515
        %v4806 = vpack.c.b16 %v4526, %v4516
        %v4807 = vpack.c.b16 %v4527, %v4517
        %v4808 = vpack.c.b16 %v4538, %v4528
        %v4809 = vpack.c.b16 %v4539, %v4529
        %v4810 = vpack.c.b16 %v4540, %v4530
        %v4811 = vpack.c.b16 %v4541, %v4531
        %v4812 = vpack.c.b16 %v4542, %v4532
        %v4813 = vpack.c.b16 %v4543, %v4533
        %v4814 = vpack.c.b16 %v4544, %v4534
        %v4815 = vpack.c.b16 %v4545, %v4535
        %v4816 = vpack.c.b16 %v4546, %v4536
        %v4817 = vpack.c.b16 %v4547, %v4537
        %v4818 = vpack.c.b16 %v4558, %v4548
        %v4819 = vpack.c.b16 %v4559, %v4549
        %v4820 = vpack.c.b16 %v4560, %v4550
        %v4821 = vpack.c.b16 %v4561, %v4551
        %v4822 = vpack.c.b16 %v4562, %v4552
        %v4823 = vpack.c.b16 %v4563, %v4553
        %v4824 = vpack.c.b16 %v4564, %v4554
        %v4825 = vpack.c.b16 %v4565, %v4555
        %v4826 = vpack.c.b16 %v4566, %v4556
        %v4827 = vpack.c.b16 %v4567, %v4557
        %v4828 = vpack.c.b16 %v4578, %v4568
        %v4829 = vpack.c.b16 %v4579, %v4569
        %v4830 = vpack.c.b16 %v4580, %v4570
        %v4831 = vpack.c.b16 %v4581, %v4571
        %v4832 = vpack.c.b16 %v4582, %v4572
        %v4833 = vpack.c.b16 %v4583, %v4573
        %v4834 = vpack.c.b16 %v4584, %v4574
        %v4835 = vpack.c.b16 %v4585, %v4575
        %v4836 = vpack.c.b16 %v4586, %v4576
        %v4837 = vpack.c.b16 %v4587, %v4577
        %v4838 = vpack.c.b16 %v4598, %v4588
        %v4839 = vpack.c.b16 %v4599, %v4589
        %v4840 = vpack.c.b16 %v4600, %v4590
        %v4841 = vpack.c.b16 %v4601, %v4591
        %v4842 = vpack.c.b16 %v4602, %v4592
        %v4843 = vpack.c.b16 %v4603, %v4593
        %v4844 = vpack.c.b16 %v4604, %v4594
        %v4845 = vpack.c.b16 %v4605, %v4595
        %v4846 = vpack.c.b16 %v4606, %v4596
        %v4847 = vpack.c.b16 %v4607, %v4597
        %v4848 = vpack.c.b16 %v4618, %v4608
        %v4849 = vpack.c.b16 %v4619, %v4609
        %v4850 = vpack.c.b16 %v4620, %v4610
        %v4851 = vpack.c.b16 %v4621, %v4611
        %v4852 = vpack.c.b16 %v4622, %v4612
        %v4853 = vpack.c.b16 %v4623, %v4613
        %v4854 = vpack.c.b16 %v4624, %v4614
        %v4855 = vpack.c.b16 %v4625, %v4615
        %v4856 = vpack.c.b16 %v4626, %v4616
        %v4857 = vpack.c.b16 %v4627, %v4617
        %v4858 = vpack.c.b16 %v4638, %v4628
        %v4859 = vpack.c.b16 %v4639, %v4629
        %v4860 = vpack.c.b16 %v4640, %v4630
        %v4861 = vpack.c.b16 %v4641, %v4631
        %v4862 = vpack.c.b16 %v4642, %v4632
        %v4863 = vpack.c.b16 %v4643, %v4633
        %v4864 = vpack.c.b16 %v4644, %v4634
        %v4865 = vpack.c.b16 %v4645, %v4635
        %v4866 = vpack.c.b16 %v4646, %v4636
        %v4867 = vpack.c.b16 %v4647, %v4637
        %v4868 = vpack.c.b16 %v4658, %v4648
        %v4869 = vpack.c.b16 %v4659, %v4649
        %v4870 = vpack.c.b16 %v4660, %v4650
        %v4871 = vpack.c.b16 %v4661, %v4651
        %v4872 = vpack.c.b16 %v4662, %v4652
        %v4873 = vpack.c.b16 %v4663, %v4653
        %v4874 = vpack.c.b16 %v4664, %v4654
        %v4875 = vpack.c.b16 %v4665, %v4655
        %v4876 = vpack.c.b16 %v4666, %v4656
        %v4877 = vpack.c.b16 %v4667, %v4657
        %v4878 = vpack.c.b16 %v4678, %v4668
        %v4879 = vpack.c.b16 %v4679, %v4669
        %v4880 = vpack.c.b16 %v4680, %v4670
        %v4881 = vpack.c.b16 %v4681, %v4671
        %v4882 = vpack.c.b16 %v4682, %v4672
        %v4883 = vpack.c.b16 %v4683, %v4673
        %v4884 = vpack.c.b16 %v4684, %v4674
        %v4885 = vpack.c.b16 %v4685, %v4675
        %v4886 = vpack.c.b16 %v4686, %v4676
        %v4887 = vpack.c.b16 %v4687, %v4677
        %v4888 = vpack.c.b16 %v4698, %v4688
        %v4889 = vpack.c.b16 %v4699, %v4689
        %v4890 = vpack.c.b16 %v4700, %v4690
        %v4891 = vpack.c.b16 %v4701, %v4691
        %v4892 = vpack.c.b16 %v4702, %v4692
        %v4893 = vpack.c.b16 %v4703, %v4693
        %v4894 = vpack.c.b16 %v4704, %v4694
        %v4895 = vpack.c.b16 %v4705, %v4695
        %v4896 = vpack.c.b16 %v4706, %v4696
        %v4897 = vpack.c.b16 %v4707, %v4697
        %v4898 = vpack.c.b16 %v4718, %v4708
        %v4899 = vpack.c.b16 %v4719, %v4709
        %v4900 = vpack.c.b16 %v4720, %v4710
        %v4901 = vpack.c.b16 %v4721, %v4711
        %v4902 = vpack.c.b16 %v4722, %v4712
        %v4903 = vpack.c.b16 %v4723, %v4713
        %v4904 = vpack.c.b16 %v4724, %v4714
        %v4905 = vpack.c.b16 %v4725, %v4715
        %v4906 = vpack.c.b16 %v4726, %v4716
        %v4907 = vpack.c.b16 %v4727, %v4717
        %v4908 = vpack.c.b16 %v4738, %v4728
        %v4909 = vpack.c.b16 %v4739, %v4729
        %v4910 = vpack.c.b16 %v4740, %v4730
        %v4911 = vpack.c.b16 %v4741, %v4731
        %v4912 = vpack.c.b16 %v4742, %v4732
        %v4913 = vpack.c.b16 %v4743, %v4733
        %v4914 = vpack.c.b16 %v4744, %v4734
        %v4915 = vpack.c.b16 %v4745, %v4735
        %v4916 = vpack.c.b16 %v4746, %v4736
        %v4917 = vpack.c.b16 %v4747, %v4737
        %v4918 = vpack.c.b16 %v4758, %v4748
        %v4919 = vpack.c.b16 %v4759, %v4749
        %v4920 = vpack.c.b16 %v4760, %v4750
        %v4921 = vpack.c.b16 %v4761, %v4751
        %v4922 = vpack.c.b16 %v4762, %v4752
        %v4923 = vpack.c.b16 %v4763, %v4753
        %v4924 = vpack.c.b16 %v4764, %v4754
        %v4925 = vpack.c.b16 %v4765, %v4755
        %v4926 = vpack.c.b16 %v4766, %v4756
        %v4927 = vpack.c.b16 %v4767, %v4757
        %5088 = vmatpush.bf16.msra.mxu0 %v4838
        %5089 = vmatpush.bf16.msra.mxu0 %v4828
        %5090 = vmatpush.bf16.msra.mxu0 %v4818
        %5091 = vmatpush.bf16.msra.mxu0 %v4808
        %5092 = vmatpush.bf16.msra.mxu0 %v4798
        %5093 = vmatpush.bf16.msra.mxu0 %v4788
        %5094 = vmatpush.bf16.msra.mxu0 %v4778
        %5095 = vmatpush.bf16.msra.mxu0 %v4768
        %5096 = vmatmul.bf16.gmra.mxu0 %v4276
        %v5097 = vpop.f32.mrf.mxu0
        %v5098 = vadd.f32 0.0, %v5097
        %v5099 = vpop.f32.mrf.mxu0
        %v5100 = vadd.f32 0.0, %v5099
        %5101 = vdwg.mxu0
        %5102 = vmatpush.bf16.msra.mxu0 %v4918
        %5103 = vmatpush.bf16.msra.mxu0 %v4908
        %5104 = vmatpush.bf16.msra.mxu0 %v4898
        %5105 = vmatpush.bf16.msra.mxu0 %v4888
        %5106 = vmatpush.bf16.msra.mxu0 %v4878
        %5107 = vmatpush.bf16.msra.mxu0 %v4868
        %5108 = vmatpush.bf16.msra.mxu0 %v4858
        %5109 = vmatpush.bf16.msra.mxu0 %v4848
        %5110 = vmatmul.bf16.gmra.mxu0 %v4285
        %v5111 = vpop.f32.mrf.mxu0
        %v5112 = vadd.f32 %v5098, %v5111
        %v5113 = vpop.f32.mrf.mxu0
        %v5114 = vadd.f32 %v5100, %v5113
        %5115 = vdwg.mxu0
        %5116 = vmatpush.bf16.msra.mxu0 %v4839
        %5117 = vmatpush.bf16.msra.mxu0 %v4829
        %5118 = vmatpush.bf16.msra.mxu0 %v4819
        %5119 = vmatpush.bf16.msra.mxu0 %v4809
        %5120 = vmatpush.bf16.msra.mxu0 %v4799
        %5121 = vmatpush.bf16.msra.mxu0 %v4789
        %5122 = vmatpush.bf16.msra.mxu0 %v4779
        %5123 = vmatpush.bf16.msra.mxu0 %v4769
        %5124 = vmatmul.bf16.gmra.mxu0 %v4276
        %v5125 = vpop.f32.mrf.mxu0
        %v5126 = vadd.f32 0.0, %v5125
        %v5127 = vpop.f32.mrf.mxu0
        %v5128 = vadd.f32 0.0, %v5127
        %5129 = vdwg.mxu0
        %5130 = vmatpush.bf16.msra.mxu0 %v4919
        %5131 = vmatpush.bf16.msra.mxu0 %v4909
        %5132 = vmatpush.bf16.msra.mxu0 %v4899
        %5133 = vmatpush.bf16.msra.mxu0 %v4889
        %5134 = vmatpush.bf16.msra.mxu0 %v4879
        %5135 = vmatpush.bf16.msra.mxu0 %v4869
        %5136 = vmatpush.bf16.msra.mxu0 %v4859
        %5137 = vmatpush.bf16.msra.mxu0 %v4849
        %5138 = vmatmul.bf16.gmra.mxu0 %v4285
        %v5139 = vpop.f32.mrf.mxu0
        %v5140 = vadd.f32 %v5126, %v5139
        %v5141 = vpop.f32.mrf.mxu0
        %v5142 = vadd.f32 %v5128, %v5141
        %5143 = vdwg.mxu0
        %5144 = vmatpush.bf16.msra.mxu0 %v4840
        %5145 = vmatpush.bf16.msra.mxu0 %v4830
        %5146 = vmatpush.bf16.msra.mxu0 %v4820
        %5147 = vmatpush.bf16.msra.mxu0 %v4810
        %5148 = vmatpush.bf16.msra.mxu0 %v4800
        %5149 = vmatpush.bf16.msra.mxu0 %v4790
        %5150 = vmatpush.bf16.msra.mxu0 %v4780
        %5151 = vmatpush.bf16.msra.mxu0 %v4770
        %5152 = vmatmul.bf16.gmra.mxu0 %v4276
        %v5153 = vpop.f32.mrf.mxu0
        %v5154 = vadd.f32 0.0, %v5153
        %v5155 = vpop.f32.mrf.mxu0
        %v5156 = vadd.f32 0.0, %v5155
        %5157 = vdwg.mxu0
        %5158 = vmatpush.bf16.msra.mxu0 %v4920
        %5159 = vmatpush.bf16.msra.mxu0 %v4910
        %5160 = vmatpush.bf16.msra.mxu0 %v4900
        %5161 = vmatpush.bf16.msra.mxu0 %v4890
        %5162 = vmatpush.bf16.msra.mxu0 %v4880
        %5163 = vmatpush.bf16.msra.mxu0 %v4870
        %5164 = vmatpush.bf16.msra.mxu0 %v4860
        %5165 = vmatpush.bf16.msra.mxu0 %v4850
        %5166 = vmatmul.bf16.gmra.mxu0 %v4285
        %v5167 = vpop.f32.mrf.mxu0
        %v5168 = vadd.f32 %v5154, %v5167
        %v5169 = vpop.f32.mrf.mxu0
        %v5170 = vadd.f32 %v5156, %v5169
        %5171 = vdwg.mxu0
        %5172 = vmatpush.bf16.msra.mxu0 %v4841
        %5173 = vmatpush.bf16.msra.mxu0 %v4831
        %5174 = vmatpush.bf16.msra.mxu0 %v4821
        %5175 = vmatpush.bf16.msra.mxu0 %v4811
        %5176 = vmatpush.bf16.msra.mxu0 %v4801
        %5177 = vmatpush.bf16.msra.mxu0 %v4791
        %5178 = vmatpush.bf16.msra.mxu0 %v4781
        %5179 = vmatpush.bf16.msra.mxu0 %v4771
        %5180 = vmatmul.bf16.gmra.mxu0 %v4276
        %v5181 = vpop.f32.mrf.mxu0
        %v5182 = vadd.f32 0.0, %v5181
        %v5183 = vpop.f32.mrf.mxu0
        %v5184 = vadd.f32 0.0, %v5183
        %5185 = vdwg.mxu0
        %5186 = vmatpush.bf16.msra.mxu0 %v4921
        %5187 = vmatpush.bf16.msra.mxu0 %v4911
        %5188 = vmatpush.bf16.msra.mxu0 %v4901
        %5189 = vmatpush.bf16.msra.mxu0 %v4891
        %5190 = vmatpush.bf16.msra.mxu0 %v4881
        %5191 = vmatpush.bf16.msra.mxu0 %v4871
        %5192 = vmatpush.bf16.msra.mxu0 %v4861
        %5193 = vmatpush.bf16.msra.mxu0 %v4851
        %5194 = vmatmul.bf16.gmra.mxu0 %v4285
        %v5195 = vpop.f32.mrf.mxu0
        %v5196 = vadd.f32 %v5182, %v5195
        %v5197 = vpop.f32.mrf.mxu0
        %v5198 = vadd.f32 %v5184, %v5197
        %5199 = vdwg.mxu0
        %5200 = vmatpush.bf16.msra.mxu0 %v4842
        %5201 = vmatpush.bf16.msra.mxu0 %v4832
        %5202 = vmatpush.bf16.msra.mxu0 %v4822
        %5203 = vmatpush.bf16.msra.mxu0 %v4812
        %5204 = vmatpush.bf16.msra.mxu0 %v4802
        %5205 = vmatpush.bf16.msra.mxu0 %v4792
        %5206 = vmatpush.bf16.msra.mxu0 %v4782
        %5207 = vmatpush.bf16.msra.mxu0 %v4772
        %5208 = vmatmul.bf16.gmra.mxu0 %v4276
        %v5209 = vpop.f32.mrf.mxu0
        %v5210 = vadd.f32 0.0, %v5209
        %v5211 = vpop.f32.mrf.mxu0
        %v5212 = vadd.f32 0.0, %v5211
        %5213 = vdwg.mxu0
        %5214 = vmatpush.bf16.msra.mxu0 %v4922
        %5215 = vmatpush.bf16.msra.mxu0 %v4912
        %5216 = vmatpush.bf16.msra.mxu0 %v4902
        %5217 = vmatpush.bf16.msra.mxu0 %v4892
        %5218 = vmatpush.bf16.msra.mxu0 %v4882
        %5219 = vmatpush.bf16.msra.mxu0 %v4872
        %5220 = vmatpush.bf16.msra.mxu0 %v4862
        %5221 = vmatpush.bf16.msra.mxu0 %v4852
        %5222 = vmatmul.bf16.gmra.mxu0 %v4285
        %v5223 = vpop.f32.mrf.mxu0
        %v5224 = vadd.f32 %v5210, %v5223
        %v5225 = vpop.f32.mrf.mxu0
        %v5226 = vadd.f32 %v5212, %v5225
        %5227 = vdwg.mxu0
        %5228 = vmatpush.bf16.msra.mxu0 %v4843
        %5229 = vmatpush.bf16.msra.mxu0 %v4833
        %5230 = vmatpush.bf16.msra.mxu0 %v4823
        %5231 = vmatpush.bf16.msra.mxu0 %v4813
        %5232 = vmatpush.bf16.msra.mxu0 %v4803
        %5233 = vmatpush.bf16.msra.mxu0 %v4793
        %5234 = vmatpush.bf16.msra.mxu0 %v4783
        %5235 = vmatpush.bf16.msra.mxu0 %v4773
        %5236 = vmatmul.bf16.gmra.mxu0 %v4276
        %v5237 = vpop.f32.mrf.mxu0
        %v5238 = vadd.f32 0.0, %v5237
        %v5239 = vpop.f32.mrf.mxu0
        %v5240 = vadd.f32 0.0, %v5239
        %5241 = vdwg.mxu0
        %5242 = vmatpush.bf16.msra.mxu0 %v4923
        %5243 = vmatpush.bf16.msra.mxu0 %v4913
        %5244 = vmatpush.bf16.msra.mxu0 %v4903
        %5245 = vmatpush.bf16.msra.mxu0 %v4893
        %5246 = vmatpush.bf16.msra.mxu0 %v4883
        %5247 = vmatpush.bf16.msra.mxu0 %v4873
        %5248 = vmatpush.bf16.msra.mxu0 %v4863
        %5249 = vmatpush.bf16.msra.mxu0 %v4853
        %5250 = vmatmul.bf16.gmra.mxu0 %v4285
        %v5251 = vpop.f32.mrf.mxu0
        %v5252 = vadd.f32 %v5238, %v5251
        %v5253 = vpop.f32.mrf.mxu0
        %v5254 = vadd.f32 %v5240, %v5253
        %5255 = vdwg.mxu0
        %5256 = vmatpush.bf16.msra.mxu0 %v4844
        %5257 = vmatpush.bf16.msra.mxu0 %v4834
        %5258 = vmatpush.bf16.msra.mxu0 %v4824
        %5259 = vmatpush.bf16.msra.mxu0 %v4814
        %5260 = vmatpush.bf16.msra.mxu0 %v4804
        %5261 = vmatpush.bf16.msra.mxu0 %v4794
        %5262 = vmatpush.bf16.msra.mxu0 %v4784
        %5263 = vmatpush.bf16.msra.mxu0 %v4774
        %5264 = vmatmul.bf16.gmra.mxu0 %v4276
        %v5265 = vpop.f32.mrf.mxu0
        %v5266 = vadd.f32 0.0, %v5265
        %v5267 = vpop.f32.mrf.mxu0
        %v5268 = vadd.f32 0.0, %v5267
        %5269 = vdwg.mxu0
        %5270 = vmatpush.bf16.msra.mxu0 %v4924
        %5271 = vmatpush.bf16.msra.mxu0 %v4914
        %5272 = vmatpush.bf16.msra.mxu0 %v4904
        %5273 = vmatpush.bf16.msra.mxu0 %v4894
        %5274 = vmatpush.bf16.msra.mxu0 %v4884
        %5275 = vmatpush.bf16.msra.mxu0 %v4874
        %5276 = vmatpush.bf16.msra.mxu0 %v4864
        %5277 = vmatpush.bf16.msra.mxu0 %v4854
        %5278 = vmatmul.bf16.gmra.mxu0 %v4285
        %v5279 = vpop.f32.mrf.mxu0
        %v5280 = vadd.f32 %v5266, %v5279
        %v5281 = vpop.f32.mrf.mxu0
        %v5282 = vadd.f32 %v5268, %v5281
        %5283 = vdwg.mxu0
        %5284 = vmatpush.bf16.msra.mxu0 %v4845
        %5285 = vmatpush.bf16.msra.mxu0 %v4835
        %5286 = vmatpush.bf16.msra.mxu0 %v4825
        %5287 = vmatpush.bf16.msra.mxu0 %v4815
        %5288 = vmatpush.bf16.msra.mxu0 %v4805
        %5289 = vmatpush.bf16.msra.mxu0 %v4795
        %5290 = vmatpush.bf16.msra.mxu0 %v4785
        %5291 = vmatpush.bf16.msra.mxu0 %v4775
        %5292 = vmatmul.bf16.gmra.mxu0 %v4276
        %v5293 = vpop.f32.mrf.mxu0
        %v5294 = vadd.f32 0.0, %v5293
        %v5295 = vpop.f32.mrf.mxu0
        %v5296 = vadd.f32 0.0, %v5295
        %5297 = vdwg.mxu0
        %5298 = vmatpush.bf16.msra.mxu0 %v4925
        %5299 = vmatpush.bf16.msra.mxu0 %v4915
        %5300 = vmatpush.bf16.msra.mxu0 %v4905
        %5301 = vmatpush.bf16.msra.mxu0 %v4895
        %5302 = vmatpush.bf16.msra.mxu0 %v4885
        %5303 = vmatpush.bf16.msra.mxu0 %v4875
        %5304 = vmatpush.bf16.msra.mxu0 %v4865
        %5305 = vmatpush.bf16.msra.mxu0 %v4855
        %5306 = vmatmul.bf16.gmra.mxu0 %v4285
        %v5307 = vpop.f32.mrf.mxu0
        %v5308 = vadd.f32 %v5294, %v5307
        %v5309 = vpop.f32.mrf.mxu0
        %v5310 = vadd.f32 %v5296, %v5309
        %5311 = vdwg.mxu0
        %5312 = vmatpush.bf16.msra.mxu0 %v4846
        %5313 = vmatpush.bf16.msra.mxu0 %v4836
        %5314 = vmatpush.bf16.msra.mxu0 %v4826
        %5315 = vmatpush.bf16.msra.mxu0 %v4816
        %5316 = vmatpush.bf16.msra.mxu0 %v4806
        %5317 = vmatpush.bf16.msra.mxu0 %v4796
        %5318 = vmatpush.bf16.msra.mxu0 %v4786
        %5319 = vmatpush.bf16.msra.mxu0 %v4776
        %5320 = vmatmul.bf16.gmra.mxu0 %v4276
        %v5321 = vpop.f32.mrf.mxu0
        %v5322 = vadd.f32 0.0, %v5321
        %v5323 = vpop.f32.mrf.mxu0
        %v5324 = vadd.f32 0.0, %v5323
        %5325 = vdwg.mxu0
        %5326 = vmatpush.bf16.msra.mxu0 %v4926
        %5327 = vmatpush.bf16.msra.mxu0 %v4916
        %5328 = vmatpush.bf16.msra.mxu0 %v4906
        %5329 = vmatpush.bf16.msra.mxu0 %v4896
        %5330 = vmatpush.bf16.msra.mxu0 %v4886
        %5331 = vmatpush.bf16.msra.mxu0 %v4876
        %5332 = vmatpush.bf16.msra.mxu0 %v4866
        %5333 = vmatpush.bf16.msra.mxu0 %v4856
        %5334 = vmatmul.bf16.gmra.mxu0 %v4285
        %v5335 = vpop.f32.mrf.mxu0
        %v5336 = vadd.f32 %v5322, %v5335
        %v5337 = vpop.f32.mrf.mxu0
        %v5338 = vadd.f32 %v5324, %v5337
        %5339 = vdwg.mxu0
        %5340 = vmatpush.bf16.msra.mxu0 %v4847
        %5341 = vmatpush.bf16.msra.mxu0 %v4837
        %5342 = vmatpush.bf16.msra.mxu0 %v4827
        %5343 = vmatpush.bf16.msra.mxu0 %v4817
        %5344 = vmatpush.bf16.msra.mxu0 %v4807
        %5345 = vmatpush.bf16.msra.mxu0 %v4797
        %5346 = vmatpush.bf16.msra.mxu0 %v4787
        %5347 = vmatpush.bf16.msra.mxu0 %v4777
        %5348 = vmatmul.bf16.gmra.mxu0 %v4276
        %v5349 = vpop.f32.mrf.mxu0
        %v5350 = vadd.f32 0.0, %v5349
        %v5351 = vpop.f32.mrf.mxu0
        %v5352 = vadd.f32 0.0, %v5351
        %5353 = vdwg.mxu0
        %5354 = vmatpush.bf16.msra.mxu0 %v4927
        %5355 = vmatpush.bf16.msra.mxu0 %v4917
        %5356 = vmatpush.bf16.msra.mxu0 %v4907
        %5357 = vmatpush.bf16.msra.mxu0 %v4897
        %5358 = vmatpush.bf16.msra.mxu0 %v4887
        %5359 = vmatpush.bf16.msra.mxu0 %v4877
        %5360 = vmatpush.bf16.msra.mxu0 %v4867
        %5361 = vmatpush.bf16.msra.mxu0 %v4857
        %5362 = vmatmul.bf16.gmra.mxu0 %v4285
        %v5363 = vpop.f32.mrf.mxu0
        %v5364 = vadd.f32 %v5350, %v5363
        %v5365 = vpop.f32.mrf.mxu0
        %v5366 = vadd.f32 %v5352, %v5365
        %5367 = vdwg.mxu0
        %v5368 = vadd.f32 %v4087, %v5112
        %v5369 = vadd.f32 %v4088, %v5140
        %v5370 = vadd.f32 %v4089, %v5168
        %v5371 = vadd.f32 %v4090, %v5196
        %v5372 = vadd.f32 %v4091, %v5224
        %v5373 = vadd.f32 %v4092, %v5252
        %v5374 = vadd.f32 %v4093, %v5280
        %v5375 = vadd.f32 %v4094, %v5308
        %v5376 = vadd.f32 %v4095, %v5336
        %v5377 = vadd.f32 %v4096, %v5364
        %v5378 = vadd.f32 %v4097, %v5114
        %v5379 = vadd.f32 %v4098, %v5142
        %v5380 = vadd.f32 %v4099, %v5170
        %v5381 = vadd.f32 %v4100, %v5198
        %v5382 = vadd.f32 %v4101, %v5226
        %v5383 = vadd.f32 %v4102, %v5254
        %v5384 = vadd.f32 %v4103, %v5282
        %v5385 = vadd.f32 %v4104, %v5310
        %v5386 = vadd.f32 %v4105, %v5338
        %v5387 = vadd.f32 %v4106, %v5366
        %v5388 = vmul.f32 %v5368, %v5368
        %v5389 = vmul.f32 %v5369, %v5369
        %v5390 = vmul.f32 %v5370, %v5370
        %v5391 = vmul.f32 %v5371, %v5371
        %v5392 = vmul.f32 %v5372, %v5372
        %v5393 = vmul.f32 %v5378, %v5378
        %v5394 = vmul.f32 %v5379, %v5379
        %v5395 = vmul.f32 %v5380, %v5380
        %v5396 = vmul.f32 %v5381, %v5381
        %v5397 = vmul.f32 %v5382, %v5382
        %v5398 = vmul.f32 %v5373, %v5373
        %v5399 = vmul.f32 %v5374, %v5374
        %v5400 = vmul.f32 %v5375, %v5375
        %v5401 = vmul.f32 %v5376, %v5376
        %v5402 = vmul.f32 %v5377, %v5377
        %v5403 = vmul.f32 %v5383, %v5383
        %v5404 = vmul.f32 %v5384, %v5384
        %v5405 = vmul.f32 %v5385, %v5385
        %v5406 = vmul.f32 %v5386, %v5386
        %v5407 = vmul.f32 %v5387, %v5387
        %v5408 = vadd.f32 %v5388, %v5398
        %v5409 = vadd.f32 %v5389, %v5399
        %v5410 = vadd.f32 %v5390, %v5400
        %v5411 = vadd.f32 %v5391, %v5401
        %v5412 = vadd.f32 %v5392, %v5402
        %v5413 = vadd.f32 %v5393, %v5403
        %v5414 = vadd.f32 %v5394, %v5404
        %v5415 = vadd.f32 %v5395, %v5405
        %v5416 = vadd.f32 %v5396, %v5406
        %v5417 = vadd.f32 %v5397, %v5407
        %v5418 = vrsqrt.pop %v5408
        %v5419 = vmul.f32 %v5418, %v5408
        %v5420 = vmul.f32 %v5419, %v5418
        %v5421 = vmul.f32 0.5, %v5420
        %v5422 = vsub.f32 1.5, %v5421
        %v5423 = vmul.f32 %v5418, %v5422
        %v5424 = vmul.f32 %v5408, %v5423
        %vm5425 = vcmp.eq.f32.partialorder %v5408, inf
        %v5426 = vsel %vm5425, %v5408, %v5424
        %vm5427 = vcmp.eq.f32.partialorder %v5408, 0.0
        %v5428 = vand.u32 %v5408, 2147483648
        %v5429 = vsel %vm5427, %v5428, %v5426
        %v5430 = vrsqrt.pop %v5409
        %v5431 = vmul.f32 %v5430, %v5409
        %v5432 = vmul.f32 %v5431, %v5430
        %v5433 = vmul.f32 0.5, %v5432
        %v5434 = vsub.f32 1.5, %v5433
        %v5435 = vmul.f32 %v5430, %v5434
        %v5436 = vmul.f32 %v5409, %v5435
        %vm5437 = vcmp.eq.f32.partialorder %v5409, inf
        %v5438 = vsel %vm5437, %v5409, %v5436
        %vm5439 = vcmp.eq.f32.partialorder %v5409, 0.0
        %v5440 = vand.u32 %v5409, 2147483648
        %v5441 = vsel %vm5439, %v5440, %v5438
        %v5442 = vrsqrt.pop %v5410
        %v5443 = vmul.f32 %v5442, %v5410
        %v5444 = vmul.f32 %v5443, %v5442
        %v5445 = vmul.f32 0.5, %v5444
        %v5446 = vsub.f32 1.5, %v5445
        %v5447 = vmul.f32 %v5442, %v5446
        %v5448 = vmul.f32 %v5410, %v5447
        %vm5449 = vcmp.eq.f32.partialorder %v5410, inf
        %v5450 = vsel %vm5449, %v5410, %v5448
        %vm5451 = vcmp.eq.f32.partialorder %v5410, 0.0
        %v5452 = vand.u32 %v5410, 2147483648
        %v5453 = vsel %vm5451, %v5452, %v5450
        %v5454 = vrsqrt.pop %v5411
        %v5455 = vmul.f32 %v5454, %v5411
        %v5456 = vmul.f32 %v5455, %v5454
        %v5457 = vmul.f32 0.5, %v5456
        %v5458 = vsub.f32 1.5, %v5457
        %v5459 = vmul.f32 %v5454, %v5458
        %v5460 = vmul.f32 %v5411, %v5459
        %vm5461 = vcmp.eq.f32.partialorder %v5411, inf
        %v5462 = vsel %vm5461, %v5411, %v5460
        %vm5463 = vcmp.eq.f32.partialorder %v5411, 0.0
        %v5464 = vand.u32 %v5411, 2147483648
        %v5465 = vsel %vm5463, %v5464, %v5462
        %v5466 = vrsqrt.pop %v5412
        %v5467 = vmul.f32 %v5466, %v5412
        %v5468 = vmul.f32 %v5467, %v5466
        %v5469 = vmul.f32 0.5, %v5468
        %v5470 = vsub.f32 1.5, %v5469
        %v5471 = vmul.f32 %v5466, %v5470
        %v5472 = vmul.f32 %v5412, %v5471
        %vm5473 = vcmp.eq.f32.partialorder %v5412, inf
        %v5474 = vsel %vm5473, %v5412, %v5472
        %vm5475 = vcmp.eq.f32.partialorder %v5412, 0.0
        %v5476 = vand.u32 %v5412, 2147483648
        %v5477 = vsel %vm5475, %v5476, %v5474
        %v5478 = vrsqrt.pop %v5413
        %v5479 = vmul.f32 %v5478, %v5413
        %v5480 = vmul.f32 %v5479, %v5478
        %v5481 = vmul.f32 0.5, %v5480
        %v5482 = vsub.f32 1.5, %v5481
        %v5483 = vmul.f32 %v5478, %v5482
        %v5484 = vmul.f32 %v5413, %v5483
        %vm5485 = vcmp.eq.f32.partialorder %v5413, inf
        %v5486 = vsel %vm5485, %v5413, %v5484
        %vm5487 = vcmp.eq.f32.partialorder %v5413, 0.0
        %v5488 = vand.u32 %v5413, 2147483648
        %v5489 = vsel %vm5487, %v5488, %v5486
        %v5490 = vrsqrt.pop %v5414
        %v5491 = vmul.f32 %v5490, %v5414
        %v5492 = vmul.f32 %v5491, %v5490
        %v5493 = vmul.f32 0.5, %v5492
        %v5494 = vsub.f32 1.5, %v5493
        %v5495 = vmul.f32 %v5490, %v5494
        %v5496 = vmul.f32 %v5414, %v5495
        %vm5497 = vcmp.eq.f32.partialorder %v5414, inf
        %v5498 = vsel %vm5497, %v5414, %v5496
        %vm5499 = vcmp.eq.f32.partialorder %v5414, 0.0
        %v5500 = vand.u32 %v5414, 2147483648
        %v5501 = vsel %vm5499, %v5500, %v5498
        %v5502 = vrsqrt.pop %v5415
        %v5503 = vmul.f32 %v5502, %v5415
        %v5504 = vmul.f32 %v5503, %v5502
        %v5505 = vmul.f32 0.5, %v5504
        %v5506 = vsub.f32 1.5, %v5505
        %v5507 = vmul.f32 %v5502, %v5506
        %v5508 = vmul.f32 %v5415, %v5507
        %vm5509 = vcmp.eq.f32.partialorder %v5415, inf
        %v5510 = vsel %vm5509, %v5415, %v5508
        %vm5511 = vcmp.eq.f32.partialorder %v5415, 0.0
        %v5512 = vand.u32 %v5415, 2147483648
        %v5513 = vsel %vm5511, %v5512, %v5510
        %v5514 = vrsqrt.pop %v5416
        %v5515 = vmul.f32 %v5514, %v5416
        %v5516 = vmul.f32 %v5515, %v5514
        %v5517 = vmul.f32 0.5, %v5516
        %v5518 = vsub.f32 1.5, %v5517
        %v5519 = vmul.f32 %v5514, %v5518
        %v5520 = vmul.f32 %v5416, %v5519
        %vm5521 = vcmp.eq.f32.partialorder %v5416, inf
        %v5522 = vsel %vm5521, %v5416, %v5520
        %vm5523 = vcmp.eq.f32.partialorder %v5416, 0.0
        %v5524 = vand.u32 %v5416, 2147483648
        %v5525 = vsel %vm5523, %v5524, %v5522
        %v5526 = vrsqrt.pop %v5417
        %v5527 = vmul.f32 %v5526, %v5417
        %v5528 = vmul.f32 %v5527, %v5526
        %v5529 = vmul.f32 0.5, %v5528
        %v5530 = vsub.f32 1.5, %v5529
        %v5531 = vmul.f32 %v5526, %v5530
        %v5532 = vmul.f32 %v5417, %v5531
        %vm5533 = vcmp.eq.f32.partialorder %v5417, inf
        %v5534 = vsel %vm5533, %v5417, %v5532
        %vm5535 = vcmp.eq.f32.partialorder %v5417, 0.0
        %v5536 = vand.u32 %v5417, 2147483648
        %v5537 = vsel %vm5535, %v5536, %v5534
        %v5538 = vpack.c.bf16 %v5489, %v5429
        %v5539 = vpack.c.bf16 %v5501, %v5441
        %v5540 = vpack.c.bf16 %v5513, %v5453
        %v5541 = vpack.c.bf16 %v5525, %v5465
        %v5542 = vpack.c.bf16 %v5537, %v5477
        %v5543 = vld [vmem:[#allocation4] sm:$0xf]
        %v5544 = vld [vmem:[#allocation4 + $0x4] sm:$0xf]
        %v5545 = vld [vmem:[#allocation4 + $0x8] sm:$0xf]
        %v5546 = vld [vmem:[#allocation4 + $0xc] sm:$0xf]
        %v5547 = vld [vmem:[#allocation4 + $0x10] sm:$0xf]
        %v5548 = vld [vmem:[#allocation4 + $0x14] sm:$0xf]
        %v5549 = vld [vmem:[#allocation4 + $0x18] sm:$0xf]
        %v5550 = vld [vmem:[#allocation4 + $0x1c] sm:$0xf]
        %v5551 = vld [vmem:[#allocation4 + $0x20] sm:$0xf]
        %v5552 = vld [vmem:[#allocation4 + $0x24] sm:$0xf]
        %v5553 = vld [vmem:[#allocation4 + $0x28] sm:$0xf]
        %v5554 = vld [vmem:[#allocation4 + $0x2c] sm:$0xf]
        %v5555 = vld [vmem:[#allocation4 + $0x30] sm:$0xf]
        %v5556 = vld [vmem:[#allocation4 + $0x34] sm:$0xf]
        %v5557 = vld [vmem:[#allocation4 + $0x38] sm:$0xf]
        %v5558 = vld [vmem:[#allocation4 + $0x3c] sm:$0xf]
        %v5559 = vld [vmem:[#allocation4 + $0x40] sm:$0xf]
        %v5560 = vld [vmem:[#allocation4 + $0x44] sm:$0xf]
        %v5561 = vld [vmem:[#allocation4 + $0x48] sm:$0xf]
        %v5562 = vld [vmem:[#allocation4 + $0x4c] sm:$0xf]
        %v5563 = vld [vmem:[#allocation4 + $0x50] sm:$0xf]
        %v5564 = vld [vmem:[#allocation4 + $0x54] sm:$0xf]
        %v5565 = vld [vmem:[#allocation4 + $0x58] sm:$0xf]
        %v5566 = vld [vmem:[#allocation4 + $0x5c] sm:$0xf]
        %v5567 = vld [vmem:[#allocation4 + $0x60] sm:$0xf]
        %v5568 = vld [vmem:[#allocation4 + $0x64] sm:$0xf]
        %v5569 = vld [vmem:[#allocation4 + $0x68] sm:$0xf]
        %v5570 = vld [vmem:[#allocation4 + $0x6c] sm:$0xf]
        %v5571 = vld [vmem:[#allocation4 + $0x70] sm:$0xf]
        %v5572 = vld [vmem:[#allocation4 + $0x74] sm:$0xf]
        %v5573 = vld [vmem:[#allocation4 + $0x78] sm:$0xf]
        %v5574 = vld [vmem:[#allocation4 + $0x7c] sm:$0xf]
        %v5575 = vld [vmem:[#allocation4 + $0x80] sm:$0xf]
        %v5576 = vld [vmem:[#allocation4 + $0x84] sm:$0xf]
        %v5577 = vld [vmem:[#allocation4 + $0x88] sm:$0xf]
        %v5578 = vld [vmem:[#allocation4 + $0x8c] sm:$0xf]
        %v5579 = vld [vmem:[#allocation4 + $0x90] sm:$0xf]
        %v5580 = vld [vmem:[#allocation4 + $0x94] sm:$0xf]
        %v5581 = vld [vmem:[#allocation4 + $0x98] sm:$0xf]
        %v5582 = vld [vmem:[#allocation4 + $0x9c] sm:$0xf]
        %v5583 = vld [vmem:[#allocation4 + $0xa0] sm:$0xf]
        %v5584 = vld [vmem:[#allocation4 + $0xa4] sm:$0xf]
        %v5585 = vld [vmem:[#allocation4 + $0xa8] sm:$0xf]
        %v5586 = vld [vmem:[#allocation4 + $0xac] sm:$0xf]
        %v5587 = vld [vmem:[#allocation4 + $0xb0] sm:$0xf]
        %v5588 = vld [vmem:[#allocation4 + $0xb4] sm:$0xf]
        %v5589 = vld [vmem:[#allocation4 + $0xb8] sm:$0xf]
        %v5590 = vld [vmem:[#allocation4 + $0xbc] sm:$0xf]
        %v5591 = vld [vmem:[#allocation4 + $0xc0] sm:$0xf]
        %v5592 = vld [vmem:[#allocation4 + $0xc4] sm:$0xf]
        %v5593 = vld [vmem:[#allocation4 + $0xc8] sm:$0xf]
        %v5594 = vld [vmem:[#allocation4 + $0xcc] sm:$0xf]
        %v5595 = vld [vmem:[#allocation4 + $0xd0] sm:$0xf]
        %v5596 = vld [vmem:[#allocation4 + $0xd4] sm:$0xf]
        %v5597 = vld [vmem:[#allocation4 + $0xd8] sm:$0xf]
        %v5598 = vld [vmem:[#allocation4 + $0xdc] sm:$0xf]
        %v5599 = vld [vmem:[#allocation4 + $0xe0] sm:$0xf]
        %v5600 = vld [vmem:[#allocation4 + $0xe4] sm:$0xf]
        %v5601 = vld [vmem:[#allocation4 + $0xe8] sm:$0xf]
        %v5602 = vld [vmem:[#allocation4 + $0xec] sm:$0xf]
        %v5603 = vld [vmem:[#allocation4 + $0xf0] sm:$0xf]
        %v5604 = vld [vmem:[#allocation4 + $0xf4] sm:$0xf]
        %v5605 = vld [vmem:[#allocation4 + $0xf8] sm:$0xf]
        %v5606 = vld [vmem:[#allocation4 + $0xfc] sm:$0xf]
        %v5607 = vld [vmem:[#allocation4 + $0x100] sm:$0xf]
        %v5608 = vld [vmem:[#allocation4 + $0x104] sm:$0xf]
        %v5609 = vld [vmem:[#allocation4 + $0x108] sm:$0xf]
        %v5610 = vld [vmem:[#allocation4 + $0x10c] sm:$0xf]
        %v5611 = vld [vmem:[#allocation4 + $0x110] sm:$0xf]
        %v5612 = vld [vmem:[#allocation4 + $0x114] sm:$0xf]
        %v5613 = vld [vmem:[#allocation4 + $0x118] sm:$0xf]
        %v5614 = vld [vmem:[#allocation4 + $0x11c] sm:$0xf]
        %v5615 = vld [vmem:[#allocation4 + $0x120] sm:$0xf]
        %v5616 = vld [vmem:[#allocation4 + $0x124] sm:$0xf]
        %v5617 = vld [vmem:[#allocation4 + $0x128] sm:$0xf]
        %v5618 = vld [vmem:[#allocation4 + $0x12c] sm:$0xf]
        %v5619 = vld [vmem:[#allocation4 + $0x130] sm:$0xf]
        %v5620 = vld [vmem:[#allocation4 + $0x134] sm:$0xf]
        %v5621 = vld [vmem:[#allocation4 + $0x138] sm:$0xf]
        %v5622 = vld [vmem:[#allocation4 + $0x13c] sm:$0xf]
        %v5703 = vunpack.c.l.b16 %v5543
        %v5704 = vunpack.c.l.b16 %v5544
        %v5705 = vunpack.c.l.b16 %v5545
        %v5706 = vunpack.c.l.b16 %v5546
        %v5707 = vunpack.c.l.b16 %v5547
        %v5708 = vunpack.c.l.b16 %v5548
        %v5709 = vunpack.c.l.b16 %v5549
        %v5710 = vunpack.c.l.b16 %v5550
        %v5711 = vunpack.c.l.b16 %v5551
        %v5712 = vunpack.c.l.b16 %v5552
        %v5713 = vunpack.c.l.b16 %v5553
        %v5714 = vunpack.c.l.b16 %v5554
        %v5715 = vunpack.c.l.b16 %v5555
        %v5716 = vunpack.c.l.b16 %v5556
        %v5717 = vunpack.c.l.b16 %v5557
        %v5718 = vunpack.c.l.b16 %v5558
        %v5719 = vunpack.c.l.b16 %v5559
        %v5720 = vunpack.c.l.b16 %v5560
        %v5721 = vunpack.c.l.b16 %v5561
        %v5722 = vunpack.c.l.b16 %v5562
        %v5723 = vunpack.c.l.b16 %v5563
        %v5724 = vunpack.c.l.b16 %v5564
        %v5725 = vunpack.c.l.b16 %v5565
        %v5726 = vunpack.c.l.b16 %v5566
        %v5727 = vunpack.c.l.b16 %v5567
        %v5728 = vunpack.c.l.b16 %v5568
        %v5729 = vunpack.c.l.b16 %v5569
        %v5730 = vunpack.c.l.b16 %v5570
        %v5731 = vunpack.c.l.b16 %v5571
        %v5732 = vunpack.c.l.b16 %v5572
        %v5733 = vunpack.c.l.b16 %v5573
        %v5734 = vunpack.c.l.b16 %v5574
        %v5735 = vunpack.c.l.b16 %v5575
        %v5736 = vunpack.c.l.b16 %v5576
        %v5737 = vunpack.c.l.b16 %v5577
        %v5738 = vunpack.c.l.b16 %v5578
        %v5739 = vunpack.c.l.b16 %v5579
        %v5740 = vunpack.c.l.b16 %v5580
        %v5741 = vunpack.c.l.b16 %v5581
        %v5742 = vunpack.c.l.b16 %v5582
        %v5743 = vunpack.c.l.b16 %v5583
        %v5744 = vunpack.c.l.b16 %v5584
        %v5745 = vunpack.c.l.b16 %v5585
        %v5746 = vunpack.c.l.b16 %v5586
        %v5747 = vunpack.c.l.b16 %v5587
        %v5748 = vunpack.c.l.b16 %v5588
        %v5749 = vunpack.c.l.b16 %v5589
        %v5750 = vunpack.c.l.b16 %v5590
        %v5751 = vunpack.c.l.b16 %v5591
        %v5752 = vunpack.c.l.b16 %v5592
        %v5753 = vunpack.c.l.b16 %v5593
        %v5754 = vunpack.c.l.b16 %v5594
        %v5755 = vunpack.c.l.b16 %v5595
        %v5756 = vunpack.c.l.b16 %v5596
        %v5757 = vunpack.c.l.b16 %v5597
        %v5758 = vunpack.c.l.b16 %v5598
        %v5759 = vunpack.c.l.b16 %v5599
        %v5760 = vunpack.c.l.b16 %v5600
        %v5761 = vunpack.c.l.b16 %v5601
        %v5762 = vunpack.c.l.b16 %v5602
        %v5763 = vunpack.c.l.b16 %v5603
        %v5764 = vunpack.c.l.b16 %v5604
        %v5765 = vunpack.c.l.b16 %v5605
        %v5766 = vunpack.c.l.b16 %v5606
        %v5767 = vunpack.c.l.b16 %v5607
        %v5768 = vunpack.c.l.b16 %v5608
        %v5769 = vunpack.c.l.b16 %v5609
        %v5770 = vunpack.c.l.b16 %v5610
        %v5771 = vunpack.c.l.b16 %v5611
        %v5772 = vunpack.c.l.b16 %v5612
        %v5773 = vunpack.c.l.b16 %v5613
        %v5774 = vunpack.c.l.b16 %v5614
        %v5775 = vunpack.c.l.b16 %v5615
        %v5776 = vunpack.c.l.b16 %v5616
        %v5777 = vunpack.c.l.b16 %v5617
        %v5778 = vunpack.c.l.b16 %v5618
        %v5779 = vunpack.c.l.b16 %v5619
        %v5780 = vunpack.c.l.b16 %v5620
        %v5781 = vunpack.c.l.b16 %v5621
        %v5782 = vunpack.c.l.b16 %v5622
        %v5783 = vpack.c.b16 %v5704, %v5703
        %v5784 = vpack.c.b16 %v5706, %v5705
        %v5785 = vpack.c.b16 %v5708, %v5707
        %v5786 = vpack.c.b16 %v5710, %v5709
        %v5787 = vpack.c.b16 %v5712, %v5711
        %v5788 = vpack.c.b16 %v5714, %v5713
        %v5789 = vpack.c.b16 %v5716, %v5715
        %v5790 = vpack.c.b16 %v5718, %v5717
        %v5791 = vpack.c.b16 %v5720, %v5719
        %v5792 = vpack.c.b16 %v5722, %v5721
        %v5793 = vpack.c.b16 %v5724, %v5723
        %v5794 = vpack.c.b16 %v5726, %v5725
        %v5795 = vpack.c.b16 %v5728, %v5727
        %v5796 = vpack.c.b16 %v5730, %v5729
        %v5797 = vpack.c.b16 %v5732, %v5731
        %v5798 = vpack.c.b16 %v5734, %v5733
        %v5799 = vpack.c.b16 %v5736, %v5735
        %v5800 = vpack.c.b16 %v5738, %v5737
        %v5801 = vpack.c.b16 %v5740, %v5739
        %v5802 = vpack.c.b16 %v5742, %v5741
        %v5803 = vpack.c.b16 %v5744, %v5743
        %v5804 = vpack.c.b16 %v5746, %v5745
        %v5805 = vpack.c.b16 %v5748, %v5747
        %v5806 = vpack.c.b16 %v5750, %v5749
        %v5807 = vpack.c.b16 %v5752, %v5751
        %v5808 = vpack.c.b16 %v5754, %v5753
        %v5809 = vpack.c.b16 %v5756, %v5755
        %v5810 = vpack.c.b16 %v5758, %v5757
        %v5811 = vpack.c.b16 %v5760, %v5759
        %v5812 = vpack.c.b16 %v5762, %v5761
        %v5813 = vpack.c.b16 %v5764, %v5763
        %v5814 = vpack.c.b16 %v5766, %v5765
        %v5815 = vpack.c.b16 %v5768, %v5767
        %v5816 = vpack.c.b16 %v5770, %v5769
        %v5817 = vpack.c.b16 %v5772, %v5771
        %v5818 = vpack.c.b16 %v5774, %v5773
        %v5819 = vpack.c.b16 %v5776, %v5775
        %v5820 = vpack.c.b16 %v5778, %v5777
        %v5821 = vpack.c.b16 %v5780, %v5779
        %v5822 = vpack.c.b16 %v5782, %v5781
        %5863 = vmatpush.bf16.msra.mxu0 %v5790
        %5864 = vmatpush.bf16.msra.mxu0 %v5789
        %5865 = vmatpush.bf16.msra.mxu0 %v5788
        %5866 = vmatpush.bf16.msra.mxu0 %v5787
        %5867 = vmatpush.bf16.msra.mxu0 %v5786
        %5868 = vmatpush.bf16.msra.mxu0 %v5785
        %5869 = vmatpush.bf16.msra.mxu0 %v5784
        %5870 = vmatpush.bf16.msra.mxu0 %v5783
        %5871 = vmatmul.bf16.gmra.mxu0 %v5538
        %v5872 = vpop.f32.mrf.mxu0
        %v5873 = vadd.f32 0.0, %v5872
        %v5874 = vpop.f32.mrf.mxu0
        %v5875 = vadd.f32 0.0, %v5874
        %5876 = vdwg.mxu0
        %5877 = vmatpush.bf16.msra.mxu0 %v5798
        %5878 = vmatpush.bf16.msra.mxu0 %v5797
        %5879 = vmatpush.bf16.msra.mxu0 %v5796
        %5880 = vmatpush.bf16.msra.mxu0 %v5795
        %5881 = vmatpush.bf16.msra.mxu0 %v5794
        %5882 = vmatpush.bf16.msra.mxu0 %v5793
        %5883 = vmatpush.bf16.msra.mxu0 %v5792
        %5884 = vmatpush.bf16.msra.mxu0 %v5791
        %5885 = vmatmul.bf16.gmra.mxu0 %v5539
        %v5886 = vpop.f32.mrf.mxu0
        %v5887 = vadd.f32 %v5873, %v5886
        %v5888 = vpop.f32.mrf.mxu0
        %v5889 = vadd.f32 %v5875, %v5888
        %5890 = vdwg.mxu0
        %5891 = vmatpush.bf16.msra.mxu0 %v5806
        %5892 = vmatpush.bf16.msra.mxu0 %v5805
        %5893 = vmatpush.bf16.msra.mxu0 %v5804
        %5894 = vmatpush.bf16.msra.mxu0 %v5803
        %5895 = vmatpush.bf16.msra.mxu0 %v5802
        %5896 = vmatpush.bf16.msra.mxu0 %v5801
        %5897 = vmatpush.bf16.msra.mxu0 %v5800
        %5898 = vmatpush.bf16.msra.mxu0 %v5799
        %5899 = vmatmul.bf16.gmra.mxu0 %v5540
        %v5900 = vpop.f32.mrf.mxu0
        %v5901 = vadd.f32 %v5887, %v5900
        %v5902 = vpop.f32.mrf.mxu0
        %v5903 = vadd.f32 %v5889, %v5902
        %5904 = vdwg.mxu0
        %5905 = vmatpush.bf16.msra.mxu0 %v5814
        %5906 = vmatpush.bf16.msra.mxu0 %v5813
        %5907 = vmatpush.bf16.msra.mxu0 %v5812
        %5908 = vmatpush.bf16.msra.mxu0 %v5811
        %5909 = vmatpush.bf16.msra.mxu0 %v5810
        %5910 = vmatpush.bf16.msra.mxu0 %v5809
        %5911 = vmatpush.bf16.msra.mxu0 %v5808
        %5912 = vmatpush.bf16.msra.mxu0 %v5807
        %5913 = vmatmul.bf16.gmra.mxu0 %v5541
        %v5914 = vpop.f32.mrf.mxu0
        %v5915 = vadd.f32 %v5901, %v5914
        %v5916 = vpop.f32.mrf.mxu0
        %v5917 = vadd.f32 %v5903, %v5916
        %5918 = vdwg.mxu0
        %5919 = vmatpush.bf16.msra.mxu0 %v5822
        %5920 = vmatpush.bf16.msra.mxu0 %v5821
        %5921 = vmatpush.bf16.msra.mxu0 %v5820
        %5922 = vmatpush.bf16.msra.mxu0 %v5819
        %5923 = vmatpush.bf16.msra.mxu0 %v5818
        %5924 = vmatpush.bf16.msra.mxu0 %v5817
        %5925 = vmatpush.bf16.msra.mxu0 %v5816
        %5926 = vmatpush.bf16.msra.mxu0 %v5815
        %5927 = vmatmul.bf16.gmra.mxu0 %v5542
        %v5928 = vpop.f32.mrf.mxu0
        %v5929 = vadd.f32 %v5915, %v5928
        %v5930 = vpop.f32.mrf.mxu0
        %v5931 = vadd.f32 %v5917, %v5930
        %5932 = vdwg.mxu0
        %v5933 = vmax.f32 %v5929, 1e-05
        %v5934 = vmax.f32 %v5931, 1e-05
        %v5935 = vlog2.pop %v5933
        %v5936 = vmul.f32 %v5935, 0.6931472
        %v5937 = vlog2.pop %v5934
        %v5938 = vmul.f32 %v5937, 0.6931472
        %5939 = vst [vmem:[%s314] sm:$0xff] %v5936
        %5940 = vst [vmem:[%s314 + $0x8] sm:$0xff] %v5938
        %s5941 = sadd.s32 %s21, %s22
        %s5942 = smul.u32 2, %s5941
        %p5943 = scmp.lt.s32.totalorder %s5942, 3
        %s5944 = scalar_select %p5943, %s5942, 3
        %s5945 = smul.addr %s5944, 8
        %s5946 = scalar_lea.vmem %s4, %s5945
        // Predicated region
        $region45: #{_lambda_.1} parent=35 // pred_check
          %p5947 = pneg %p155
        $region46: #{_lambda_.1} parent=35 // pred_check_branch
          %5949 = sbr.rel (%p5947) target = $region48
        $region47: #{_lambda_.1} parent=35 // pred_region
          %s5950 = sadd.s32 %s21, %s22
          %s5951 = smul.u32 2, %s5950
        $region48: #{_lambda_.1} parent=35 // pred_fallthru
          _
      $region36: #{_lambda_.1} parent=5 // pred_fallthru
        _
      %p5952 = scmp.le.s32.totalorder 2, %s12
      // Predicated region
      $region49: #{_lambda_.1} parent=5 // pred_check
        %p5953 = pneg %p5952
      $region50: #{_lambda_.1} parent=5 // pred_check_branch
        %5955 = sbr.rel (%p5953) target = $region52
      $region51: #{_lambda_.1} parent=5 // pred_region
        %s5956 = ssub.s32 %s12, 2
        // Predicated region
        $region53: #{_lambda_.1} parent=51 // pred_check
          %p5957 = pneg %p161
        $region54: #{_lambda_.1} parent=51 // pred_check_branch
          %5959 = sbr.rel (%p5957) target = $region56
        $region55: #{_lambda_.1} parent=51 // pred_region
          %s5960 = sadd.s32 %s23, %s24
          %s5961 = smul.u32 2, %s5960
          %p5962 = scmp.lt.s32.totalorder %s5961, 3
          %s5963 = scalar_select %p5962, %s5961, 3
          %s5964 = smul.addr %s5963, 8
          %s5965 = scalar_lea.vmem %s4, %s5964
        $region56: #{_lambda_.1} parent=51 // pred_fallthru
          _
      $region52: #{_lambda_.1} parent=5 // pred_fallthru
        _
    $region6: #{_lambda_.1} parent=1 // loop_footer
      %s16 = sadd.s32 1, %s12
    $region7: #{_lambda_.1} parent=1 // loop_footer_branch
      %11 = sbr.rel target = $region3
    $region8: #{_lambda_.1} parent=1 // loop_exit
      _
    %5966 = vsyncpa [#allocation3], 1
    %s5967 = scalar_lea.sflag [#allocation3], 1
    %5968 = vsyncpa %s5967, 1
    %5969 = vsyncpa [#allocation5], 1

</llo_original>
